<compile_context>
chip_gen: v7x
topology: tpu7x:2x2x1
jax: 0.10.0
libtpu: 0.0.40
codegen_flags: <defaults>
</compile_context>

<pallas_src>
import numpy as np
import jax
import jax.numpy as jnp
from jax import lax
from jax.experimental import pallas as pl
from jax.experimental.pallas import tpu as pltpu

# GeeseNet hyper-parameters / hungry-geese board size.
H, W = 7, 11
HW = H * W                       # 77 spatial positions per board
CIN = 30
FILTERS = 32
LAYERS = 12
P_OUT = 4
BN_EPS = 1e-5
OUT_COLS = 8                     # [policy(4), value(1), pad(3)] merged output


# --------------------------------------------------------------------------
# Pallas kernel: one grid step = TB boards, flattened to M = TB*77 rows.
# --------------------------------------------------------------------------
def _geese_kernel(x_ref, edge_ref, seg_ref, w0_ref, s0_ref, b0_ref,
                  wb_ref, sb_ref, bb_ref, wp_ref, wv_ref,
                  out_ref, h_scr):
    # Per-row board-edge masks (same pattern for every board), hoisted once.
    e = edge_ref[...]                                   # (M, 4) f32
    ex_lo = e[:, 0:1] > 0.5                             # x == 0
    ex_hi = e[:, 1:2] > 0.5                             # x == W-1
    ey_lo = e[:, 2:3] > 0.5                             # y == 0
    ey_hi = e[:, 3:4] > 0.5                             # y == H-1

    def build_stack(hb):
        """hb: (M, C) bf16.  Returns (M, 9*C) bf16: the 9 torus taps, tap-major."""
        cache = {}

        def sh(d):
            # out[r] = hb[r + d]; d is chosen per-row so r+d stays inside the board,
            # hence the roll's own wrap at M is never selected.
            if d not in cache:
                cache[d] = hb if d == 0 else jnp.roll(hb, -d, axis=0)
            return cache[d]

        taps = []
        for dy in (-1, 0, 1):
            for dx in (-1, 0, 1):
                base = dy * W + dx
                cc = -W if dx == 1 else (W if dx == -1 else 0)    # column-wrap fixup
                cr = -HW if dy == 1 else (HW if dy == -1 else 0)  # row-wrap fixup
                if dy == 0 and dx == 0:
                    tap = sh(0)
                elif dy == 0:
                    cm = ex_hi if dx == 1 else ex_lo
                    tap = jnp.where(cm, sh(base + cc), sh(base))
                elif dx == 0:
                    rm = ey_hi if dy == 1 else ey_lo
                    tap = jnp.where(rm, sh(base + cr), sh(base))
                else:
                    cm = ex_hi if dx == 1 else ex_lo
                    rm = ey_hi if dy == 1 else ey_lo
                    tap = jnp.where(rm,
                                    jnp.where(cm, sh(base + cc + cr), sh(base + cr)),
                                    jnp.where(cm, sh(base + cc), sh(base)))
                taps.append(tap)
        return jnp.concatenate(taps, axis=-1)

    # ---- conv0 + BN + ReLU -------------------------------------------------
    x = x_ref[...]                                      # (M, CIN) f32
    stack0 = build_stack(x.astype(jnp.bfloat16))        # (M, 9*CIN) bf16
    h0 = jnp.dot(stack0, w0_ref[...], preferred_element_type=jnp.float32)
    h_scr[...] = jnp.maximum(h0 * s0_ref[...] + b0_ref[...], 0.0)

    # ---- 12 residual torus-conv blocks: h = relu(h + BN(conv(h))) -----------
    def block(l, carry):
        h = h_scr[...]                                  # (M, F) f32
        stack = build_stack(h.astype(jnp.bfloat16))     # (M, 9*F) bf16
        hb = jnp.dot(stack, wb_ref[l], preferred_element_type=jnp.float32)
        hb = hb * sb_ref[l] + bb_ref[l]
        h_scr[...] = jnp.maximum(h + hb, 0.0)
        return carry

    lax.fori_loop(0, LAYERS, block, 0)

    # ---- heads (batched over the TB boards) ---------------------------------
    h = h_scr[...]                                      # (M, F) f32
    mask = x_ref[:, 0:1]                                # (M, 1) input channel 0
    hcat = jnp.concatenate([h * mask, h], axis=-1).astype(jnp.bfloat16)   # (M, 2F)
    sums = jnp.dot(seg_ref[...], hcat,
                   preferred_element_type=jnp.float32)  # (TB, 2F) per-board sums
    h_head = sums[:, :FILTERS]
    h_avg = sums[:, FILTERS:] * (1.0 / float(HW))
    p = jnp.dot(h_head.astype(jnp.bfloat16), wp_ref[...],
                preferred_element_type=jnp.float32)     # (TB, 4)
    v = jnp.tanh(jnp.dot(jnp.concatenate([h_head, h_avg], axis=-1).astype(jnp.bfloat16),
                         wv_ref[...], preferred_element_type=jnp.float32))  # (TB, 1)
    pad = jnp.zeros((p.shape[0], OUT_COLS - P_OUT - 1), jnp.float32)
    out_ref[...] = jnp.concatenate([p, v, pad], axis=-1)


# --------------------------------------------------------------------------
# Static, batch-tile-sized constants (edge masks + per-board sum selector)
# --------------------------------------------------------------------------
def _edge_masks(tb):
    n = np.arange(HW)
    xc = n % W
    yc = n // W
    e = np.stack([xc == 0, xc == W - 1, yc == 0, yc == H - 1], axis=1).astype(np.float32)
    return jnp.asarray(np.tile(e, (tb, 1)))             # (tb*77, 4) f32


def _segment_selector(tb):
    s = np.zeros((tb, tb * HW), np.float32)
    for b in range(tb):
        s[b, b * HW:(b + 1) * HW] = 1.0
    return jnp.asarray(s).astype(jnp.bfloat16)          # (tb, tb*77) 0/1 bf16


# --------------------------------------------------------------------------
# Parameters (deterministic synthetic; BatchNorm folded to scale/bias; conv and
# head weights stored in bf16 -- used on the MXU with f32 accumulation).
# --------------------------------------------------------------------------
def init_params(key):
    ks = jax.random.split(key, 14)
    f32 = jnp.float32

    w0 = jax.random.normal(ks[0], (9, CIN, FILTERS), f32) / np.sqrt(9 * CIN)
    cb0 = 0.01 * jax.random.normal(ks[1], (FILTERS,), f32)
    g0 = 1.0 + 0.1 * jax.random.normal(ks[2], (FILTERS,), f32)
    be0 = 0.05 * jax.random.normal(ks[3], (FILTERS,), f32)
    m0 = 0.05 * jax.random.normal(ks[4], (FILTERS,), f32)
    v0 = 1.0 + 0.1 * jnp.abs(jax.random.normal(ks[5], (FILTERS,), f32))
    sc0 = g0 / jnp.sqrt(v0 + BN_EPS)
    s0 = sc0
    b0 = be0 + (cb0 - m0) * sc0

    # 0.5x keeps the synthetic 12-block residual stack mildly contractive so tiny
    # accumulation-order differences do not get amplified through 13 layers.
    wb = 0.5 * jax.random.normal(ks[6], (LAYERS, 9, FILTERS, FILTERS), f32) / np.sqrt(9 * FILTERS)
    cbb = 0.01 * jax.random.normal(ks[7], (LAYERS, FILTERS), f32)
    gb = 1.0 + 0.1 * jax.random.normal(ks[8], (LAYERS, FILTERS), f32)
    beb = 0.05 * jax.random.normal(ks[9], (LAYERS, FILTERS), f32)
    mb = 0.05 * jax.random.normal(ks[10], (LAYERS, FILTERS), f32)
    vb = 1.0 + 0.1 * jnp.abs(jax.random.normal(ks[11], (LAYERS, FILTERS), f32))
    scb = gb / jnp.sqrt(vb + BN_EPS)
    sb = scb
    bb = beb + (cbb - mb) * scb

    wp = jax.random.normal(ks[12], (FILTERS, P_OUT), f32) / np.sqrt(FILTERS)
    wv = jax.random.normal(ks[13], (2 * FILTERS, 1), f32) / np.sqrt(2 * FILTERS)

    return (w0.astype(jnp.bfloat16), s0, b0,
            wb.astype(jnp.bfloat16), sb, bb,
            wp.astype(jnp.bfloat16), wv.astype(jnp.bfloat16))


# --------------------------------------------------------------------------
# Wrapper: layout conversion + pallas_call
# --------------------------------------------------------------------------
def geese_net_pallas(x, params, block_boards=32):
    """x: NCHW float32 (B, 30, 7, 11) -- same convention as the PyTorch module."""
    B = x.shape[0]
    assert x.shape == (B, CIN, H, W)
    (w0, s0, b0, wb, sb, bb, wp, wv) = params

    # Batch tile: block row counts must be 8-divisible unless the block covers the
    # whole array, so TB is either all of B (small B) or a multiple of 8.
    if B <= block_boards:
        tb = B
    else:
        tb = max(8, (block_boards // 8) * 8)
    bp = ((B + tb - 1) // tb) * tb
    grid = (bp // tb,)
    m = tb * HW

    # channels-last, boards stacked along rows: (Bp*77, CIN) f32
    xr = jnp.transpose(x, (0, 2, 3, 1)).reshape(B, HW, CIN).astype(jnp.float32)
    if bp != B:
        xr = jnp.concatenate([xr, jnp.zeros((bp - B, HW, CIN), jnp.float32)], axis=0)
    x2d = xr.reshape(bp * HW, CIN)

    edges = _edge_masks(tb)                              # (m, 4)  f32
    seg = _segment_selector(tb)                          # (tb, m) bf16

    # fused conv weights: (9, C, F) -> (9*C, F), row = tap*C + c
    w0f = w0.reshape(9 * CIN, FILTERS)
    wbf = wb.reshape(LAYERS, 9 * FILTERS, FILTERS)
    s0k = s0.reshape(1, FILTERS)
    b0k = b0.reshape(1, FILTERS)
    sbk = sb.reshape(LAYERS, 1, FILTERS)
    bbk = bb.reshape(LAYERS, 1, FILTERS)

    def const_spec(a):
        return pl.BlockSpec(a.shape, lambda i, _nd=a.ndim: (0,) * _nd)

    in_specs = [
        pl.BlockSpec((m, CIN), lambda i: (i, 0)),        # activations: TB boards/step
        const_spec(edges), const_spec(seg),
        const_spec(w0f), const_spec(s0k), const_spec(b0k),
        const_spec(wbf), const_spec(sbk), const_spec(bbk),
        const_spec(wp), const_spec(wv),
    ]
    out_specs = pl.BlockSpec((tb, OUT_COLS), lambda i: (i, 0))
    out_shape = jax.ShapeDtypeStruct((bp, OUT_COLS), jnp.float32)

    out = pl.pallas_call(
        _geese_kernel,
        grid=grid,
        in_specs=in_specs,
        out_specs=out_specs,
        out_shape=out_shape,
        scratch_shapes=[pltpu.VMEM((m, FILTERS), jnp.float32)],
        compiler_params=pltpu.CompilerParams(
            dimension_semantics=("parallel",),
            vmem_limit_bytes=32 * 1024 * 1024),
    )(x2d, edges, seg, w0f, s0k, b0k, wbf, sbk, bbk, wp, wv)

    return {'policy': out[:B, :P_OUT], 'value': out[:B, P_OUT:P_OUT + 1]}


# --------------------------------------------------------------------------
# Pure-JAX reference: same math, coded independently (jnp.roll torus shifts on
# the 2-D board), mirroring the kernel's bf16-operand / f32-accumulation
# precision and the fused 9-tap contraction ordering.
# --------------------------------------------------------------------------
def geese_net_reference(x, params):
    (w0, s0, b0, wb, sb, bb, wp, wv) = params
    xh = jnp.transpose(x, (0, 2, 3, 1)).astype(jnp.float32)       # (B, H, W, CIN)

    def torus_conv(h, w, s, t):
        hb = h.astype(jnp.bfloat16)
        taps = [jnp.roll(hb, shift=(-dy, -dx), axis=(1, 2))
                for dy in (-1, 0, 1) for dx in (-1, 0, 1)]
        stack = jnp.concatenate(taps, axis=-1)                    # (B, H, W, 9C)
        b = stack.shape[0]
        out = jnp.dot(stack.reshape(b * HW, stack.shape[-1]),
                      w.reshape(-1, w.shape[-1]),
                      preferred_element_type=jnp.float32)
        out = out.reshape(b, H, W, -1)
        return out * s.reshape(1, 1, 1, -1) + t.reshape(1, 1, 1, -1)

    h = jax.nn.relu(torus_conv(xh, w0, s0, b0))
    for l in range(LAYERS):
        h = jax.nn.relu(h + torus_conv(h, wb[l], sb[l], bb[l]))

    mask = xh[..., 0:1]
    h_head = jnp.sum((h * mask).astype(jnp.bfloat16).astype(jnp.float32), axis=(1, 2))
    h_avg = jnp.sum(h.astype(jnp.bfloat16).astype(jnp.float32), axis=(1, 2)) * (1.0 / HW)
    p = jnp.dot(h_head.astype(jnp.bfloat16), wp, preferred_element_type=jnp.float32)
    v = jnp.tanh(jnp.dot(jnp.concatenate([h_head, h_avg], axis=-1).astype(jnp.bfloat16),
                         wv, preferred_element_type=jnp.float32))
    return p, v


if __name__ == "__main__":
    key = jax.random.PRNGKey(0)
    kx_, kp_ = jax.random.split(key)
    B = 2
    x = jax.random.uniform(kx_, (B, CIN, H, W), jnp.float32)

    params = init_params(kp_)

    out = geese_net_pallas(x, params)
    out = jax.block_until_ready(out)

    p_ref, v_ref = geese_net_reference(x, params)
    assert out['policy'].shape == (B, P_OUT) and out['value'].shape == (B, 1)
    assert jnp.allclose(out['policy'], p_ref, atol=1e-2, rtol=1e-2), "policy mismatch"
    assert jnp.allclose(out['value'], v_ref, atol=1e-2, rtol=1e-2), "value mismatch"

    print("KERNEL_OK")
</pallas_src>

<mosaic_0001>
module attributes {stable_mosaic.version = 11 : i64} {
  func.func @_geese_kernel(%arg0: i32, %arg1: memref<154x30xf32, #tpu.memory_space<vmem>>, %arg2: memref<154x4xf32, #tpu.memory_space<vmem>>, %arg3: memref<2x154xbf16, #tpu.memory_space<vmem>>, %arg4: memref<270x32xbf16, #tpu.memory_space<vmem>>, %arg5: memref<1x32xf32, #tpu.memory_space<vmem>>, %arg6: memref<1x32xf32, #tpu.memory_space<vmem>>, %arg7: memref<12x288x32xbf16, #tpu.memory_space<vmem>>, %arg8: memref<12x1x32xf32, #tpu.memory_space<vmem>>, %arg9: memref<12x1x32xf32, #tpu.memory_space<vmem>>, %arg10: memref<32x4xbf16, #tpu.memory_space<vmem>>, %arg11: memref<64x1xbf16, #tpu.memory_space<vmem>>, %arg12: memref<2x8xf32, #tpu.memory_space<vmem>>, %arg13: memref<154x32xf32, #tpu.memory_space<vmem>>) attributes {dimension_semantics = [#tpu.dimension_semantics<parallel>], iteration_bounds = array<i64: 1>, scalar_prefetch = 0 : i64, scratch_operands = 1 : i64, tpu.core_type = #tpu.core_type<tc>, window_params = [{transform_indices = @transform_0, window_bounds = array<i64: 154, 30>}, {pipeline_mode = #tpu.pipeline_mode<synchronous>, transform_indices = @transform_1, window_bounds = array<i64: 154, 4>}, {pipeline_mode = #tpu.pipeline_mode<synchronous>, transform_indices = @transform_2, window_bounds = array<i64: 2, 154>}, {pipeline_mode = #tpu.pipeline_mode<synchronous>, transform_indices = @transform_3, window_bounds = array<i64: 270, 32>}, {pipeline_mode = #tpu.pipeline_mode<synchronous>, transform_indices = @transform_4, window_bounds = array<i64: 1, 32>}, {pipeline_mode = #tpu.pipeline_mode<synchronous>, transform_indices = @transform_5, window_bounds = array<i64: 1, 32>}, {pipeline_mode = #tpu.pipeline_mode<synchronous>, transform_indices = @transform_6, window_bounds = array<i64: 12, 288, 32>}, {pipeline_mode = #tpu.pipeline_mode<synchronous>, transform_indices = @transform_7, window_bounds = array<i64: 12, 1, 32>}, {pipeline_mode = #tpu.pipeline_mode<synchronous>, transform_indices = @transform_8, window_bounds = array<i64: 12, 1, 32>}, {pipeline_mode = #tpu.pipeline_mode<synchronous>, transform_indices = @transform_9, window_bounds = array<i64: 32, 4>}, {pipeline_mode = #tpu.pipeline_mode<synchronous>, transform_indices = @transform_10, window_bounds = array<i64: 64, 1>}, {transform_indices = @transform_11, window_bounds = array<i64: 2, 8>}]} {
    %c0 = arith.constant 0 : index
    %c0_0 = arith.constant 0 : index
    %0 = vector.load %arg2[%c0, %c0_0] : memref<154x4xf32, #tpu.memory_space<vmem>>, vector<154x4xf32>
    %1 = vector.extract_strided_slice %0 {offsets = [0, 0], sizes = [154, 1], strides = [1, 1]} : vector<154x4xf32> to vector<154x1xf32>
    %cst = arith.constant 5.000000e-01 : f32
    %2 = vector.broadcast %cst : f32 to vector<154x1xf32>
    %3 = arith.cmpf ogt, %1, %2 : vector<154x1xf32>
    %4 = vector.extract_strided_slice %0 {offsets = [0, 1], sizes = [154, 1], strides = [1, 1]} : vector<154x4xf32> to vector<154x1xf32>
    %cst_1 = arith.constant 5.000000e-01 : f32
    %5 = vector.broadcast %cst_1 : f32 to vector<154x1xf32>
    %6 = arith.cmpf ogt, %4, %5 : vector<154x1xf32>
    %7 = vector.extract_strided_slice %0 {offsets = [0, 2], sizes = [154, 1], strides = [1, 1]} : vector<154x4xf32> to vector<154x1xf32>
    %cst_2 = arith.constant 5.000000e-01 : f32
    %8 = vector.broadcast %cst_2 : f32 to vector<154x1xf32>
    %9 = arith.cmpf ogt, %7, %8 : vector<154x1xf32>
    %10 = vector.extract_strided_slice %0 {offsets = [0, 3], sizes = [154, 1], strides = [1, 1]} : vector<154x4xf32> to vector<154x1xf32>
    %cst_3 = arith.constant 5.000000e-01 : f32
    %11 = vector.broadcast %cst_3 : f32 to vector<154x1xf32>
    %12 = arith.cmpf ogt, %10, %11 : vector<154x1xf32>
    %c0_4 = arith.constant 0 : index
    %c0_5 = arith.constant 0 : index
    %13 = vector.load %arg1[%c0_4, %c0_5] : memref<154x30xf32, #tpu.memory_space<vmem>>, vector<154x30xf32>
    %14 = arith.truncf %13 : vector<154x30xf32> to vector<154x30xbf16>
    %15 = vector.extract_strided_slice %14 {offsets = [76, 0], sizes = [78, 30], strides = [1, 1]} : vector<154x30xbf16> to vector<78x30xbf16>
    %16 = vector.extract_strided_slice %14 {offsets = [0, 0], sizes = [76, 30], strides = [1, 1]} : vector<154x30xbf16> to vector<76x30xbf16>
    %17 = tpu.concatenate %15, %16 in 0 : vector<78x30xbf16>, vector<76x30xbf16> -> vector<154x30xbf16>
    %18 = vector.extract_strided_slice %14 {offsets = [65, 0], sizes = [89, 30], strides = [1, 1]} : vector<154x30xbf16> to vector<89x30xbf16>
    %19 = vector.extract_strided_slice %14 {offsets = [0, 0], sizes = [65, 30], strides = [1, 1]} : vector<154x30xbf16> to vector<65x30xbf16>
    %20 = tpu.concatenate %18, %19 in 0 : vector<89x30xbf16>, vector<65x30xbf16> -> vector<154x30xbf16>
    %21 = vector.shape_cast %3 : vector<154x1xi1> to vector<154x1xi1>
    %22 = vector.broadcast %21 : vector<154x1xi1> to vector<154x30xi1>
    %23 = arith.select %22, %17, %20 : vector<154x30xi1>, vector<154x30xbf16>
    %24 = vector.extract_strided_slice %14 {offsets = [153, 0], sizes = [1, 30], strides = [1, 1]} : vector<154x30xbf16> to vector<1x30xbf16>
    %25 = vector.extract_strided_slice %14 {offsets = [0, 0], sizes = [153, 30], strides = [1, 1]} : vector<154x30xbf16> to vector<153x30xbf16>
    %26 = tpu.concatenate %24, %25 in 0 : vector<1x30xbf16>, vector<153x30xbf16> -> vector<154x30xbf16>
    %27 = vector.extract_strided_slice %14 {offsets = [142, 0], sizes = [12, 30], strides = [1, 1]} : vector<154x30xbf16> to vector<12x30xbf16>
    %28 = vector.extract_strided_slice %14 {offsets = [0, 0], sizes = [142, 30], strides = [1, 1]} : vector<154x30xbf16> to vector<142x30xbf16>
    %29 = tpu.concatenate %27, %28 in 0 : vector<12x30xbf16>, vector<142x30xbf16> -> vector<154x30xbf16>
    %30 = vector.shape_cast %3 : vector<154x1xi1> to vector<154x1xi1>
    %31 = vector.broadcast %30 : vector<154x1xi1> to vector<154x30xi1>
    %32 = arith.select %31, %26, %29 : vector<154x30xi1>, vector<154x30xbf16>
    %33 = vector.shape_cast %9 : vector<154x1xi1> to vector<154x1xi1>
    %34 = vector.broadcast %33 : vector<154x1xi1> to vector<154x30xi1>
    %35 = arith.select %34, %23, %32 : vector<154x30xi1>, vector<154x30xbf16>
    %36 = vector.extract_strided_slice %14 {offsets = [66, 0], sizes = [88, 30], strides = [1, 1]} : vector<154x30xbf16> to vector<88x30xbf16>
    %37 = vector.extract_strided_slice %14 {offsets = [0, 0], sizes = [66, 30], strides = [1, 1]} : vector<154x30xbf16> to vector<66x30xbf16>
    %38 = tpu.concatenate %36, %37 in 0 : vector<88x30xbf16>, vector<66x30xbf16> -> vector<154x30xbf16>
    %39 = vector.extract_strided_slice %14 {offsets = [143, 0], sizes = [11, 30], strides = [1, 1]} : vector<154x30xbf16> to vector<11x30xbf16>
    %40 = vector.extract_strided_slice %14 {offsets = [0, 0], sizes = [143, 30], strides = [1, 1]} : vector<154x30xbf16> to vector<143x30xbf16>
    %41 = tpu.concatenate %39, %40 in 0 : vector<11x30xbf16>, vector<143x30xbf16> -> vector<154x30xbf16>
    %42 = vector.shape_cast %9 : vector<154x1xi1> to vector<154x1xi1>
    %43 = vector.broadcast %42 : vector<154x1xi1> to vector<154x30xi1>
    %44 = arith.select %43, %38, %41 : vector<154x30xi1>, vector<154x30xbf16>
    %45 = vector.extract_strided_slice %14 {offsets = [56, 0], sizes = [98, 30], strides = [1, 1]} : vector<154x30xbf16> to vector<98x30xbf16>
    %46 = vector.extract_strided_slice %14 {offsets = [0, 0], sizes = [56, 30], strides = [1, 1]} : vector<154x30xbf16> to vector<56x30xbf16>
    %47 = tpu.concatenate %45, %46 in 0 : vector<98x30xbf16>, vector<56x30xbf16> -> vector<154x30xbf16>
    %48 = vector.extract_strided_slice %14 {offsets = [67, 0], sizes = [87, 30], strides = [1, 1]} : vector<154x30xbf16> to vector<87x30xbf16>
    %49 = vector.extract_strided_slice %14 {offsets = [0, 0], sizes = [67, 30], strides = [1, 1]} : vector<154x30xbf16> to vector<67x30xbf16>
    %50 = tpu.concatenate %48, %49 in 0 : vector<87x30xbf16>, vector<67x30xbf16> -> vector<154x30xbf16>
    %51 = vector.shape_cast %6 : vector<154x1xi1> to vector<154x1xi1>
    %52 = vector.broadcast %51 : vector<154x1xi1> to vector<154x30xi1>
    %53 = arith.select %52, %47, %50 : vector<154x30xi1>, vector<154x30xbf16>
    %54 = vector.extract_strided_slice %14 {offsets = [133, 0], sizes = [21, 30], strides = [1, 1]} : vector<154x30xbf16> to vector<21x30xbf16>
    %55 = vector.extract_strided_slice %14 {offsets = [0, 0], sizes = [133, 30], strides = [1, 1]} : vector<154x30xbf16> to vector<133x30xbf16>
    %56 = tpu.concatenate %54, %55 in 0 : vector<21x30xbf16>, vector<133x30xbf16> -> vector<154x30xbf16>
    %57 = vector.extract_strided_slice %14 {offsets = [144, 0], sizes = [10, 30], strides = [1, 1]} : vector<154x30xbf16> to vector<10x30xbf16>
    %58 = vector.extract_strided_slice %14 {offsets = [0, 0], sizes = [144, 30], strides = [1, 1]} : vector<154x30xbf16> to vector<144x30xbf16>
    %59 = tpu.concatenate %57, %58 in 0 : vector<10x30xbf16>, vector<144x30xbf16> -> vector<154x30xbf16>
    %60 = vector.shape_cast %6 : vector<154x1xi1> to vector<154x1xi1>
    %61 = vector.broadcast %60 : vector<154x1xi1> to vector<154x30xi1>
    %62 = arith.select %61, %56, %59 : vector<154x30xi1>, vector<154x30xbf16>
    %63 = vector.shape_cast %9 : vector<154x1xi1> to vector<154x1xi1>
    %64 = vector.broadcast %63 : vector<154x1xi1> to vector<154x30xi1>
    %65 = arith.select %64, %53, %62 : vector<154x30xi1>, vector<154x30xbf16>
    %66 = vector.extract_strided_slice %14 {offsets = [10, 0], sizes = [144, 30], strides = [1, 1]} : vector<154x30xbf16> to vector<144x30xbf16>
    %67 = vector.extract_strided_slice %14 {offsets = [0, 0], sizes = [10, 30], strides = [1, 1]} : vector<154x30xbf16> to vector<10x30xbf16>
    %68 = tpu.concatenate %66, %67 in 0 : vector<144x30xbf16>, vector<10x30xbf16> -> vector<154x30xbf16>
    %69 = vector.shape_cast %3 : vector<154x1xi1> to vector<154x1xi1>
    %70 = vector.broadcast %69 : vector<154x1xi1> to vector<154x30xi1>
    %71 = arith.select %70, %68, %26 : vector<154x30xi1>, vector<154x30xbf16>
    %72 = vector.extract_strided_slice %14 {offsets = [1, 0], sizes = [153, 30], strides = [1, 1]} : vector<154x30xbf16> to vector<153x30xbf16>
    %73 = vector.extract_strided_slice %14 {offsets = [0, 0], sizes = [1, 30], strides = [1, 1]} : vector<154x30xbf16> to vector<1x30xbf16>
    %74 = tpu.concatenate %72, %73 in 0 : vector<153x30xbf16>, vector<1x30xbf16> -> vector<154x30xbf16>
    %75 = vector.shape_cast %6 : vector<154x1xi1> to vector<154x1xi1>
    %76 = vector.broadcast %75 : vector<154x1xi1> to vector<154x30xi1>
    %77 = arith.select %76, %59, %74 : vector<154x30xi1>, vector<154x30xbf16>
    %78 = vector.extract_strided_slice %14 {offsets = [98, 0], sizes = [56, 30], strides = [1, 1]} : vector<154x30xbf16> to vector<56x30xbf16>
    %79 = vector.extract_strided_slice %14 {offsets = [0, 0], sizes = [98, 30], strides = [1, 1]} : vector<154x30xbf16> to vector<98x30xbf16>
    %80 = tpu.concatenate %78, %79 in 0 : vector<56x30xbf16>, vector<98x30xbf16> -> vector<154x30xbf16>
    %81 = vector.extract_strided_slice %14 {offsets = [87, 0], sizes = [67, 30], strides = [1, 1]} : vector<154x30xbf16> to vector<67x30xbf16>
    %82 = vector.extract_strided_slice %14 {offsets = [0, 0], sizes = [87, 30], strides = [1, 1]} : vector<154x30xbf16> to vector<87x30xbf16>
    %83 = tpu.concatenate %81, %82 in 0 : vector<67x30xbf16>, vector<87x30xbf16> -> vector<154x30xbf16>
    %84 = vector.shape_cast %3 : vector<154x1xi1> to vector<154x1xi1>
    %85 = vector.broadcast %84 : vector<154x1xi1> to vector<154x30xi1>
    %86 = arith.select %85, %80, %83 : vector<154x30xi1>, vector<154x30xbf16>
    %87 = vector.extract_strided_slice %14 {offsets = [21, 0], sizes = [133, 30], strides = [1, 1]} : vector<154x30xbf16> to vector<133x30xbf16>
    %88 = vector.extract_strided_slice %14 {offsets = [0, 0], sizes = [21, 30], strides = [1, 1]} : vector<154x30xbf16> to vector<21x30xbf16>
    %89 = tpu.concatenate %87, %88 in 0 : vector<133x30xbf16>, vector<21x30xbf16> -> vector<154x30xbf16>
    %90 = vector.shape_cast %3 : vector<154x1xi1> to vector<154x1xi1>
    %91 = vector.broadcast %90 : vector<154x1xi1> to vector<154x30xi1>
    %92 = arith.select %91, %89, %68 : vector<154x30xi1>, vector<154x30xbf16>
    %93 = vector.shape_cast %12 : vector<154x1xi1> to vector<154x1xi1>
    %94 = vector.broadcast %93 : vector<154x1xi1> to vector<154x30xi1>
    %95 = arith.select %94, %86, %92 : vector<154x30xi1>, vector<154x30xbf16>
    %96 = vector.extract_strided_slice %14 {offsets = [88, 0], sizes = [66, 30], strides = [1, 1]} : vector<154x30xbf16> to vector<66x30xbf16>
    %97 = vector.extract_strided_slice %14 {offsets = [0, 0], sizes = [88, 30], strides = [1, 1]} : vector<154x30xbf16> to vector<88x30xbf16>
    %98 = tpu.concatenate %96, %97 in 0 : vector<66x30xbf16>, vector<88x30xbf16> -> vector<154x30xbf16>
    %99 = vector.extract_strided_slice %14 {offsets = [11, 0], sizes = [143, 30], strides = [1, 1]} : vector<154x30xbf16> to vector<143x30xbf16>
    %100 = vector.extract_strided_slice %14 {offsets = [0, 0], sizes = [11, 30], strides = [1, 1]} : vector<154x30xbf16> to vector<11x30xbf16>
    %101 = tpu.concatenate %99, %100 in 0 : vector<143x30xbf16>, vector<11x30xbf16> -> vector<154x30xbf16>
    %102 = vector.shape_cast %12 : vector<154x1xi1> to vector<154x1xi1>
    %103 = vector.broadcast %102 : vector<154x1xi1> to vector<154x30xi1>
    %104 = arith.select %103, %98, %101 : vector<154x30xi1>, vector<154x30xbf16>
    %105 = vector.extract_strided_slice %14 {offsets = [78, 0], sizes = [76, 30], strides = [1, 1]} : vector<154x30xbf16> to vector<76x30xbf16>
    %106 = vector.extract_strided_slice %14 {offsets = [0, 0], sizes = [78, 30], strides = [1, 1]} : vector<154x30xbf16> to vector<78x30xbf16>
    %107 = tpu.concatenate %105, %106 in 0 : vector<76x30xbf16>, vector<78x30xbf16> -> vector<154x30xbf16>
    %108 = vector.extract_strided_slice %14 {offsets = [89, 0], sizes = [65, 30], strides = [1, 1]} : vector<154x30xbf16> to vector<65x30xbf16>
    %109 = vector.extract_strided_slice %14 {offsets = [0, 0], sizes = [89, 30], strides = [1, 1]} : vector<154x30xbf16> to vector<89x30xbf16>
    %110 = tpu.concatenate %108, %109 in 0 : vector<65x30xbf16>, vector<89x30xbf16> -> vector<154x30xbf16>
    %111 = vector.shape_cast %6 : vector<154x1xi1> to vector<154x1xi1>
    %112 = vector.broadcast %111 : vector<154x1xi1> to vector<154x30xi1>
    %113 = arith.select %112, %107, %110 : vector<154x30xi1>, vector<154x30xbf16>
    %114 = vector.extract_strided_slice %14 {offsets = [12, 0], sizes = [142, 30], strides = [1, 1]} : vector<154x30xbf16> to vector<142x30xbf16>
    %115 = vector.extract_strided_slice %14 {offsets = [0, 0], sizes = [12, 30], strides = [1, 1]} : vector<154x30xbf16> to vector<12x30xbf16>
    %116 = tpu.concatenate %114, %115 in 0 : vector<142x30xbf16>, vector<12x30xbf16> -> vector<154x30xbf16>
    %117 = vector.shape_cast %6 : vector<154x1xi1> to vector<154x1xi1>
    %118 = vector.broadcast %117 : vector<154x1xi1> to vector<154x30xi1>
    %119 = arith.select %118, %74, %116 : vector<154x30xi1>, vector<154x30xbf16>
    %120 = vector.shape_cast %12 : vector<154x1xi1> to vector<154x1xi1>
    %121 = vector.broadcast %120 : vector<154x1xi1> to vector<154x30xi1>
    %122 = arith.select %121, %113, %119 : vector<154x30xi1>, vector<154x30xbf16>
    %123 = tpu.concatenate %35, %44, %65, %71, %14, %77, %95, %104, %122 in 1 : vector<154x30xbf16>, vector<154x30xbf16>, vector<154x30xbf16>, vector<154x30xbf16>, vector<154x30xbf16>, vector<154x30xbf16>, vector<154x30xbf16>, vector<154x30xbf16>, vector<154x30xbf16> -> vector<154x270xbf16>
    %c0_6 = arith.constant 0 : index
    %c0_7 = arith.constant 0 : index
    %124 = vector.load %arg4[%c0_6, %c0_7] : memref<270x32xbf16, #tpu.memory_space<vmem>>, vector<270x32xbf16>
    %cst_8 = arith.constant dense<0.000000e+00> : vector<154x32xf32>
    %125 = tpu.matmul %123, %124, %cst_8 {dimension_numbers = #tpu.dot_dimension_numbers<[1], [0], [0], [1], [0, 0, 1, 1], [], []>} : vector<154x270xbf16>, vector<270x32xbf16>, vector<154x32xf32> -> vector<154x32xf32>
    %c0_9 = arith.constant 0 : index
    %c0_10 = arith.constant 0 : index
    %126 = vector.load %arg5[%c0_9, %c0_10] : memref<1x32xf32, #tpu.memory_space<vmem>>, vector<1x32xf32>
    %127 = vector.broadcast %126 : vector<1x32xf32> to vector<154x32xf32>
    %128 = arith.mulf %125, %127 : vector<154x32xf32>
    %c0_11 = arith.constant 0 : index
    %c0_12 = arith.constant 0 : index
    %129 = vector.load %arg6[%c0_11, %c0_12] : memref<1x32xf32, #tpu.memory_space<vmem>>, vector<1x32xf32>
    %130 = vector.broadcast %129 : vector<1x32xf32> to vector<154x32xf32>
    %131 = arith.addf %128, %130 : vector<154x32xf32>
    %cst_13 = arith.constant 0.000000e+00 : f32
    %132 = vector.broadcast %cst_13 : f32 to vector<154x32xf32>
    %133 = arith.maximumf %131, %132 : vector<154x32xf32>
    %c0_14 = arith.constant 0 : index
    %c0_15 = arith.constant 0 : index
    %134 = vector.load %arg13[%c0_14, %c0_15] : memref<154x32xf32, #tpu.memory_space<vmem>>, vector<154x32xf32>
    tpu.vector_store %arg13[%c0_14, %c0_15], %133 {strides = array<i32>} : memref<154x32xf32, #tpu.memory_space<vmem>>, vector<154x32xf32>,
    %c0_i32 = arith.constant 0 : i32
    %c12_i32 = arith.constant 12 : i32
    %135 = arith.addi %c0_i32, %c12_i32 : i32
    %c1_i32 = arith.constant 1 : i32
    scf.for %arg14 = %c0_i32 to %135 step %c1_i32  : i32 {
      %c0_34 = arith.constant 0 : index
      %c0_35 = arith.constant 0 : index
      %159 = vector.load %arg13[%c0_34, %c0_35] : memref<154x32xf32, #tpu.memory_space<vmem>>, vector<154x32xf32>
      %160 = arith.truncf %159 : vector<154x32xf32> to vector<154x32xbf16>
      %161 = vector.extract_strided_slice %160 {offsets = [76, 0], sizes = [78, 32], strides = [1, 1]} : vector<154x32xbf16> to vector<78x32xbf16>
      %162 = vector.extract_strided_slice %160 {offsets = [0, 0], sizes = [76, 32], strides = [1, 1]} : vector<154x32xbf16> to vector<76x32xbf16>
      %163 = tpu.concatenate %161, %162 in 0 : vector<78x32xbf16>, vector<76x32xbf16> -> vector<154x32xbf16>
      %164 = vector.extract_strided_slice %160 {offsets = [65, 0], sizes = [89, 32], strides = [1, 1]} : vector<154x32xbf16> to vector<89x32xbf16>
      %165 = vector.extract_strided_slice %160 {offsets = [0, 0], sizes = [65, 32], strides = [1, 1]} : vector<154x32xbf16> to vector<65x32xbf16>
      %166 = tpu.concatenate %164, %165 in 0 : vector<89x32xbf16>, vector<65x32xbf16> -> vector<154x32xbf16>
      %167 = vector.shape_cast %3 : vector<154x1xi1> to vector<154x1xi1>
      %168 = vector.broadcast %167 : vector<154x1xi1> to vector<154x32xi1>
      %169 = arith.select %168, %163, %166 : vector<154x32xi1>, vector<154x32xbf16>
      %170 = vector.extract_strided_slice %160 {offsets = [153, 0], sizes = [1, 32], strides = [1, 1]} : vector<154x32xbf16> to vector<1x32xbf16>
      %171 = vector.extract_strided_slice %160 {offsets = [0, 0], sizes = [153, 32], strides = [1, 1]} : vector<154x32xbf16> to vector<153x32xbf16>
      %172 = tpu.concatenate %170, %171 in 0 : vector<1x32xbf16>, vector<153x32xbf16> -> vector<154x32xbf16>
      %173 = vector.extract_strided_slice %160 {offsets = [142, 0], sizes = [12, 32], strides = [1, 1]} : vector<154x32xbf16> to vector<12x32xbf16>
      %174 = vector.extract_strided_slice %160 {offsets = [0, 0], sizes = [142, 32], strides = [1, 1]} : vector<154x32xbf16> to vector<142x32xbf16>
      %175 = tpu.concatenate %173, %174 in 0 : vector<12x32xbf16>, vector<142x32xbf16> -> vector<154x32xbf16>
      %176 = vector.shape_cast %3 : vector<154x1xi1> to vector<154x1xi1>
      %177 = vector.broadcast %176 : vector<154x1xi1> to vector<154x32xi1>
      %178 = arith.select %177, %172, %175 : vector<154x32xi1>, vector<154x32xbf16>
      %179 = vector.shape_cast %9 : vector<154x1xi1> to vector<154x1xi1>
      %180 = vector.broadcast %179 : vector<154x1xi1> to vector<154x32xi1>
      %181 = arith.select %180, %169, %178 : vector<154x32xi1>, vector<154x32xbf16>
      %182 = vector.extract_strided_slice %160 {offsets = [66, 0], sizes = [88, 32], strides = [1, 1]} : vector<154x32xbf16> to vector<88x32xbf16>
      %183 = vector.extract_strided_slice %160 {offsets = [0, 0], sizes = [66, 32], strides = [1, 1]} : vector<154x32xbf16> to vector<66x32xbf16>
      %184 = tpu.concatenate %182, %183 in 0 : vector<88x32xbf16>, vector<66x32xbf16> -> vector<154x32xbf16>
      %185 = vector.extract_strided_slice %160 {offsets = [143, 0], sizes = [11, 32], strides = [1, 1]} : vector<154x32xbf16> to vector<11x32xbf16>
      %186 = vector.extract_strided_slice %160 {offsets = [0, 0], sizes = [143, 32], strides = [1, 1]} : vector<154x32xbf16> to vector<143x32xbf16>
      %187 = tpu.concatenate %185, %186 in 0 : vector<11x32xbf16>, vector<143x32xbf16> -> vector<154x32xbf16>
      %188 = vector.shape_cast %9 : vector<154x1xi1> to vector<154x1xi1>
      %189 = vector.broadcast %188 : vector<154x1xi1> to vector<154x32xi1>
      %190 = arith.select %189, %184, %187 : vector<154x32xi1>, vector<154x32xbf16>
      %191 = vector.extract_strided_slice %160 {offsets = [56, 0], sizes = [98, 32], strides = [1, 1]} : vector<154x32xbf16> to vector<98x32xbf16>
      %192 = vector.extract_strided_slice %160 {offsets = [0, 0], sizes = [56, 32], strides = [1, 1]} : vector<154x32xbf16> to vector<56x32xbf16>
      %193 = tpu.concatenate %191, %192 in 0 : vector<98x32xbf16>, vector<56x32xbf16> -> vector<154x32xbf16>
      %194 = vector.extract_strided_slice %160 {offsets = [67, 0], sizes = [87, 32], strides = [1, 1]} : vector<154x32xbf16> to vector<87x32xbf16>
      %195 = vector.extract_strided_slice %160 {offsets = [0, 0], sizes = [67, 32], strides = [1, 1]} : vector<154x32xbf16> to vector<67x32xbf16>
      %196 = tpu.concatenate %194, %195 in 0 : vector<87x32xbf16>, vector<67x32xbf16> -> vector<154x32xbf16>
      %197 = vector.shape_cast %6 : vector<154x1xi1> to vector<154x1xi1>
      %198 = vector.broadcast %197 : vector<154x1xi1> to vector<154x32xi1>
      %199 = arith.select %198, %193, %196 : vector<154x32xi1>, vector<154x32xbf16>
      %200 = vector.extract_strided_slice %160 {offsets = [133, 0], sizes = [21, 32], strides = [1, 1]} : vector<154x32xbf16> to vector<21x32xbf16>
      %201 = vector.extract_strided_slice %160 {offsets = [0, 0], sizes = [133, 32], strides = [1, 1]} : vector<154x32xbf16> to vector<133x32xbf16>
      %202 = tpu.concatenate %200, %201 in 0 : vector<21x32xbf16>, vector<133x32xbf16> -> vector<154x32xbf16>
      %203 = vector.extract_strided_slice %160 {offsets = [144, 0], sizes = [10, 32], strides = [1, 1]} : vector<154x32xbf16> to vector<10x32xbf16>
      %204 = vector.extract_strided_slice %160 {offsets = [0, 0], sizes = [144, 32], strides = [1, 1]} : vector<154x32xbf16> to vector<144x32xbf16>
      %205 = tpu.concatenate %203, %204 in 0 : vector<10x32xbf16>, vector<144x32xbf16> -> vector<154x32xbf16>
      %206 = vector.shape_cast %6 : vector<154x1xi1> to vector<154x1xi1>
      %207 = vector.broadcast %206 : vector<154x1xi1> to vector<154x32xi1>
      %208 = arith.select %207, %202, %205 : vector<154x32xi1>, vector<154x32xbf16>
      %209 = vector.shape_cast %9 : vector<154x1xi1> to vector<154x1xi1>
      %210 = vector.broadcast %209 : vector<154x1xi1> to vector<154x32xi1>
      %211 = arith.select %210, %199, %208 : vector<154x32xi1>, vector<154x32xbf16>
      %212 = vector.extract_strided_slice %160 {offsets = [10, 0], sizes = [144, 32], strides = [1, 1]} : vector<154x32xbf16> to vector<144x32xbf16>
      %213 = vector.extract_strided_slice %160 {offsets = [0, 0], sizes = [10, 32], strides = [1, 1]} : vector<154x32xbf16> to vector<10x32xbf16>
      %214 = tpu.concatenate %212, %213 in 0 : vector<144x32xbf16>, vector<10x32xbf16> -> vector<154x32xbf16>
      %215 = vector.shape_cast %3 : vector<154x1xi1> to vector<154x1xi1>
      %216 = vector.broadcast %215 : vector<154x1xi1> to vector<154x32xi1>
      %217 = arith.select %216, %214, %172 : vector<154x32xi1>, vector<154x32xbf16>
      %218 = vector.extract_strided_slice %160 {offsets = [1, 0], sizes = [153, 32], strides = [1, 1]} : vector<154x32xbf16> to vector<153x32xbf16>
      %219 = vector.extract_strided_slice %160 {offsets = [0, 0], sizes = [1, 32], strides = [1, 1]} : vector<154x32xbf16> to vector<1x32xbf16>
      %220 = tpu.concatenate %218, %219 in 0 : vector<153x32xbf16>, vector<1x32xbf16> -> vector<154x32xbf16>
      %221 = vector.shape_cast %6 : vector<154x1xi1> to vector<154x1xi1>
      %222 = vector.broadcast %221 : vector<154x1xi1> to vector<154x32xi1>
      %223 = arith.select %222, %205, %220 : vector<154x32xi1>, vector<154x32xbf16>
      %224 = vector.extract_strided_slice %160 {offsets = [98, 0], sizes = [56, 32], strides = [1, 1]} : vector<154x32xbf16> to vector<56x32xbf16>
      %225 = vector.extract_strided_slice %160 {offsets = [0, 0], sizes = [98, 32], strides = [1, 1]} : vector<154x32xbf16> to vector<98x32xbf16>
      %226 = tpu.concatenate %224, %225 in 0 : vector<56x32xbf16>, vector<98x32xbf16> -> vector<154x32xbf16>
      %227 = vector.extract_strided_slice %160 {offsets = [87, 0], sizes = [67, 32], strides = [1, 1]} : vector<154x32xbf16> to vector<67x32xbf16>
      %228 = vector.extract_strided_slice %160 {offsets = [0, 0], sizes = [87, 32], strides = [1, 1]} : vector<154x32xbf16> to vector<87x32xbf16>
      %229 = tpu.concatenate %227, %228 in 0 : vector<67x32xbf16>, vector<87x32xbf16> -> vector<154x32xbf16>
      %230 = vector.shape_cast %3 : vector<154x1xi1> to vector<154x1xi1>
      %231 = vector.broadcast %230 : vector<154x1xi1> to vector<154x32xi1>
      %232 = arith.select %231, %226, %229 : vector<154x32xi1>, vector<154x32xbf16>
      %233 = vector.extract_strided_slice %160 {offsets = [21, 0], sizes = [133, 32], strides = [1, 1]} : vector<154x32xbf16> to vector<133x32xbf16>
      %234 = vector.extract_strided_slice %160 {offsets = [0, 0], sizes = [21, 32], strides = [1, 1]} : vector<154x32xbf16> to vector<21x32xbf16>
      %235 = tpu.concatenate %233, %234 in 0 : vector<133x32xbf16>, vector<21x32xbf16> -> vector<154x32xbf16>
      %236 = vector.shape_cast %3 : vector<154x1xi1> to vector<154x1xi1>
      %237 = vector.broadcast %236 : vector<154x1xi1> to vector<154x32xi1>
      %238 = arith.select %237, %235, %214 : vector<154x32xi1>, vector<154x32xbf16>
      %239 = vector.shape_cast %12 : vector<154x1xi1> to vector<154x1xi1>
      %240 = vector.broadcast %239 : vector<154x1xi1> to vector<154x32xi1>
      %241 = arith.select %240, %232, %238 : vector<154x32xi1>, vector<154x32xbf16>
      %242 = vector.extract_strided_slice %160 {offsets = [88, 0], sizes = [66, 32], strides = [1, 1]} : vector<154x32xbf16> to vector<66x32xbf16>
      %243 = vector.extract_strided_slice %160 {offsets = [0, 0], sizes = [88, 32], strides = [1, 1]} : vector<154x32xbf16> to vector<88x32xbf16>
      %244 = tpu.concatenate %242, %243 in 0 : vector<66x32xbf16>, vector<88x32xbf16> -> vector<154x32xbf16>
      %245 = vector.extract_strided_slice %160 {offsets = [11, 0], sizes = [143, 32], strides = [1, 1]} : vector<154x32xbf16> to vector<143x32xbf16>
      %246 = vector.extract_strided_slice %160 {offsets = [0, 0], sizes = [11, 32], strides = [1, 1]} : vector<154x32xbf16> to vector<11x32xbf16>
      %247 = tpu.concatenate %245, %246 in 0 : vector<143x32xbf16>, vector<11x32xbf16> -> vector<154x32xbf16>
      %248 = vector.shape_cast %12 : vector<154x1xi1> to vector<154x1xi1>
      %249 = vector.broadcast %248 : vector<154x1xi1> to vector<154x32xi1>
      %250 = arith.select %249, %244, %247 : vector<154x32xi1>, vector<154x32xbf16>
      %251 = vector.extract_strided_slice %160 {offsets = [78, 0], sizes = [76, 32], strides = [1, 1]} : vector<154x32xbf16> to vector<76x32xbf16>
      %252 = vector.extract_strided_slice %160 {offsets = [0, 0], sizes = [78, 32], strides = [1, 1]} : vector<154x32xbf16> to vector<78x32xbf16>
      %253 = tpu.concatenate %251, %252 in 0 : vector<76x32xbf16>, vector<78x32xbf16> -> vector<154x32xbf16>
      %254 = vector.extract_strided_slice %160 {offsets = [89, 0], sizes = [65, 32], strides = [1, 1]} : vector<154x32xbf16> to vector<65x32xbf16>
      %255 = vector.extract_strided_slice %160 {offsets = [0, 0], sizes = [89, 32], strides = [1, 1]} : vector<154x32xbf16> to vector<89x32xbf16>
      %256 = tpu.concatenate %254, %255 in 0 : vector<65x32xbf16>, vector<89x32xbf16> -> vector<154x32xbf16>
      %257 = vector.shape_cast %6 : vector<154x1xi1> to vector<154x1xi1>
      %258 = vector.broadcast %257 : vector<154x1xi1> to vector<154x32xi1>
      %259 = arith.select %258, %253, %256 : vector<154x32xi1>, vector<154x32xbf16>
      %260 = vector.extract_strided_slice %160 {offsets = [12, 0], sizes = [142, 32], strides = [1, 1]} : vector<154x32xbf16> to vector<142x32xbf16>
      %261 = vector.extract_strided_slice %160 {offsets = [0, 0], sizes = [12, 32], strides = [1, 1]} : vector<154x32xbf16> to vector<12x32xbf16>
      %262 = tpu.concatenate %260, %261 in 0 : vector<142x32xbf16>, vector<12x32xbf16> -> vector<154x32xbf16>
      %263 = vector.shape_cast %6 : vector<154x1xi1> to vector<154x1xi1>
      %264 = vector.broadcast %263 : vector<154x1xi1> to vector<154x32xi1>
      %265 = arith.select %264, %220, %262 : vector<154x32xi1>, vector<154x32xbf16>
      %266 = vector.shape_cast %12 : vector<154x1xi1> to vector<154x1xi1>
      %267 = vector.broadcast %266 : vector<154x1xi1> to vector<154x32xi1>
      %268 = arith.select %267, %259, %265 : vector<154x32xi1>, vector<154x32xbf16>
      %269 = tpu.concatenate %181, %190, %211, %217, %160, %223, %241, %250, %268 in 1 : vector<154x32xbf16>, vector<154x32xbf16>, vector<154x32xbf16>, vector<154x32xbf16>, vector<154x32xbf16>, vector<154x32xbf16>, vector<154x32xbf16>, vector<154x32xbf16>, vector<154x32xbf16> -> vector<154x288xbf16>
      %270 = arith.index_cast %arg14 : i32 to index
      %c0_36 = arith.constant 0 : index
      %c0_37 = arith.constant 0 : index
      %271 = vector.load %arg7[%270, %c0_36, %c0_37] : memref<12x288x32xbf16, #tpu.memory_space<vmem>>, vector<1x288x32xbf16>
      %272 = vector.shape_cast %271 : vector<1x288x32xbf16> to vector<288x32xbf16>
      %cst_38 = arith.constant dense<0.000000e+00> : vector<154x32xf32>
      %273 = tpu.matmul %269, %272, %cst_38 {dimension_numbers = #tpu.dot_dimension_numbers<[1], [0], [0], [1], [0, 0, 1, 1], [], []>} : vector<154x288xbf16>, vector<288x32xbf16>, vector<154x32xf32> -> vector<154x32xf32>
      %274 = arith.index_cast %arg14 : i32 to index
      %c0_39 = arith.constant 0 : index
      %c0_40 = arith.constant 0 : index
      %275 = vector.load %arg8[%274, %c0_39, %c0_40] : memref<12x1x32xf32, #tpu.memory_space<vmem>>, vector<1x1x32xf32>
      %276 = vector.shape_cast %275 : vector<1x1x32xf32> to vector<1x32xf32>
      %277 = vector.broadcast %276 : vector<1x32xf32> to vector<154x32xf32>
      %278 = arith.mulf %273, %277 : vector<154x32xf32>
      %279 = arith.index_cast %arg14 : i32 to index
      %c0_41 = arith.constant 0 : index
      %c0_42 = arith.constant 0 : index
      %280 = vector.load %arg9[%279, %c0_41, %c0_42] : memref<12x1x32xf32, #tpu.memory_space<vmem>>, vector<1x1x32xf32>
      %281 = vector.shape_cast %280 : vector<1x1x32xf32> to vector<1x32xf32>
      %282 = vector.broadcast %281 : vector<1x32xf32> to vector<154x32xf32>
      %283 = arith.addf %278, %282 : vector<154x32xf32>
      %284 = arith.addf %159, %283 : vector<154x32xf32>
      %cst_43 = arith.constant 0.000000e+00 : f32
      %285 = vector.broadcast %cst_43 : f32 to vector<154x32xf32>
      %286 = arith.maximumf %284, %285 : vector<154x32xf32>
      %c0_44 = arith.constant 0 : index
      %c0_45 = arith.constant 0 : index
      %287 = vector.load %arg13[%c0_44, %c0_45] : memref<154x32xf32, #tpu.memory_space<vmem>>, vector<154x32xf32>
      tpu.vector_store %arg13[%c0_44, %c0_45], %286 {strides = array<i32>} : memref<154x32xf32, #tpu.memory_space<vmem>>, vector<154x32xf32>,
    }
    %c12_i32_16 = arith.constant 12 : i32
    %c0_17 = arith.constant 0 : index
    %c0_18 = arith.constant 0 : index
    %136 = vector.load %arg13[%c0_17, %c0_18] : memref<154x32xf32, #tpu.memory_space<vmem>>, vector<154x32xf32>
    %c0_19 = arith.constant 0 : index
    %c0_20 = arith.constant 0 : index
    %137 = vector.load %arg1[%c0_19, %c0_20] : memref<154x30xf32, #tpu.memory_space<vmem>>, vector<154x1xf32>
    %138 = vector.broadcast %137 : vector<154x1xf32> to vector<154x32xf32>
    %139 = arith.mulf %136, %138 : vector<154x32xf32>
    %140 = tpu.concatenate %139, %136 in 1 : vector<154x32xf32>, vector<154x32xf32> -> vector<154x64xf32>
    %141 = arith.truncf %140 : vector<154x64xf32> to vector<154x64xbf16>
    %c0_21 = arith.constant 0 : index
    %c0_22 = arith.constant 0 : index
    %142 = vector.load %arg3[%c0_21, %c0_22] : memref<2x154xbf16, #tpu.memory_space<vmem>>, vector<2x154xbf16>
    %cst_23 = arith.constant dense<0.000000e+00> : vector<2x64xf32>
    %143 = tpu.matmul %142, %141, %cst_23 {dimension_numbers = #tpu.dot_dimension_numbers<[1], [0], [0], [1], [0, 0, 1, 1], [], []>} : vector<2x154xbf16>, vector<154x64xbf16>, vector<2x64xf32> -> vector<2x64xf32>
    %144 = vector.extract_strided_slice %143 {offsets = [0, 0], sizes = [2, 32], strides = [1, 1]} : vector<2x64xf32> to vector<2x32xf32>
    %145 = vector.extract_strided_slice %143 {offsets = [0, 32], sizes = [2, 32], strides = [1, 1]} : vector<2x64xf32> to vector<2x32xf32>
    %cst_24 = arith.constant 0.012987013 : f32
    %146 = vector.broadcast %cst_24 : f32 to vector<2x32xf32>
    %147 = arith.mulf %145, %146 : vector<2x32xf32>
    %148 = arith.truncf %144 : vector<2x32xf32> to vector<2x32xbf16>
    %c0_25 = arith.constant 0 : index
    %c0_26 = arith.constant 0 : index
    %149 = vector.load %arg10[%c0_25, %c0_26] : memref<32x4xbf16, #tpu.memory_space<vmem>>, vector<32x4xbf16>
    %cst_27 = arith.constant dense<0.000000e+00> : vector<2x4xf32>
    %150 = tpu.matmul %148, %149, %cst_27 {dimension_numbers = #tpu.dot_dimension_numbers<[1], [0], [0], [1], [0, 0, 1, 1], [], []>} : vector<2x32xbf16>, vector<32x4xbf16>, vector<2x4xf32> -> vector<2x4xf32>
    %151 = tpu.concatenate %144, %147 in 1 : vector<2x32xf32>, vector<2x32xf32> -> vector<2x64xf32>
    %152 = arith.truncf %151 : vector<2x64xf32> to vector<2x64xbf16>
    %c0_28 = arith.constant 0 : index
    %c0_29 = arith.constant 0 : index
    %153 = vector.load %arg11[%c0_28, %c0_29] : memref<64x1xbf16, #tpu.memory_space<vmem>>, vector<64x1xbf16>
    %cst_30 = arith.constant dense<0.000000e+00> : vector<2x1xf32>
    %154 = tpu.matmul %152, %153, %cst_30 {dimension_numbers = #tpu.dot_dimension_numbers<[1], [0], [0], [1], [0, 0, 1, 1], [], []>} : vector<2x64xbf16>, vector<64x1xbf16>, vector<2x1xf32> -> vector<2x1xf32>
    %155 = math.tanh %154 : vector<2x1xf32>
    %cst_31 = arith.constant 0.000000e+00 : f32
    %156 = vector.broadcast %cst_31 : f32 to vector<2x3xf32>
    %157 = tpu.concatenate %150, %155, %156 in 1 : vector<2x4xf32>, vector<2x1xf32>, vector<2x3xf32> -> vector<2x8xf32>
    %c0_32 = arith.constant 0 : index
    %c0_33 = arith.constant 0 : index
    %158 = vector.load %arg12[%c0_32, %c0_33] : memref<2x8xf32, #tpu.memory_space<vmem>>, vector<2x8xf32>
    tpu.vector_store %arg12[%c0_32, %c0_33], %157 {strides = array<i32>} : memref<2x8xf32, #tpu.memory_space<vmem>>, vector<2x8xf32>,
    return
  }
  func.func @transform_0(%arg0: i32) -> (i32, i32) {
    %c0_i32 = arith.constant 0 : i32
    %c0_i32_0 = arith.constant 0 : i32
    return %arg0, %c0_i32 : i32, i32
  }
  func.func @transform_1(%arg0: i32) -> (i32, i32) {
    %c0_i32 = arith.constant 0 : i32
    %c0_i32_0 = arith.constant 0 : i32
    %c0_i32_1 = arith.constant 0 : i32
    return %c0_i32, %c0_i32_0 : i32, i32
  }
  func.func @transform_2(%arg0: i32) -> (i32, i32) {
    %c0_i32 = arith.constant 0 : i32
    %c0_i32_0 = arith.constant 0 : i32
    %c0_i32_1 = arith.constant 0 : i32
    return %c0_i32, %c0_i32_0 : i32, i32
  }
  func.func @transform_3(%arg0: i32) -> (i32, i32) {
    %c0_i32 = arith.constant 0 : i32
    %c0_i32_0 = arith.constant 0 : i32
    %c0_i32_1 = arith.constant 0 : i32
    return %c0_i32, %c0_i32_0 : i32, i32
  }
  func.func @transform_4(%arg0: i32) -> (i32, i32) {
    %c0_i32 = arith.constant 0 : i32
    %c0_i32_0 = arith.constant 0 : i32
    %c0_i32_1 = arith.constant 0 : i32
    return %c0_i32, %c0_i32_0 : i32, i32
  }
  func.func @transform_5(%arg0: i32) -> (i32, i32) {
    %c0_i32 = arith.constant 0 : i32
    %c0_i32_0 = arith.constant 0 : i32
    %c0_i32_1 = arith.constant 0 : i32
    return %c0_i32, %c0_i32_0 : i32, i32
  }
  func.func @transform_6(%arg0: i32) -> (i32, i32, i32) {
    %c0_i32 = arith.constant 0 : i32
    %c0_i32_0 = arith.constant 0 : i32
    %c0_i32_1 = arith.constant 0 : i32
    %c0_i32_2 = arith.constant 0 : i32
    return %c0_i32, %c0_i32_0, %c0_i32_1 : i32, i32, i32
  }
  func.func @transform_7(%arg0: i32) -> (i32, i32, i32) {
    %c0_i32 = arith.constant 0 : i32
    %c0_i32_0 = arith.constant 0 : i32
    %c0_i32_1 = arith.constant 0 : i32
    %c0_i32_2 = arith.constant 0 : i32
    return %c0_i32, %c0_i32_0, %c0_i32_1 : i32, i32, i32
  }
  func.func @transform_8(%arg0: i32) -> (i32, i32, i32) {
    %c0_i32 = arith.constant 0 : i32
    %c0_i32_0 = arith.constant 0 : i32
    %c0_i32_1 = arith.constant 0 : i32
    %c0_i32_2 = arith.constant 0 : i32
    return %c0_i32, %c0_i32_0, %c0_i32_1 : i32, i32, i32
  }
  func.func @transform_9(%arg0: i32) -> (i32, i32) {
    %c0_i32 = arith.constant 0 : i32
    %c0_i32_0 = arith.constant 0 : i32
    %c0_i32_1 = arith.constant 0 : i32
    return %c0_i32, %c0_i32_0 : i32, i32
  }
  func.func @transform_10(%arg0: i32) -> (i32, i32) {
    %c0_i32 = arith.constant 0 : i32
    %c0_i32_0 = arith.constant 0 : i32
    %c0_i32_1 = arith.constant 0 : i32
    return %c0_i32, %c0_i32_0 : i32, i32
  }
  func.func @transform_11(%arg0: i32) -> (i32, i32) {
    %c0_i32 = arith.constant 0 : i32
    %c0_i32_0 = arith.constant 0 : i32
    return %arg0, %c0_i32 : i32, i32
  }
}

</mosaic_0001>

<llo_original>
// kernel: tpu_custom_call.1
$region0: #{tpu_custom_call.1}
  #allocation0 [shape = 'u32[]', space=smem, size = 0x4, offset = 0x4, fixed_abs, tag = 'smem constant byte address 0x4 - core index']
  #allocation1 [shape = 'u32[144,128]{1,0:T(1,128)}', space=vmem, size = 0x12000, scoped, tag = 'internal scratch']
  #allocation2 [shape = 'f32[154,32]{1,0:T(8,128)}', space=vmem, size = 0x14000, scoped, tag = 'scratch operand']
  %s0 = inlined_call_operand.vmem [shape: f32[154,30], index: 0, kind: input, shape index: {}]
  %s1 = inlined_call_operand.vmem [shape: f32[154,4], index: 1, kind: input, shape index: {}]
  %s2 = inlined_call_operand.vmem [shape: bf16[2,154], index: 2, kind: input, shape index: {}]
  %s3 = inlined_call_operand.vmem [shape: bf16[270,32], index: 3, kind: input, shape index: {}]
  %s4 = inlined_call_operand.vmem [shape: f32[1,32], index: 4, kind: input, shape index: {}]
  %s5 = inlined_call_operand.vmem [shape: f32[1,32], index: 5, kind: input, shape index: {}]
  %s6 = inlined_call_operand.vmem [shape: bf16[12,288,32], index: 6, kind: input, shape index: {}]
  %s7 = inlined_call_operand.vmem [shape: f32[12,1,32], index: 7, kind: input, shape index: {}]
  %s8 = inlined_call_operand.vmem [shape: f32[12,1,32], index: 8, kind: input, shape index: {}]
  %s9 = inlined_call_operand.vmem [shape: bf16[32,4], index: 9, kind: input, shape index: {}]
  %s10 = inlined_call_operand.vmem [shape: bf16[64,1], index: 10, kind: input, shape index: {}]
  %s11 = inlined_call_operand.hbm [shape: f32[2,8], index: 11, kind: output, shape index: {}]
  %s12 = sld [smem:[#allocation0]]
  $region61: #{tpu_custom_call.1} parent=0
    _
  %s14 = ssub.s32 1, %s12
  %s15 = scalar_select 0, %s14, %s12
  $region1: #{tpu_custom_call.1} parent=0
    #allocation3 [shape = 'u8[1024]{0}', space=vmem, size = 0x400, scoped, tag = 'output window, operand 0, single buffered']
    #allocation4 [shape = 's32[1]{0}', space=sflag, size = 0x4, scoped, tag = 'scoped memory for tpu_custom_call.1']
    %16 = vsyncpa [#allocation4], 0
    // Predicated region
    $region2: #{tpu_custom_call.1} parent=1 // pred_check
      _
    $region3: #{tpu_custom_call.1} parent=1 // pred_check_branch
      %18 = sbr.rel (0) target = $region5
    $region4: #{tpu_custom_call.1} parent=1 // pred_region
      _
    $region5: #{tpu_custom_call.1} parent=1 // pred_fallthru
      _
    // Predicated region
    $region6: #{tpu_custom_call.1} parent=1 // pred_check
      _
    $region7: #{tpu_custom_call.1} parent=1 // pred_check_branch
      %20 = sbr.rel (0) target = $region9
    $region8: #{tpu_custom_call.1} parent=1 // pred_region
      _
    $region9: #{tpu_custom_call.1} parent=1 // pred_fallthru
      _
    // Predicated region
    $region10: #{tpu_custom_call.1} parent=1 // pred_check
      _
    $region11: #{tpu_custom_call.1} parent=1 // pred_check_branch
      %22 = sbr.rel (0) target = $region13
    $region12: #{tpu_custom_call.1} parent=1 // pred_region
      _
    $region13: #{tpu_custom_call.1} parent=1 // pred_fallthru
      _
    // Predicated region
    $region14: #{tpu_custom_call.1} parent=1 // pred_check
      _
    $region15: #{tpu_custom_call.1} parent=1 // pred_check_branch
      %24 = sbr.rel (0) target = $region17
    $region16: #{tpu_custom_call.1} parent=1 // pred_region
      _
    $region17: #{tpu_custom_call.1} parent=1 // pred_fallthru
      _
    // Predicated region
    $region18: #{tpu_custom_call.1} parent=1 // pred_check
      _
    $region19: #{tpu_custom_call.1} parent=1 // pred_check_branch
      %26 = sbr.rel (0) target = $region21
    $region20: #{tpu_custom_call.1} parent=1 // pred_region
      _
    $region21: #{tpu_custom_call.1} parent=1 // pred_fallthru
      _
    // Predicated region
    $region22: #{tpu_custom_call.1} parent=1 // pred_check
      _
    $region23: #{tpu_custom_call.1} parent=1 // pred_check_branch
      %28 = sbr.rel (0) target = $region25
    $region24: #{tpu_custom_call.1} parent=1 // pred_region
      _
    $region25: #{tpu_custom_call.1} parent=1 // pred_fallthru
      _
    // Predicated region
    $region26: #{tpu_custom_call.1} parent=1 // pred_check
      _
    $region27: #{tpu_custom_call.1} parent=1 // pred_check_branch
      %30 = sbr.rel (0) target = $region29
    $region28: #{tpu_custom_call.1} parent=1 // pred_region
      _
    $region29: #{tpu_custom_call.1} parent=1 // pred_fallthru
      _
    // Predicated region
    $region30: #{tpu_custom_call.1} parent=1 // pred_check
      _
    $region31: #{tpu_custom_call.1} parent=1 // pred_check_branch
      %32 = sbr.rel (0) target = $region33
    $region32: #{tpu_custom_call.1} parent=1 // pred_region
      _
    $region33: #{tpu_custom_call.1} parent=1 // pred_fallthru
      _
    // Predicated region
    $region34: #{tpu_custom_call.1} parent=1 // pred_check
      _
    $region35: #{tpu_custom_call.1} parent=1 // pred_check_branch
      %34 = sbr.rel (0) target = $region37
    $region36: #{tpu_custom_call.1} parent=1 // pred_region
      _
    $region37: #{tpu_custom_call.1} parent=1 // pred_fallthru
      _
    // Predicated region
    $region38: #{tpu_custom_call.1} parent=1 // pred_check
      _
    $region39: #{tpu_custom_call.1} parent=1 // pred_check_branch
      %36 = sbr.rel (0) target = $region41
    $region40: #{tpu_custom_call.1} parent=1 // pred_region
      _
    $region41: #{tpu_custom_call.1} parent=1 // pred_fallthru
      _
    // Predicated region
    $region42: #{tpu_custom_call.1} parent=1 // pred_check
      _
    $region43: #{tpu_custom_call.1} parent=1 // pred_check_branch
      %38 = sbr.rel (0) target = $region45
    $region44: #{tpu_custom_call.1} parent=1 // pred_region
      _
    $region45: #{tpu_custom_call.1} parent=1 // pred_fallthru
      _
    %v42 = vld [vmem:[%s1] sm:$0xff]
    %v43 = vld [vmem:[%s1 + $0x8] sm:$0xff]
    %v44 = vld [vmem:[%s1 + $0x10] sm:$0xff]
    %v45 = vld [vmem:[%s1 + $0x18] sm:$0xff]
    %v46 = vld [vmem:[%s1 + $0x20] sm:$0xff]
    %v47 = vld [vmem:[%s1 + $0x28] sm:$0xff]
    %v48 = vld [vmem:[%s1 + $0x30] sm:$0xff]
    %v49 = vld [vmem:[%s1 + $0x38] sm:$0xff]
    %v50 = vld [vmem:[%s1 + $0x40] sm:$0xff]
    %v51 = vld [vmem:[%s1 + $0x48] sm:$0xff]
    %v52 = vld [vmem:[%s1 + $0x50] sm:$0xff]
    %v53 = vld [vmem:[%s1 + $0x58] sm:$0xff]
    %v54 = vld [vmem:[%s1 + $0x60] sm:$0xff]
    %v55 = vld [vmem:[%s1 + $0x68] sm:$0xff]
    %v56 = vld [vmem:[%s1 + $0x70] sm:$0xff]
    %v57 = vld [vmem:[%s1 + $0x78] sm:$0xff]
    %v58 = vld [vmem:[%s1 + $0x80] sm:$0xff]
    %v59 = vld [vmem:[%s1 + $0x88] sm:$0xff]
    %v60 = vld [vmem:[%s1 + $0x90] sm:$0xff]
    %v61 = vld [vmem:[%s1 + $0x98] sm:$0x3]
    %vm62 = vcmp.gt.f32.partialorder %v42, 0.5
    %vm63 = vcmp.gt.f32.partialorder %v43, 0.5
    %vm64 = vcmp.gt.f32.partialorder %v44, 0.5
    %vm65 = vcmp.gt.f32.partialorder %v45, 0.5
    %vm66 = vcmp.gt.f32.partialorder %v46, 0.5
    %vm67 = vcmp.gt.f32.partialorder %v47, 0.5
    %vm68 = vcmp.gt.f32.partialorder %v48, 0.5
    %vm69 = vcmp.gt.f32.partialorder %v49, 0.5
    %vm70 = vcmp.gt.f32.partialorder %v50, 0.5
    %vm71 = vcmp.gt.f32.partialorder %v51, 0.5
    %vm72 = vcmp.gt.f32.partialorder %v52, 0.5
    %vm73 = vcmp.gt.f32.partialorder %v53, 0.5
    %vm74 = vcmp.gt.f32.partialorder %v54, 0.5
    %vm75 = vcmp.gt.f32.partialorder %v55, 0.5
    %vm76 = vcmp.gt.f32.partialorder %v56, 0.5
    %vm77 = vcmp.gt.f32.partialorder %v57, 0.5
    %vm78 = vcmp.gt.f32.partialorder %v58, 0.5
    %vm79 = vcmp.gt.f32.partialorder %v59, 0.5
    %vm80 = vcmp.gt.f32.partialorder %v60, 0.5
    %vm81 = vcmp.gt.f32.partialorder %v61, 0.5
    %v82 = vld [vmem:[%s0] sm:$0xff]
    %v83 = vld [vmem:[%s0 + $0x8] sm:$0xff]
    %v84 = vld [vmem:[%s0 + $0x10] sm:$0xff]
    %v85 = vld [vmem:[%s0 + $0x18] sm:$0xff]
    %v86 = vld [vmem:[%s0 + $0x20] sm:$0xff]
    %v87 = vld [vmem:[%s0 + $0x28] sm:$0xff]
    %v88 = vld [vmem:[%s0 + $0x30] sm:$0xff]
    %v89 = vld [vmem:[%s0 + $0x38] sm:$0xff]
    %v90 = vld [vmem:[%s0 + $0x40] sm:$0xff]
    %v91 = vld [vmem:[%s0 + $0x48] sm:$0xff]
    %v92 = vld [vmem:[%s0 + $0x50] sm:$0xff]
    %v93 = vld [vmem:[%s0 + $0x58] sm:$0xff]
    %v94 = vld [vmem:[%s0 + $0x60] sm:$0xff]
    %v95 = vld [vmem:[%s0 + $0x68] sm:$0xff]
    %v96 = vld [vmem:[%s0 + $0x70] sm:$0xff]
    %v97 = vld [vmem:[%s0 + $0x78] sm:$0xff]
    %v98 = vld [vmem:[%s0 + $0x80] sm:$0xff]
    %v99 = vld [vmem:[%s0 + $0x88] sm:$0xff]
    %v100 = vld [vmem:[%s0 + $0x90] sm:$0xff]
    %v101 = vld [vmem:[%s0 + $0x98] sm:$0x3]
    %v102 = vpack.c.bf16 %v83, %v82
    %v103 = vpack.c.bf16 %v85, %v84
    %v104 = vpack.c.bf16 %v87, %v86
    %v105 = vpack.c.bf16 %v89, %v88
    %v106 = vpack.c.bf16 %v91, %v90
    %v107 = vpack.c.bf16 %v93, %v92
    %v108 = vpack.c.bf16 %v95, %v94
    %v109 = vpack.c.bf16 %v97, %v96
    %v110 = vpack.c.bf16 %v99, %v98
    %v111 = vpack.c.bf16 %v101, %v100
    %vm118 = vcmask 1041408
    %v119 = vrot.slane %v106, 6
    %v120 = vrot.slane %v107, 6
    %v121 = vsel %vm118, %v119, %v120
    %v122 = vrot.slane %v108, 6
    %v123 = vsel %vm118, %v120, %v122
    %v124 = vrot.slane %v109, 6
    %v125 = vsel %vm118, %v122, %v124
    %v126 = vrot.slane %v110, 6
    %v127 = vsel %vm118, %v124, %v126
    %v128 = vrot.slane %v111, 6
    %v129 = vsel %vm118, %v126, %v128
    %vm138 = vcmask 1046528
    %v139 = vrot.slane %v102, 1
    %v140 = vrot.slane %v103, 1
    %v141 = vsel %vm138, %v139, %v140
    %v142 = vrot.slane %v104, 1
    %v143 = vsel %vm138, %v140, %v142
    %v144 = vrot.slane %v105, 1
    %v145 = vsel %vm138, %v142, %v144
    %v146 = vrot.slane %v106, 1
    %v147 = vsel %vm138, %v144, %v146
    %vm153 = vcmask 1046528
    %v156 = vsel %vm153, %v129, %v139
    %vm158 = vsmask.f32 7424
    %v160 = vshrl.u32 %v106, 16
    %v162 = vshll.u32 %v106, 16
    %v164 = vrot.slane %v162, 1
    %v165 = vor.u32 %v160, %v164
    %v167 = vshll.u32 %v107, 16
    %v169 = vrot.slane %v167, 1
    %v170 = vsel %vm158, %v165, %v169
    %v171 = vshrl.u32 %v107, 16
    %v173 = vor.u32 %v171, %v169
    %v175 = vshll.u32 %v108, 16
    %v177 = vrot.slane %v175, 1
    %v178 = vsel %vm158, %v173, %v177
    %v179 = vshrl.u32 %v108, 16
    %v181 = vor.u32 %v179, %v177
    %v183 = vshll.u32 %v109, 16
    %v185 = vrot.slane %v183, 1
    %v186 = vsel %vm158, %v181, %v185
    %v187 = vshrl.u32 %v109, 16
    %v189 = vor.u32 %v187, %v185
    %v191 = vshll.u32 %v110, 16
    %v193 = vrot.slane %v191, 1
    %v194 = vsel %vm158, %v189, %v193
    %v195 = vshrl.u32 %v110, 16
    %v197 = vor.u32 %v195, %v193
    %v199 = vshll.u32 %v111, 16
    %v201 = vrot.slane %v199, 1
    %v202 = vsel %vm158, %v197, %v201
    %v203 = vshrl.u32 %v111, 16
    %v205 = vor.u32 %v203, %v201
    %vm212 = vsmask.f32 4352
    %v214 = vshrl.u32 %v102, 16
    %v216 = vrot.slane %v214, 3
    %v217 = vshll.u32 %v102, 16
    %v219 = vrot.slane %v217, 4
    %v220 = vor.u32 %v216, %v219
    %v222 = vshrl.u32 %v103, 16
    %v224 = vrot.slane %v222, 3
    %v225 = vshll.u32 %v103, 16
    %v227 = vrot.slane %v225, 4
    %v228 = vor.u32 %v224, %v227
    %v229 = vsel %vm212, %v220, %v228
    %v231 = vshrl.u32 %v104, 16
    %v233 = vrot.slane %v231, 3
    %v234 = vshll.u32 %v104, 16
    %v236 = vrot.slane %v234, 4
    %v237 = vor.u32 %v233, %v236
    %v238 = vsel %vm212, %v228, %v237
    %v240 = vshrl.u32 %v105, 16
    %v242 = vrot.slane %v240, 3
    %v243 = vshll.u32 %v105, 16
    %v245 = vrot.slane %v243, 4
    %v246 = vor.u32 %v242, %v245
    %v247 = vsel %vm212, %v237, %v246
    %v248 = vrot.slane %v162, 4
    %v249 = vsel %vm212, %v246, %v248
    %vm255 = vcmask 1044480
    %vm256 = vmand %vm255, %vm212
    %v257 = vsel %vm256, %v205, %v220
    %v258 = vsel %vm62, 1, 0
    %v259 = vsel %vm63, 1, 0
    %v260 = vsel %vm64, 1, 0
    %v261 = vsel %vm65, 1, 0
    %v262 = vsel %vm66, 1, 0
    %v263 = vsel %vm67, 1, 0
    %v264 = vsel %vm68, 1, 0
    %v265 = vsel %vm69, 1, 0
    %v266 = vsel %vm70, 1, 0
    %v267 = vsel %vm71, 1, 0
    %v268 = vsel %vm72, 1, 0
    %v269 = vsel %vm73, 1, 0
    %v270 = vsel %vm74, 1, 0
    %v271 = vsel %vm75, 1, 0
    %v272 = vsel %vm76, 1, 0
    %v273 = vsel %vm77, 1, 0
    %v274 = vsel %vm78, 1, 0
    %v275 = vsel %vm79, 1, 0
    %v276 = vsel %vm80, 1, 0
    %v277 = vsel %vm81, 1, 0
    %278 = vset.pattern.permute.xlu0 0
    %279 = vperm.xlu0 %278, %v258
    %v280 = vpop.permute.xlu0 %279
    %281 = vset.pattern.permute.xlu0 0
    %282 = vperm.xlu0 %281, %v259
    %v283 = vpop.permute.xlu0 %282
    %284 = vset.pattern.permute.xlu0 0
    %285 = vperm.xlu0 %284, %v260
    %v286 = vpop.permute.xlu0 %285
    %287 = vset.pattern.permute.xlu0 0
    %288 = vperm.xlu0 %287, %v261
    %v289 = vpop.permute.xlu0 %288
    %290 = vset.pattern.permute.xlu0 0
    %291 = vperm.xlu0 %290, %v262
    %v292 = vpop.permute.xlu0 %291
    %293 = vset.pattern.permute.xlu0 0
    %294 = vperm.xlu0 %293, %v263
    %v295 = vpop.permute.xlu0 %294
    %296 = vset.pattern.permute.xlu0 0
    %297 = vperm.xlu0 %296, %v264
    %v298 = vpop.permute.xlu0 %297
    %299 = vset.pattern.permute.xlu0 0
    %300 = vperm.xlu0 %299, %v265
    %v301 = vpop.permute.xlu0 %300
    %302 = vset.pattern.permute.xlu0 0
    %303 = vperm.xlu0 %302, %v266
    %v304 = vpop.permute.xlu0 %303
    %305 = vset.pattern.permute.xlu0 0
    %306 = vperm.xlu0 %305, %v267
    %v307 = vpop.permute.xlu0 %306
    %308 = vset.pattern.permute.xlu0 0
    %309 = vperm.xlu0 %308, %v268
    %v310 = vpop.permute.xlu0 %309
    %311 = vset.pattern.permute.xlu0 0
    %312 = vperm.xlu0 %311, %v269
    %v313 = vpop.permute.xlu0 %312
    %314 = vset.pattern.permute.xlu0 0
    %315 = vperm.xlu0 %314, %v270
    %v316 = vpop.permute.xlu0 %315
    %317 = vset.pattern.permute.xlu0 0
    %318 = vperm.xlu0 %317, %v271
    %v319 = vpop.permute.xlu0 %318
    %320 = vset.pattern.permute.xlu0 0
    %321 = vperm.xlu0 %320, %v272
    %v322 = vpop.permute.xlu0 %321
    %323 = vset.pattern.permute.xlu0 0
    %324 = vperm.xlu0 %323, %v273
    %v325 = vpop.permute.xlu0 %324
    %326 = vset.pattern.permute.xlu0 0
    %327 = vperm.xlu0 %326, %v274
    %v328 = vpop.permute.xlu0 %327
    %329 = vset.pattern.permute.xlu0 0
    %330 = vperm.xlu0 %329, %v275
    %v331 = vpop.permute.xlu0 %330
    %332 = vset.pattern.permute.xlu0 0
    %333 = vperm.xlu0 %332, %v276
    %v334 = vpop.permute.xlu0 %333
    %335 = vset.pattern.permute.xlu0 0
    %336 = vperm.xlu0 %335, %v277
    %v337 = vpop.permute.xlu0 %336
    %vm338 = vcmp.eq.s32.totalorder %v280, 1
    %vm339 = vcmp.eq.s32.totalorder %v283, 1
    %vm340 = vcmp.eq.s32.totalorder %v286, 1
    %vm341 = vcmp.eq.s32.totalorder %v289, 1
    %vm342 = vcmp.eq.s32.totalorder %v292, 1
    %vm343 = vcmp.eq.s32.totalorder %v295, 1
    %vm344 = vcmp.eq.s32.totalorder %v298, 1
    %vm345 = vcmp.eq.s32.totalorder %v301, 1
    %vm346 = vcmp.eq.s32.totalorder %v304, 1
    %vm347 = vcmp.eq.s32.totalorder %v307, 1
    %vm348 = vcmp.eq.s32.totalorder %v310, 1
    %vm349 = vcmp.eq.s32.totalorder %v313, 1
    %vm350 = vcmp.eq.s32.totalorder %v316, 1
    %vm351 = vcmp.eq.s32.totalorder %v319, 1
    %vm352 = vcmp.eq.s32.totalorder %v322, 1
    %vm353 = vcmp.eq.s32.totalorder %v325, 1
    %vm354 = vcmp.eq.s32.totalorder %v328, 1
    %vm355 = vcmp.eq.s32.totalorder %v331, 1
    %vm356 = vcmp.eq.s32.totalorder %v334, 1
    %vm357 = vcmp.eq.s32.totalorder %v337, 1
    %vm358 = vmpackc.low %vm338, %vm338
    %vm359 = vmpackc.low %vm339, %vm339
    %vm360 = vmpackc.low %vm340, %vm340
    %vm361 = vmpackc.low %vm341, %vm341
    %vm362 = vmpackc.low %vm342, %vm342
    %vm363 = vmpackc.low %vm343, %vm343
    %vm364 = vmpackc.low %vm344, %vm344
    %vm365 = vmpackc.low %vm345, %vm345
    %vm366 = vmpackc.low %vm346, %vm346
    %vm367 = vmpackc.low %vm347, %vm347
    %vm368 = vmpackc.low %vm348, %vm348
    %vm369 = vmpackc.low %vm349, %vm349
    %vm370 = vmpackc.low %vm350, %vm350
    %vm371 = vmpackc.low %vm351, %vm351
    %vm372 = vmpackc.low %vm352, %vm352
    %vm373 = vmpackc.low %vm353, %vm353
    %vm374 = vmpackc.low %vm354, %vm354
    %vm375 = vmpackc.low %vm355, %vm355
    %vm376 = vmpackc.low %vm356, %vm356
    %vm377 = vmpackc.low %vm357, %vm357
    %v378 = vsel %vm358, 65537, 0
    %v379 = vsel %vm359, 65537, 0
    %v380 = vsel %vm360, 65537, 0
    %v381 = vsel %vm361, 65537, 0
    %v382 = vsel %vm362, 65537, 0
    %v383 = vsel %vm363, 65537, 0
    %v384 = vsel %vm364, 65537, 0
    %v385 = vsel %vm365, 65537, 0
    %v386 = vsel %vm366, 65537, 0
    %v387 = vsel %vm367, 65537, 0
    %v388 = vsel %vm368, 65537, 0
    %v389 = vsel %vm369, 65537, 0
    %v390 = vsel %vm370, 65537, 0
    %v391 = vsel %vm371, 65537, 0
    %v392 = vsel %vm372, 65537, 0
    %v393 = vsel %vm373, 65537, 0
    %v394 = vsel %vm374, 65537, 0
    %v395 = vsel %vm375, 65537, 0
    %v396 = vsel %vm376, 65537, 0
    %v397 = vsel %vm377, 65537, 0
    %v398 = vunpack.c.l.b16 %v378
    %v399 = vunpack.c.l.b16 %v379
    %v400 = vunpack.c.l.b16 %v380
    %v401 = vunpack.c.l.b16 %v381
    %v402 = vunpack.c.l.b16 %v382
    %v403 = vunpack.c.l.b16 %v383
    %v404 = vunpack.c.l.b16 %v384
    %v405 = vunpack.c.l.b16 %v385
    %v406 = vunpack.c.l.b16 %v386
    %v407 = vunpack.c.l.b16 %v387
    %v408 = vunpack.c.l.b16 %v388
    %v409 = vunpack.c.l.b16 %v389
    %v410 = vunpack.c.l.b16 %v390
    %v411 = vunpack.c.l.b16 %v391
    %v412 = vunpack.c.l.b16 %v392
    %v413 = vunpack.c.l.b16 %v393
    %v414 = vunpack.c.l.b16 %v394
    %v415 = vunpack.c.l.b16 %v395
    %v416 = vunpack.c.l.b16 %v396
    %v417 = vunpack.c.l.b16 %v397
    %v418 = vpack.c.b16 %v399, %v398
    %v419 = vpack.c.b16 %v401, %v400
    %v420 = vpack.c.b16 %v403, %v402
    %v421 = vpack.c.b16 %v405, %v404
    %v422 = vpack.c.b16 %v407, %v406
    %v423 = vpack.c.b16 %v409, %v408
    %v424 = vpack.c.b16 %v411, %v410
    %v425 = vpack.c.b16 %v413, %v412
    %v426 = vpack.c.b16 %v415, %v414
    %v427 = vpack.c.b16 %v417, %v416
    %vm428 = vcmp.ne.s16.totalorder %v418, 0
    %vm429 = vcmp.ne.s16.totalorder %v419, 0
    %vm430 = vcmp.ne.s16.totalorder %v420, 0
    %vm431 = vcmp.ne.s16.totalorder %v421, 0
    %vm432 = vcmp.ne.s16.totalorder %v422, 0
    %vm433 = vcmp.ne.s16.totalorder %v423, 0
    %vm434 = vcmp.ne.s16.totalorder %v424, 0
    %vm435 = vcmp.ne.s16.totalorder %v425, 0
    %vm436 = vcmp.ne.s16.totalorder %v426, 0
    %vm437 = vcmp.ne.s16.totalorder %v427, 0
    %v438 = vsel %vm428, %v121, %v170
    %v439 = vsel %vm429, %v123, %v178
    %v440 = vsel %vm430, %v125, %v186
    %v441 = vsel %vm431, %v127, %v194
    %v442 = vsel %vm432, %v156, %v202
    %v443 = vsel %vm433, %v141, %v257
    %v444 = vsel %vm434, %v143, %v229
    %v445 = vsel %vm435, %v145, %v238
    %v446 = vsel %vm436, %v147, %v247
    %v447 = vsel %vm437, %v146, %v249
    %v448 = vrot.slane %v203, 4
    %vm450 = vsmask.f32 256
    %v451 = vrot.slane %v214, 7
    %v452 = vor.u32 %v451, %v217
    %v453 = vrot.slane %v222, 7
    %v454 = vor.u32 %v453, %v225
    %v455 = vsel %vm450, %v451, %v454
    %v456 = vrot.slane %v231, 7
    %v457 = vor.u32 %v456, %v234
    %v458 = vsel %vm450, %v453, %v457
    %v459 = vrot.slane %v240, 7
    %v460 = vor.u32 %v459, %v243
    %v461 = vsel %vm450, %v456, %v460
    %v462 = vrot.slane %v160, 7
    %v463 = vor.u32 %v462, %v162
    %v464 = vsel %vm450, %v459, %v463
    %v465 = vrot.slane %v171, 7
    %v466 = vor.u32 %v465, %v167
    %v467 = vsel %vm450, %v462, %v466
    %v468 = vrot.slane %v179, 7
    %v469 = vor.u32 %v468, %v175
    %v470 = vsel %vm450, %v465, %v469
    %v471 = vrot.slane %v187, 7
    %v472 = vor.u32 %v471, %v183
    %v473 = vsel %vm450, %v468, %v472
    %v474 = vrot.slane %v195, 7
    %v475 = vor.u32 %v474, %v191
    %v476 = vsel %vm450, %v471, %v475
    %v477 = vrot.slane %v203, 7
    %v478 = vor.u32 %v477, %v199
    %v479 = vsel %vm450, %v474, %v478
    %vm490 = vcmask 1040384
    %vm491 = vmand %vm490, %vm450
    %v492 = vsel %vm491, %v448, %v452
    %v493 = vrot.slane %v110, 7
    %v494 = vrot.slane %v111, 7
    %v495 = vsel %vm490, %v493, %v494
    %vm496 = vcmask 1045504
    %v497 = vrot.slane %v102, 2
    %v498 = vrot.slane %v103, 2
    %v499 = vsel %vm496, %v497, %v498
    %v500 = vrot.slane %v104, 2
    %v501 = vsel %vm496, %v498, %v500
    %v502 = vrot.slane %v105, 2
    %v503 = vsel %vm496, %v500, %v502
    %v504 = vrot.slane %v106, 2
    %v505 = vsel %vm496, %v502, %v504
    %v506 = vrot.slane %v107, 2
    %v507 = vsel %vm496, %v504, %v506
    %v508 = vrot.slane %v108, 2
    %v509 = vsel %vm496, %v506, %v508
    %v510 = vrot.slane %v109, 2
    %v511 = vsel %vm496, %v508, %v510
    %v512 = vrot.slane %v110, 2
    %v513 = vsel %vm496, %v510, %v512
    %vm523 = vcmask 1045504
    %v526 = vsel %vm523, %v495, %v497
    %v528 = vsel %vm428, %v492, %v526
    %v529 = vsel %vm429, %v455, %v499
    %v530 = vsel %vm430, %v458, %v501
    %v531 = vsel %vm431, %v461, %v503
    %v532 = vsel %vm432, %v464, %v505
    %v533 = vsel %vm433, %v467, %v507
    %v534 = vsel %vm434, %v470, %v509
    %v535 = vsel %vm435, %v473, %v511
    %v536 = vsel %vm436, %v476, %v513
    %v537 = vsel %vm437, %v479, %v512
    %538 = vset.pattern.permute.xlu0 2
    %539 = vperm.xlu0 %538, %v258
    %v540 = vpop.permute.xlu0 %539
    %541 = vset.pattern.permute.xlu0 2
    %542 = vperm.xlu0 %541, %v259
    %v543 = vpop.permute.xlu0 %542
    %544 = vset.pattern.permute.xlu0 2
    %545 = vperm.xlu0 %544, %v260
    %v546 = vpop.permute.xlu0 %545
    %547 = vset.pattern.permute.xlu0 2
    %548 = vperm.xlu0 %547, %v261
    %v549 = vpop.permute.xlu0 %548
    %550 = vset.pattern.permute.xlu0 2
    %551 = vperm.xlu0 %550, %v262
    %v552 = vpop.permute.xlu0 %551
    %553 = vset.pattern.permute.xlu0 2
    %554 = vperm.xlu0 %553, %v263
    %v555 = vpop.permute.xlu0 %554
    %556 = vset.pattern.permute.xlu0 2
    %557 = vperm.xlu0 %556, %v264
    %v558 = vpop.permute.xlu0 %557
    %559 = vset.pattern.permute.xlu0 2
    %560 = vperm.xlu0 %559, %v265
    %v561 = vpop.permute.xlu0 %560
    %562 = vset.pattern.permute.xlu0 2
    %563 = vperm.xlu0 %562, %v266
    %v564 = vpop.permute.xlu0 %563
    %565 = vset.pattern.permute.xlu0 2
    %566 = vperm.xlu0 %565, %v267
    %v567 = vpop.permute.xlu0 %566
    %568 = vset.pattern.permute.xlu0 2
    %569 = vperm.xlu0 %568, %v268
    %v570 = vpop.permute.xlu0 %569
    %571 = vset.pattern.permute.xlu0 2
    %572 = vperm.xlu0 %571, %v269
    %v573 = vpop.permute.xlu0 %572
    %574 = vset.pattern.permute.xlu0 2
    %575 = vperm.xlu0 %574, %v270
    %v576 = vpop.permute.xlu0 %575
    %577 = vset.pattern.permute.xlu0 2
    %578 = vperm.xlu0 %577, %v271
    %v579 = vpop.permute.xlu0 %578
    %580 = vset.pattern.permute.xlu0 2
    %581 = vperm.xlu0 %580, %v272
    %v582 = vpop.permute.xlu0 %581
    %583 = vset.pattern.permute.xlu0 2
    %584 = vperm.xlu0 %583, %v273
    %v585 = vpop.permute.xlu0 %584
    %586 = vset.pattern.permute.xlu0 2
    %587 = vperm.xlu0 %586, %v274
    %v588 = vpop.permute.xlu0 %587
    %589 = vset.pattern.permute.xlu0 2
    %590 = vperm.xlu0 %589, %v275
    %v591 = vpop.permute.xlu0 %590
    %592 = vset.pattern.permute.xlu0 2
    %593 = vperm.xlu0 %592, %v276
    %v594 = vpop.permute.xlu0 %593
    %595 = vset.pattern.permute.xlu0 2
    %596 = vperm.xlu0 %595, %v277
    %v597 = vpop.permute.xlu0 %596
    %vm598 = vcmp.eq.s32.totalorder %v540, 1
    %vm599 = vcmp.eq.s32.totalorder %v543, 1
    %vm600 = vcmp.eq.s32.totalorder %v546, 1
    %vm601 = vcmp.eq.s32.totalorder %v549, 1
    %vm602 = vcmp.eq.s32.totalorder %v552, 1
    %vm603 = vcmp.eq.s32.totalorder %v555, 1
    %vm604 = vcmp.eq.s32.totalorder %v558, 1
    %vm605 = vcmp.eq.s32.totalorder %v561, 1
    %vm606 = vcmp.eq.s32.totalorder %v564, 1
    %vm607 = vcmp.eq.s32.totalorder %v567, 1
    %vm608 = vcmp.eq.s32.totalorder %v570, 1
    %vm609 = vcmp.eq.s32.totalorder %v573, 1
    %vm610 = vcmp.eq.s32.totalorder %v576, 1
    %vm611 = vcmp.eq.s32.totalorder %v579, 1
    %vm612 = vcmp.eq.s32.totalorder %v582, 1
    %vm613 = vcmp.eq.s32.totalorder %v585, 1
    %vm614 = vcmp.eq.s32.totalorder %v588, 1
    %vm615 = vcmp.eq.s32.totalorder %v591, 1
    %vm616 = vcmp.eq.s32.totalorder %v594, 1
    %vm617 = vcmp.eq.s32.totalorder %v597, 1
    %vm618 = vmpackc.low %vm598, %vm598
    %vm619 = vmpackc.low %vm599, %vm599
    %vm620 = vmpackc.low %vm600, %vm600
    %vm621 = vmpackc.low %vm601, %vm601
    %vm622 = vmpackc.low %vm602, %vm602
    %vm623 = vmpackc.low %vm603, %vm603
    %vm624 = vmpackc.low %vm604, %vm604
    %vm625 = vmpackc.low %vm605, %vm605
    %vm626 = vmpackc.low %vm606, %vm606
    %vm627 = vmpackc.low %vm607, %vm607
    %vm628 = vmpackc.low %vm608, %vm608
    %vm629 = vmpackc.low %vm609, %vm609
    %vm630 = vmpackc.low %vm610, %vm610
    %vm631 = vmpackc.low %vm611, %vm611
    %vm632 = vmpackc.low %vm612, %vm612
    %vm633 = vmpackc.low %vm613, %vm613
    %vm634 = vmpackc.low %vm614, %vm614
    %vm635 = vmpackc.low %vm615, %vm615
    %vm636 = vmpackc.low %vm616, %vm616
    %vm637 = vmpackc.low %vm617, %vm617
    %v638 = vsel %vm618, 65537, 0
    %v639 = vsel %vm619, 65537, 0
    %v640 = vsel %vm620, 65537, 0
    %v641 = vsel %vm621, 65537, 0
    %v642 = vsel %vm622, 65537, 0
    %v643 = vsel %vm623, 65537, 0
    %v644 = vsel %vm624, 65537, 0
    %v645 = vsel %vm625, 65537, 0
    %v646 = vsel %vm626, 65537, 0
    %v647 = vsel %vm627, 65537, 0
    %v648 = vsel %vm628, 65537, 0
    %v649 = vsel %vm629, 65537, 0
    %v650 = vsel %vm630, 65537, 0
    %v651 = vsel %vm631, 65537, 0
    %v652 = vsel %vm632, 65537, 0
    %v653 = vsel %vm633, 65537, 0
    %v654 = vsel %vm634, 65537, 0
    %v655 = vsel %vm635, 65537, 0
    %v656 = vsel %vm636, 65537, 0
    %v657 = vsel %vm637, 65537, 0
    %v658 = vunpack.c.l.b16 %v638
    %v659 = vunpack.c.l.b16 %v639
    %v660 = vunpack.c.l.b16 %v640
    %v661 = vunpack.c.l.b16 %v641
    %v662 = vunpack.c.l.b16 %v642
    %v663 = vunpack.c.l.b16 %v643
    %v664 = vunpack.c.l.b16 %v644
    %v665 = vunpack.c.l.b16 %v645
    %v666 = vunpack.c.l.b16 %v646
    %v667 = vunpack.c.l.b16 %v647
    %v668 = vunpack.c.l.b16 %v648
    %v669 = vunpack.c.l.b16 %v649
    %v670 = vunpack.c.l.b16 %v650
    %v671 = vunpack.c.l.b16 %v651
    %v672 = vunpack.c.l.b16 %v652
    %v673 = vunpack.c.l.b16 %v653
    %v674 = vunpack.c.l.b16 %v654
    %v675 = vunpack.c.l.b16 %v655
    %v676 = vunpack.c.l.b16 %v656
    %v677 = vunpack.c.l.b16 %v657
    %v678 = vpack.c.b16 %v659, %v658
    %v679 = vpack.c.b16 %v661, %v660
    %v680 = vpack.c.b16 %v663, %v662
    %v681 = vpack.c.b16 %v665, %v664
    %v682 = vpack.c.b16 %v667, %v666
    %v683 = vpack.c.b16 %v669, %v668
    %v684 = vpack.c.b16 %v671, %v670
    %v685 = vpack.c.b16 %v673, %v672
    %v686 = vpack.c.b16 %v675, %v674
    %v687 = vpack.c.b16 %v677, %v676
    %vm688 = vcmp.ne.s16.totalorder %v678, 0
    %vm689 = vcmp.ne.s16.totalorder %v679, 0
    %vm690 = vcmp.ne.s16.totalorder %v680, 0
    %vm691 = vcmp.ne.s16.totalorder %v681, 0
    %vm692 = vcmp.ne.s16.totalorder %v682, 0
    %vm693 = vcmp.ne.s16.totalorder %v683, 0
    %vm694 = vcmp.ne.s16.totalorder %v684, 0
    %vm695 = vcmp.ne.s16.totalorder %v685, 0
    %vm696 = vcmp.ne.s16.totalorder %v686, 0
    %vm697 = vcmp.ne.s16.totalorder %v687, 0
    %v698 = vsel %vm688, %v438, %v528
    %v699 = vsel %vm689, %v439, %v529
    %v700 = vsel %vm690, %v440, %v530
    %v701 = vsel %vm691, %v441, %v531
    %v702 = vsel %vm692, %v442, %v532
    %v703 = vsel %vm693, %v443, %v533
    %v704 = vsel %vm694, %v444, %v534
    %v705 = vsel %vm695, %v445, %v535
    %v706 = vsel %vm696, %v446, %v536
    %v707 = vsel %vm697, %v447, %v537
    %v708 = vrot.slane %v107, 1
    %v709 = vsel %vm138, %v146, %v708
    %v710 = vrot.slane %v108, 1
    %v711 = vsel %vm138, %v708, %v710
    %v712 = vrot.slane %v109, 1
    %v713 = vsel %vm138, %v710, %v712
    %v714 = vrot.slane %v110, 1
    %v715 = vsel %vm138, %v712, %v714
    %v716 = vrot.slane %v111, 1
    %v717 = vsel %vm138, %v714, %v716
    %vm723 = vcmask 1043456
    %v724 = vrot.slane %v102, 4
    %v725 = vrot.slane %v103, 4
    %v726 = vsel %vm723, %v724, %v725
    %v727 = vrot.slane %v104, 4
    %v728 = vsel %vm723, %v725, %v727
    %v729 = vrot.slane %v105, 4
    %v730 = vsel %vm723, %v727, %v729
    %v731 = vrot.slane %v106, 4
    %v732 = vsel %vm723, %v729, %v731
    %vm737 = vcmask 1043456
    %v740 = vsel %vm737, %v716, %v724
    %vm742 = vsmask.f32 5376
    %v743 = vrot.slane %v214, 2
    %v744 = vrot.slane %v217, 3
    %v745 = vor.u32 %v743, %v744
    %v746 = vrot.slane %v222, 2
    %v747 = vrot.slane %v225, 3
    %v748 = vor.u32 %v746, %v747
    %v749 = vsel %vm742, %v745, %v748
    %v750 = vrot.slane %v231, 2
    %v751 = vrot.slane %v234, 3
    %v752 = vor.u32 %v750, %v751
    %v753 = vsel %vm742, %v748, %v752
    %v754 = vrot.slane %v240, 2
    %v755 = vrot.slane %v243, 3
    %v756 = vor.u32 %v754, %v755
    %v757 = vsel %vm742, %v752, %v756
    %v758 = vrot.slane %v160, 2
    %v759 = vrot.slane %v162, 3
    %v760 = vor.u32 %v758, %v759
    %v761 = vsel %vm742, %v756, %v760
    %v762 = vrot.slane %v171, 2
    %v763 = vrot.slane %v167, 3
    %v764 = vor.u32 %v762, %v763
    %v765 = vsel %vm742, %v760, %v764
    %v766 = vrot.slane %v179, 2
    %v767 = vrot.slane %v175, 3
    %v768 = vor.u32 %v766, %v767
    %v769 = vsel %vm742, %v764, %v768
    %v770 = vrot.slane %v187, 2
    %v771 = vrot.slane %v183, 3
    %v772 = vor.u32 %v770, %v771
    %v773 = vsel %vm742, %v768, %v772
    %v774 = vrot.slane %v195, 2
    %v775 = vrot.slane %v191, 3
    %v776 = vor.u32 %v774, %v775
    %v777 = vsel %vm742, %v772, %v776
    %vm788 = vmand %vm496, %vm742
    %v789 = vsel %vm788, %v479, %v745
    %v790 = vsel %vm688, %v709, %v789
    %v791 = vsel %vm689, %v711, %v749
    %v792 = vsel %vm690, %v713, %v753
    %v793 = vsel %vm691, %v715, %v757
    %v794 = vsel %vm692, %v717, %v761
    %v795 = vsel %vm693, %v740, %v765
    %v796 = vsel %vm694, %v726, %v769
    %v797 = vsel %vm695, %v728, %v773
    %v798 = vsel %vm696, %v730, %v777
    %v799 = vsel %vm697, %v732, %v776
    %v800 = vrot.slane %v107, 4
    %v801 = vsel %vm723, %v731, %v800
    %v802 = vrot.slane %v108, 4
    %v803 = vsel %vm723, %v800, %v802
    %v804 = vrot.slane %v109, 4
    %v805 = vsel %vm723, %v802, %v804
    %v806 = vrot.slane %v110, 4
    %v807 = vsel %vm723, %v804, %v806
    %v808 = vrot.slane %v111, 4
    %v809 = vsel %vm723, %v806, %v808
    %v815 = vrot.slane %v102, 7
    %v816 = vrot.slane %v103, 7
    %v817 = vsel %vm490, %v815, %v816
    %v818 = vrot.slane %v104, 7
    %v819 = vsel %vm490, %v816, %v818
    %v820 = vrot.slane %v105, 7
    %v821 = vsel %vm490, %v818, %v820
    %vm825 = vcmask 1040384
    %v828 = vsel %vm825, %v808, %v815
    %vm830 = vsmask.f32 6400
    %v831 = vrot.slane %v160, 1
    %v832 = vrot.slane %v162, 2
    %v833 = vor.u32 %v831, %v832
    %v834 = vrot.slane %v171, 1
    %v835 = vrot.slane %v167, 2
    %v836 = vor.u32 %v834, %v835
    %v837 = vsel %vm830, %v833, %v836
    %v838 = vrot.slane %v179, 1
    %v839 = vrot.slane %v175, 2
    %v840 = vor.u32 %v838, %v839
    %v841 = vsel %vm830, %v836, %v840
    %v842 = vrot.slane %v187, 1
    %v843 = vrot.slane %v183, 2
    %v844 = vor.u32 %v842, %v843
    %v845 = vsel %vm830, %v840, %v844
    %v846 = vrot.slane %v195, 1
    %v847 = vrot.slane %v191, 2
    %v848 = vor.u32 %v846, %v847
    %v849 = vsel %vm830, %v844, %v848
    %v850 = vrot.slane %v203, 1
    %v851 = vrot.slane %v199, 2
    %v852 = vor.u32 %v850, %v851
    %v853 = vsel %vm830, %v848, %v852
    %vm860 = vsmask.f32 3328
    %v861 = vrot.slane %v214, 4
    %v862 = vrot.slane %v217, 5
    %v863 = vor.u32 %v861, %v862
    %v864 = vrot.slane %v222, 4
    %v865 = vrot.slane %v225, 5
    %v866 = vor.u32 %v864, %v865
    %v867 = vsel %vm860, %v863, %v866
    %v868 = vrot.slane %v231, 4
    %v869 = vrot.slane %v234, 5
    %v870 = vor.u32 %v868, %v869
    %v871 = vsel %vm860, %v866, %v870
    %v872 = vrot.slane %v240, 4
    %v873 = vrot.slane %v243, 5
    %v874 = vor.u32 %v872, %v873
    %v875 = vsel %vm860, %v870, %v874
    %v876 = vrot.slane %v160, 4
    %v877 = vrot.slane %v162, 5
    %v878 = vor.u32 %v876, %v877
    %v879 = vsel %vm860, %v874, %v878
    %vm885 = vmand %vm723, %vm860
    %v886 = vsel %vm885, %v852, %v863
    %887 = vset.pattern.permute.xlu0 1
    %888 = vperm.xlu0 %887, %v258
    %v889 = vpop.permute.xlu0 %888
    %890 = vset.pattern.permute.xlu0 1
    %891 = vperm.xlu0 %890, %v259
    %v892 = vpop.permute.xlu0 %891
    %893 = vset.pattern.permute.xlu0 1
    %894 = vperm.xlu0 %893, %v260
    %v895 = vpop.permute.xlu0 %894
    %896 = vset.pattern.permute.xlu0 1
    %897 = vperm.xlu0 %896, %v261
    %v898 = vpop.permute.xlu0 %897
    %899 = vset.pattern.permute.xlu0 1
    %900 = vperm.xlu0 %899, %v262
    %v901 = vpop.permute.xlu0 %900
    %902 = vset.pattern.permute.xlu0 1
    %903 = vperm.xlu0 %902, %v263
    %v904 = vpop.permute.xlu0 %903
    %905 = vset.pattern.permute.xlu0 1
    %906 = vperm.xlu0 %905, %v264
    %v907 = vpop.permute.xlu0 %906
    %908 = vset.pattern.permute.xlu0 1
    %909 = vperm.xlu0 %908, %v265
    %v910 = vpop.permute.xlu0 %909
    %911 = vset.pattern.permute.xlu0 1
    %912 = vperm.xlu0 %911, %v266
    %v913 = vpop.permute.xlu0 %912
    %914 = vset.pattern.permute.xlu0 1
    %915 = vperm.xlu0 %914, %v267
    %v916 = vpop.permute.xlu0 %915
    %917 = vset.pattern.permute.xlu0 1
    %918 = vperm.xlu0 %917, %v268
    %v919 = vpop.permute.xlu0 %918
    %920 = vset.pattern.permute.xlu0 1
    %921 = vperm.xlu0 %920, %v269
    %v922 = vpop.permute.xlu0 %921
    %923 = vset.pattern.permute.xlu0 1
    %924 = vperm.xlu0 %923, %v270
    %v925 = vpop.permute.xlu0 %924
    %926 = vset.pattern.permute.xlu0 1
    %927 = vperm.xlu0 %926, %v271
    %v928 = vpop.permute.xlu0 %927
    %929 = vset.pattern.permute.xlu0 1
    %930 = vperm.xlu0 %929, %v272
    %v931 = vpop.permute.xlu0 %930
    %932 = vset.pattern.permute.xlu0 1
    %933 = vperm.xlu0 %932, %v273
    %v934 = vpop.permute.xlu0 %933
    %935 = vset.pattern.permute.xlu0 1
    %936 = vperm.xlu0 %935, %v274
    %v937 = vpop.permute.xlu0 %936
    %938 = vset.pattern.permute.xlu0 1
    %939 = vperm.xlu0 %938, %v275
    %v940 = vpop.permute.xlu0 %939
    %941 = vset.pattern.permute.xlu0 1
    %942 = vperm.xlu0 %941, %v276
    %v943 = vpop.permute.xlu0 %942
    %944 = vset.pattern.permute.xlu0 1
    %945 = vperm.xlu0 %944, %v277
    %v946 = vpop.permute.xlu0 %945
    %vm947 = vcmp.eq.s32.totalorder %v889, 1
    %vm948 = vcmp.eq.s32.totalorder %v892, 1
    %vm949 = vcmp.eq.s32.totalorder %v895, 1
    %vm950 = vcmp.eq.s32.totalorder %v898, 1
    %vm951 = vcmp.eq.s32.totalorder %v901, 1
    %vm952 = vcmp.eq.s32.totalorder %v904, 1
    %vm953 = vcmp.eq.s32.totalorder %v907, 1
    %vm954 = vcmp.eq.s32.totalorder %v910, 1
    %vm955 = vcmp.eq.s32.totalorder %v913, 1
    %vm956 = vcmp.eq.s32.totalorder %v916, 1
    %vm957 = vcmp.eq.s32.totalorder %v919, 1
    %vm958 = vcmp.eq.s32.totalorder %v922, 1
    %vm959 = vcmp.eq.s32.totalorder %v925, 1
    %vm960 = vcmp.eq.s32.totalorder %v928, 1
    %vm961 = vcmp.eq.s32.totalorder %v931, 1
    %vm962 = vcmp.eq.s32.totalorder %v934, 1
    %vm963 = vcmp.eq.s32.totalorder %v937, 1
    %vm964 = vcmp.eq.s32.totalorder %v940, 1
    %vm965 = vcmp.eq.s32.totalorder %v943, 1
    %vm966 = vcmp.eq.s32.totalorder %v946, 1
    %vm967 = vmpackc.low %vm947, %vm947
    %vm968 = vmpackc.low %vm948, %vm948
    %vm969 = vmpackc.low %vm949, %vm949
    %vm970 = vmpackc.low %vm950, %vm950
    %vm971 = vmpackc.low %vm951, %vm951
    %vm972 = vmpackc.low %vm952, %vm952
    %vm973 = vmpackc.low %vm953, %vm953
    %vm974 = vmpackc.low %vm954, %vm954
    %vm975 = vmpackc.low %vm955, %vm955
    %vm976 = vmpackc.low %vm956, %vm956
    %vm977 = vmpackc.low %vm957, %vm957
    %vm978 = vmpackc.low %vm958, %vm958
    %vm979 = vmpackc.low %vm959, %vm959
    %vm980 = vmpackc.low %vm960, %vm960
    %vm981 = vmpackc.low %vm961, %vm961
    %vm982 = vmpackc.low %vm962, %vm962
    %vm983 = vmpackc.low %vm963, %vm963
    %vm984 = vmpackc.low %vm964, %vm964
    %vm985 = vmpackc.low %vm965, %vm965
    %vm986 = vmpackc.low %vm966, %vm966
    %v987 = vsel %vm967, 65537, 0
    %v988 = vsel %vm968, 65537, 0
    %v989 = vsel %vm969, 65537, 0
    %v990 = vsel %vm970, 65537, 0
    %v991 = vsel %vm971, 65537, 0
    %v992 = vsel %vm972, 65537, 0
    %v993 = vsel %vm973, 65537, 0
    %v994 = vsel %vm974, 65537, 0
    %v995 = vsel %vm975, 65537, 0
    %v996 = vsel %vm976, 65537, 0
    %v997 = vsel %vm977, 65537, 0
    %v998 = vsel %vm978, 65537, 0
    %v999 = vsel %vm979, 65537, 0
    %v1000 = vsel %vm980, 65537, 0
    %v1001 = vsel %vm981, 65537, 0
    %v1002 = vsel %vm982, 65537, 0
    %v1003 = vsel %vm983, 65537, 0
    %v1004 = vsel %vm984, 65537, 0
    %v1005 = vsel %vm985, 65537, 0
    %v1006 = vsel %vm986, 65537, 0
    %v1007 = vunpack.c.l.b16 %v987
    %v1008 = vunpack.c.l.b16 %v988
    %v1009 = vunpack.c.l.b16 %v989
    %v1010 = vunpack.c.l.b16 %v990
    %v1011 = vunpack.c.l.b16 %v991
    %v1012 = vunpack.c.l.b16 %v992
    %v1013 = vunpack.c.l.b16 %v993
    %v1014 = vunpack.c.l.b16 %v994
    %v1015 = vunpack.c.l.b16 %v995
    %v1016 = vunpack.c.l.b16 %v996
    %v1017 = vunpack.c.l.b16 %v997
    %v1018 = vunpack.c.l.b16 %v998
    %v1019 = vunpack.c.l.b16 %v999
    %v1020 = vunpack.c.l.b16 %v1000
    %v1021 = vunpack.c.l.b16 %v1001
    %v1022 = vunpack.c.l.b16 %v1002
    %v1023 = vunpack.c.l.b16 %v1003
    %v1024 = vunpack.c.l.b16 %v1004
    %v1025 = vunpack.c.l.b16 %v1005
    %v1026 = vunpack.c.l.b16 %v1006
    %v1027 = vpack.c.b16 %v1008, %v1007
    %v1028 = vpack.c.b16 %v1010, %v1009
    %v1029 = vpack.c.b16 %v1012, %v1011
    %v1030 = vpack.c.b16 %v1014, %v1013
    %v1031 = vpack.c.b16 %v1016, %v1015
    %v1032 = vpack.c.b16 %v1018, %v1017
    %v1033 = vpack.c.b16 %v1020, %v1019
    %v1034 = vpack.c.b16 %v1022, %v1021
    %v1035 = vpack.c.b16 %v1024, %v1023
    %v1036 = vpack.c.b16 %v1026, %v1025
    %vm1037 = vcmp.ne.s16.totalorder %v1027, 0
    %vm1038 = vcmp.ne.s16.totalorder %v1028, 0
    %vm1039 = vcmp.ne.s16.totalorder %v1029, 0
    %vm1040 = vcmp.ne.s16.totalorder %v1030, 0
    %vm1041 = vcmp.ne.s16.totalorder %v1031, 0
    %vm1042 = vcmp.ne.s16.totalorder %v1032, 0
    %vm1043 = vcmp.ne.s16.totalorder %v1033, 0
    %vm1044 = vcmp.ne.s16.totalorder %v1034, 0
    %vm1045 = vcmp.ne.s16.totalorder %v1035, 0
    %vm1046 = vcmp.ne.s16.totalorder %v1036, 0
    %v1047 = vsel %vm1037, %v732, %v837
    %v1048 = vsel %vm1038, %v801, %v841
    %v1049 = vsel %vm1039, %v803, %v845
    %v1050 = vsel %vm1040, %v805, %v849
    %v1051 = vsel %vm1041, %v807, %v853
    %v1052 = vsel %vm1042, %v809, %v886
    %v1053 = vsel %vm1043, %v828, %v867
    %v1054 = vsel %vm1044, %v817, %v871
    %v1055 = vsel %vm1045, %v819, %v875
    %v1056 = vsel %vm1046, %v821, %v879
    %v1057 = vrot.slane %v203, 2
    %v1058 = vrot.slane %v199, 3
    %v1059 = vor.u32 %v1057, %v1058
    %v1060 = vsel %vm742, %v776, %v1059
    %vm1063 = vsmask.f32 2304
    %v1064 = vrot.slane %v214, 5
    %v1065 = vrot.slane %v217, 6
    %v1066 = vor.u32 %v1064, %v1065
    %v1067 = vrot.slane %v222, 5
    %v1068 = vrot.slane %v225, 6
    %v1069 = vor.u32 %v1067, %v1068
    %v1070 = vsel %vm1063, %v1066, %v1069
    %v1071 = vrot.slane %v231, 5
    %v1072 = vrot.slane %v234, 6
    %v1073 = vor.u32 %v1071, %v1072
    %v1074 = vsel %vm1063, %v1069, %v1073
    %v1075 = vrot.slane %v240, 5
    %v1076 = vrot.slane %v243, 6
    %v1077 = vor.u32 %v1075, %v1076
    %v1078 = vsel %vm1063, %v1073, %v1077
    %v1079 = vrot.slane %v160, 5
    %v1080 = vrot.slane %v162, 6
    %v1081 = vor.u32 %v1079, %v1080
    %v1082 = vsel %vm1063, %v1077, %v1081
    %v1083 = vrot.slane %v171, 5
    %v1084 = vrot.slane %v167, 6
    %v1085 = vor.u32 %v1083, %v1084
    %v1086 = vsel %vm1063, %v1081, %v1085
    %v1087 = vrot.slane %v179, 5
    %v1088 = vrot.slane %v175, 6
    %v1089 = vor.u32 %v1087, %v1088
    %v1090 = vsel %vm1063, %v1085, %v1089
    %v1091 = vrot.slane %v187, 5
    %v1092 = vrot.slane %v183, 6
    %v1093 = vor.u32 %v1091, %v1092
    %v1094 = vsel %vm1063, %v1089, %v1093
    %v1095 = vrot.slane %v195, 5
    %v1096 = vrot.slane %v191, 6
    %v1097 = vor.u32 %v1095, %v1096
    %v1098 = vsel %vm1063, %v1093, %v1097
    %vm1108 = vcmask 1042432
    %vm1109 = vmand %vm1108, %vm1063
    %v1110 = vsel %vm1109, %v1059, %v1066
    %v1111 = vrot.slane %v102, 3
    %v1112 = vrot.slane %v103, 3
    %v1113 = vsel %vm255, %v1111, %v1112
    %v1114 = vrot.slane %v104, 3
    %v1115 = vsel %vm255, %v1112, %v1114
    %v1116 = vrot.slane %v105, 3
    %v1117 = vsel %vm255, %v1114, %v1116
    %v1118 = vrot.slane %v106, 3
    %v1119 = vsel %vm255, %v1116, %v1118
    %v1120 = vrot.slane %v107, 3
    %v1121 = vsel %vm255, %v1118, %v1120
    %v1122 = vrot.slane %v108, 3
    %v1123 = vsel %vm255, %v1120, %v1122
    %v1124 = vrot.slane %v109, 3
    %v1125 = vsel %vm255, %v1122, %v1124
    %v1126 = vrot.slane %v110, 3
    %v1127 = vsel %vm255, %v1124, %v1126
    %vm1137 = vcmask 1044480
    %v1139 = vsel %vm1137, %v111, %v1111
    %v1141 = vsel %vm1037, %v1060, %v1139
    %v1142 = vsel %vm1038, %v1110, %v1113
    %v1143 = vsel %vm1039, %v1070, %v1115
    %v1144 = vsel %vm1040, %v1074, %v1117
    %v1145 = vsel %vm1041, %v1078, %v1119
    %v1146 = vsel %vm1042, %v1082, %v1121
    %v1147 = vsel %vm1043, %v1086, %v1123
    %v1148 = vsel %vm1044, %v1090, %v1125
    %v1149 = vsel %vm1045, %v1094, %v1127
    %v1150 = vsel %vm1046, %v1098, %v1126
    %v1151 = vsel %vm688, %v1047, %v1141
    %v1152 = vsel %vm689, %v1048, %v1142
    %v1153 = vsel %vm690, %v1049, %v1143
    %v1154 = vsel %vm691, %v1050, %v1144
    %v1155 = vsel %vm692, %v1051, %v1145
    %v1156 = vsel %vm693, %v1052, %v1146
    %v1157 = vsel %vm694, %v1053, %v1147
    %v1158 = vsel %vm695, %v1054, %v1148
    %v1159 = vsel %vm696, %v1055, %v1149
    %v1160 = vsel %vm697, %v1056, %v1150
    %v1161 = vrot.slane %v102, 5
    %v1162 = vrot.slane %v103, 5
    %v1163 = vsel %vm1108, %v1161, %v1162
    %v1164 = vrot.slane %v104, 5
    %v1165 = vsel %vm1108, %v1162, %v1164
    %v1166 = vrot.slane %v105, 5
    %v1167 = vsel %vm1108, %v1164, %v1166
    %v1168 = vrot.slane %v106, 5
    %v1169 = vsel %vm1108, %v1166, %v1168
    %v1170 = vrot.slane %v107, 5
    %v1171 = vsel %vm1108, %v1168, %v1170
    %v1172 = vrot.slane %v108, 5
    %v1173 = vsel %vm1108, %v1170, %v1172
    %v1174 = vrot.slane %v109, 5
    %v1175 = vsel %vm1108, %v1172, %v1174
    %v1176 = vrot.slane %v110, 5
    %v1177 = vsel %vm1108, %v1174, %v1176
    %v1178 = vrot.slane %v111, 5
    %v1179 = vsel %vm1108, %v1176, %v1178
    %v1189 = vsel %vm428, %v1163, %v492
    %v1190 = vsel %vm429, %v1165, %v455
    %v1191 = vsel %vm430, %v1167, %v458
    %v1192 = vsel %vm431, %v1169, %v461
    %v1193 = vsel %vm432, %v1171, %v464
    %v1194 = vsel %vm433, %v1173, %v467
    %v1195 = vsel %vm434, %v1175, %v470
    %v1196 = vsel %vm435, %v1177, %v473
    %v1197 = vsel %vm436, %v1179, %v476
    %v1198 = vsel %vm437, %v102, %v479
    %v1199 = vrot.slane %v217, 1
    %v1200 = vor.u32 %v214, %v1199
    %v1201 = vrot.slane %v225, 1
    %v1202 = vsel %vm158, %v1200, %v1201
    %v1203 = vor.u32 %v222, %v1201
    %v1204 = vrot.slane %v234, 1
    %v1205 = vsel %vm158, %v1203, %v1204
    %v1206 = vor.u32 %v231, %v1204
    %v1207 = vrot.slane %v243, 1
    %v1208 = vsel %vm158, %v1206, %v1207
    %v1209 = vor.u32 %v240, %v1207
    %v1210 = vsel %vm158, %v1209, %v164
    %v1216 = vsel %vm256, %v205, %v219
    %v1217 = vsel %vm1037, %v1139, %v1202
    %v1218 = vsel %vm1038, %v1113, %v1205
    %v1219 = vsel %vm1039, %v1115, %v1208
    %v1220 = vsel %vm1040, %v1117, %v1210
    %v1221 = vsel %vm1041, %v1119, %v170
    %v1222 = vsel %vm1042, %v1121, %v178
    %v1223 = vsel %vm1043, %v1123, %v186
    %v1224 = vsel %vm1044, %v1125, %v194
    %v1225 = vsel %vm1045, %v1127, %v202
    %v1226 = vsel %vm1046, %v1126, %v1216
    %v1227 = vrot.slane %v171, 3
    %v1228 = vrot.slane %v167, 4
    %v1229 = vor.u32 %v1227, %v1228
    %v1230 = vrot.slane %v179, 3
    %v1231 = vrot.slane %v175, 4
    %v1232 = vor.u32 %v1230, %v1231
    %v1233 = vsel %vm212, %v1229, %v1232
    %v1234 = vrot.slane %v187, 3
    %v1235 = vrot.slane %v183, 4
    %v1236 = vor.u32 %v1234, %v1235
    %v1237 = vsel %vm212, %v1232, %v1236
    %v1238 = vrot.slane %v195, 3
    %v1239 = vrot.slane %v191, 4
    %v1240 = vor.u32 %v1238, %v1239
    %v1241 = vsel %vm212, %v1236, %v1240
    %v1242 = vrot.slane %v203, 3
    %v1243 = vrot.slane %v199, 4
    %v1244 = vor.u32 %v1242, %v1243
    %v1245 = vsel %vm212, %v1240, %v1244
    %vm1251 = vsmask.f32 1280
    %v1252 = vrot.slane %v214, 6
    %v1253 = vrot.slane %v217, 7
    %v1254 = vor.u32 %v1252, %v1253
    %v1255 = vrot.slane %v222, 6
    %v1256 = vrot.slane %v225, 7
    %v1257 = vor.u32 %v1255, %v1256
    %v1258 = vsel %vm1251, %v1254, %v1257
    %v1259 = vrot.slane %v231, 6
    %v1260 = vrot.slane %v234, 7
    %v1261 = vor.u32 %v1259, %v1260
    %v1262 = vsel %vm1251, %v1257, %v1261
    %v1263 = vrot.slane %v240, 6
    %v1264 = vrot.slane %v243, 7
    %v1265 = vor.u32 %v1263, %v1264
    %v1266 = vsel %vm1251, %v1261, %v1265
    %v1267 = vrot.slane %v160, 6
    %v1268 = vrot.slane %v162, 7
    %v1269 = vor.u32 %v1267, %v1268
    %v1270 = vsel %vm1251, %v1265, %v1269
    %v1271 = vrot.slane %v171, 6
    %v1272 = vrot.slane %v167, 7
    %v1273 = vor.u32 %v1271, %v1272
    %v1274 = vsel %vm1251, %v1269, %v1273
    %vm1281 = vmand %vm118, %vm1251
    %v1282 = vsel %vm1281, %v1244, %v1254
    %v1283 = vsel %vm428, %v713, %v1233
    %v1284 = vsel %vm429, %v715, %v1237
    %v1285 = vsel %vm430, %v717, %v1241
    %v1286 = vsel %vm431, %v740, %v1245
    %v1287 = vsel %vm432, %v726, %v1282
    %v1288 = vsel %vm433, %v728, %v1258
    %v1289 = vsel %vm434, %v730, %v1262
    %v1290 = vsel %vm435, %v732, %v1266
    %v1291 = vsel %vm436, %v801, %v1270
    %v1292 = vsel %vm437, %v803, %v1274
    %v1293 = vsel %vm428, %v753, %v1163
    %v1294 = vsel %vm429, %v757, %v1165
    %v1295 = vsel %vm430, %v761, %v1167
    %v1296 = vsel %vm431, %v765, %v1169
    %v1297 = vsel %vm432, %v769, %v1171
    %v1298 = vsel %vm433, %v773, %v1173
    %v1299 = vsel %vm434, %v777, %v1175
    %v1300 = vsel %vm435, %v1060, %v1177
    %v1301 = vsel %vm436, %v1110, %v1179
    %v1302 = vsel %vm437, %v1070, %v102
    %1303 = vset.pattern.permute.xlu0 3
    %1304 = vperm.xlu0 %1303, %v258
    %v1305 = vpop.permute.xlu0 %1304
    %1306 = vset.pattern.permute.xlu0 3
    %1307 = vperm.xlu0 %1306, %v259
    %v1308 = vpop.permute.xlu0 %1307
    %1309 = vset.pattern.permute.xlu0 3
    %1310 = vperm.xlu0 %1309, %v260
    %v1311 = vpop.permute.xlu0 %1310
    %1312 = vset.pattern.permute.xlu0 3
    %1313 = vperm.xlu0 %1312, %v261
    %v1314 = vpop.permute.xlu0 %1313
    %1315 = vset.pattern.permute.xlu0 3
    %1316 = vperm.xlu0 %1315, %v262
    %v1317 = vpop.permute.xlu0 %1316
    %1318 = vset.pattern.permute.xlu0 3
    %1319 = vperm.xlu0 %1318, %v263
    %v1320 = vpop.permute.xlu0 %1319
    %1321 = vset.pattern.permute.xlu0 3
    %1322 = vperm.xlu0 %1321, %v264
    %v1323 = vpop.permute.xlu0 %1322
    %1324 = vset.pattern.permute.xlu0 3
    %1325 = vperm.xlu0 %1324, %v265
    %v1326 = vpop.permute.xlu0 %1325
    %1327 = vset.pattern.permute.xlu0 3
    %1328 = vperm.xlu0 %1327, %v266
    %v1329 = vpop.permute.xlu0 %1328
    %1330 = vset.pattern.permute.xlu0 3
    %1331 = vperm.xlu0 %1330, %v267
    %v1332 = vpop.permute.xlu0 %1331
    %1333 = vset.pattern.permute.xlu0 3
    %1334 = vperm.xlu0 %1333, %v268
    %v1335 = vpop.permute.xlu0 %1334
    %1336 = vset.pattern.permute.xlu0 3
    %1337 = vperm.xlu0 %1336, %v269
    %v1338 = vpop.permute.xlu0 %1337
    %1339 = vset.pattern.permute.xlu0 3
    %1340 = vperm.xlu0 %1339, %v270
    %v1341 = vpop.permute.xlu0 %1340
    %1342 = vset.pattern.permute.xlu0 3
    %1343 = vperm.xlu0 %1342, %v271
    %v1344 = vpop.permute.xlu0 %1343
    %1345 = vset.pattern.permute.xlu0 3
    %1346 = vperm.xlu0 %1345, %v272
    %v1347 = vpop.permute.xlu0 %1346
    %1348 = vset.pattern.permute.xlu0 3
    %1349 = vperm.xlu0 %1348, %v273
    %v1350 = vpop.permute.xlu0 %1349
    %1351 = vset.pattern.permute.xlu0 3
    %1352 = vperm.xlu0 %1351, %v274
    %v1353 = vpop.permute.xlu0 %1352
    %1354 = vset.pattern.permute.xlu0 3
    %1355 = vperm.xlu0 %1354, %v275
    %v1356 = vpop.permute.xlu0 %1355
    %1357 = vset.pattern.permute.xlu0 3
    %1358 = vperm.xlu0 %1357, %v276
    %v1359 = vpop.permute.xlu0 %1358
    %1360 = vset.pattern.permute.xlu0 3
    %1361 = vperm.xlu0 %1360, %v277
    %v1362 = vpop.permute.xlu0 %1361
    %vm1363 = vcmp.eq.s32.totalorder %v1305, 1
    %vm1364 = vcmp.eq.s32.totalorder %v1308, 1
    %vm1365 = vcmp.eq.s32.totalorder %v1311, 1
    %vm1366 = vcmp.eq.s32.totalorder %v1314, 1
    %vm1367 = vcmp.eq.s32.totalorder %v1317, 1
    %vm1368 = vcmp.eq.s32.totalorder %v1320, 1
    %vm1369 = vcmp.eq.s32.totalorder %v1323, 1
    %vm1370 = vcmp.eq.s32.totalorder %v1326, 1
    %vm1371 = vcmp.eq.s32.totalorder %v1329, 1
    %vm1372 = vcmp.eq.s32.totalorder %v1332, 1
    %vm1373 = vcmp.eq.s32.totalorder %v1335, 1
    %vm1374 = vcmp.eq.s32.totalorder %v1338, 1
    %vm1375 = vcmp.eq.s32.totalorder %v1341, 1
    %vm1376 = vcmp.eq.s32.totalorder %v1344, 1
    %vm1377 = vcmp.eq.s32.totalorder %v1347, 1
    %vm1378 = vcmp.eq.s32.totalorder %v1350, 1
    %vm1379 = vcmp.eq.s32.totalorder %v1353, 1
    %vm1380 = vcmp.eq.s32.totalorder %v1356, 1
    %vm1381 = vcmp.eq.s32.totalorder %v1359, 1
    %vm1382 = vcmp.eq.s32.totalorder %v1362, 1
    %vm1383 = vmpackc.low %vm1363, %vm1363
    %vm1384 = vmpackc.low %vm1364, %vm1364
    %vm1385 = vmpackc.low %vm1365, %vm1365
    %vm1386 = vmpackc.low %vm1366, %vm1366
    %vm1387 = vmpackc.low %vm1367, %vm1367
    %vm1388 = vmpackc.low %vm1368, %vm1368
    %vm1389 = vmpackc.low %vm1369, %vm1369
    %vm1390 = vmpackc.low %vm1370, %vm1370
    %vm1391 = vmpackc.low %vm1371, %vm1371
    %vm1392 = vmpackc.low %vm1372, %vm1372
    %vm1393 = vmpackc.low %vm1373, %vm1373
    %vm1394 = vmpackc.low %vm1374, %vm1374
    %vm1395 = vmpackc.low %vm1375, %vm1375
    %vm1396 = vmpackc.low %vm1376, %vm1376
    %vm1397 = vmpackc.low %vm1377, %vm1377
    %vm1398 = vmpackc.low %vm1378, %vm1378
    %vm1399 = vmpackc.low %vm1379, %vm1379
    %vm1400 = vmpackc.low %vm1380, %vm1380
    %vm1401 = vmpackc.low %vm1381, %vm1381
    %vm1402 = vmpackc.low %vm1382, %vm1382
    %v1403 = vsel %vm1383, 65537, 0
    %v1404 = vsel %vm1384, 65537, 0
    %v1405 = vsel %vm1385, 65537, 0
    %v1406 = vsel %vm1386, 65537, 0
    %v1407 = vsel %vm1387, 65537, 0
    %v1408 = vsel %vm1388, 65537, 0
    %v1409 = vsel %vm1389, 65537, 0
    %v1410 = vsel %vm1390, 65537, 0
    %v1411 = vsel %vm1391, 65537, 0
    %v1412 = vsel %vm1392, 65537, 0
    %v1413 = vsel %vm1393, 65537, 0
    %v1414 = vsel %vm1394, 65537, 0
    %v1415 = vsel %vm1395, 65537, 0
    %v1416 = vsel %vm1396, 65537, 0
    %v1417 = vsel %vm1397, 65537, 0
    %v1418 = vsel %vm1398, 65537, 0
    %v1419 = vsel %vm1399, 65537, 0
    %v1420 = vsel %vm1400, 65537, 0
    %v1421 = vsel %vm1401, 65537, 0
    %v1422 = vsel %vm1402, 65537, 0
    %v1423 = vunpack.c.l.b16 %v1403
    %v1424 = vunpack.c.l.b16 %v1404
    %v1425 = vunpack.c.l.b16 %v1405
    %v1426 = vunpack.c.l.b16 %v1406
    %v1427 = vunpack.c.l.b16 %v1407
    %v1428 = vunpack.c.l.b16 %v1408
    %v1429 = vunpack.c.l.b16 %v1409
    %v1430 = vunpack.c.l.b16 %v1410
    %v1431 = vunpack.c.l.b16 %v1411
    %v1432 = vunpack.c.l.b16 %v1412
    %v1433 = vunpack.c.l.b16 %v1413
    %v1434 = vunpack.c.l.b16 %v1414
    %v1435 = vunpack.c.l.b16 %v1415
    %v1436 = vunpack.c.l.b16 %v1416
    %v1437 = vunpack.c.l.b16 %v1417
    %v1438 = vunpack.c.l.b16 %v1418
    %v1439 = vunpack.c.l.b16 %v1419
    %v1440 = vunpack.c.l.b16 %v1420
    %v1441 = vunpack.c.l.b16 %v1421
    %v1442 = vunpack.c.l.b16 %v1422
    %v1443 = vpack.c.b16 %v1424, %v1423
    %v1444 = vpack.c.b16 %v1426, %v1425
    %v1445 = vpack.c.b16 %v1428, %v1427
    %v1446 = vpack.c.b16 %v1430, %v1429
    %v1447 = vpack.c.b16 %v1432, %v1431
    %v1448 = vpack.c.b16 %v1434, %v1433
    %v1449 = vpack.c.b16 %v1436, %v1435
    %v1450 = vpack.c.b16 %v1438, %v1437
    %v1451 = vpack.c.b16 %v1440, %v1439
    %v1452 = vpack.c.b16 %v1442, %v1441
    %vm1453 = vcmp.ne.s16.totalorder %v1443, 0
    %vm1454 = vcmp.ne.s16.totalorder %v1444, 0
    %vm1455 = vcmp.ne.s16.totalorder %v1445, 0
    %vm1456 = vcmp.ne.s16.totalorder %v1446, 0
    %vm1457 = vcmp.ne.s16.totalorder %v1447, 0
    %vm1458 = vcmp.ne.s16.totalorder %v1448, 0
    %vm1459 = vcmp.ne.s16.totalorder %v1449, 0
    %vm1460 = vcmp.ne.s16.totalorder %v1450, 0
    %vm1461 = vcmp.ne.s16.totalorder %v1451, 0
    %vm1462 = vcmp.ne.s16.totalorder %v1452, 0
    %v1463 = vsel %vm1453, %v1283, %v1293
    %v1464 = vsel %vm1454, %v1284, %v1294
    %v1465 = vsel %vm1455, %v1285, %v1295
    %v1466 = vsel %vm1456, %v1286, %v1296
    %v1467 = vsel %vm1457, %v1287, %v1297
    %v1468 = vsel %vm1458, %v1288, %v1298
    %v1469 = vsel %vm1459, %v1289, %v1299
    %v1470 = vsel %vm1460, %v1290, %v1300
    %v1471 = vsel %vm1461, %v1291, %v1301
    %v1472 = vsel %vm1462, %v1292, %v1302
    %v1473 = vrot.slane %v106, 7
    %v1474 = vsel %vm490, %v820, %v1473
    %v1475 = vrot.slane %v107, 7
    %v1476 = vsel %vm490, %v1473, %v1475
    %v1479 = vrot.slane %v203, 5
    %v1480 = vrot.slane %v199, 6
    %v1481 = vor.u32 %v1479, %v1480
    %v1482 = vsel %vm1063, %v1097, %v1481
    %vm1486 = vcmask 1047552
    %vm1487 = vmand %vm1486, %vm158
    %v1488 = vsel %vm1487, %v1482, %v1199
    %v1489 = vsel %vm1453, %v803, %v1070
    %v1490 = vsel %vm1454, %v805, %v1074
    %v1491 = vsel %vm1455, %v807, %v1078
    %v1492 = vsel %vm1456, %v809, %v1082
    %v1493 = vsel %vm1457, %v828, %v1086
    %v1494 = vsel %vm1458, %v817, %v1090
    %v1495 = vsel %vm1459, %v819, %v1094
    %v1496 = vsel %vm1460, %v821, %v1098
    %v1497 = vsel %vm1461, %v1474, %v1488
    %v1498 = vsel %vm1462, %v1476, %v1200
    %v1499 = vrot.slane %v108, 7
    %v1500 = vsel %vm490, %v1475, %v1499
    %v1501 = vrot.slane %v109, 7
    %v1502 = vsel %vm490, %v1499, %v1501
    %v1503 = vsel %vm490, %v1501, %v493
    %v1508 = vrot.slane %v171, 4
    %v1509 = vrot.slane %v167, 5
    %v1510 = vor.u32 %v1508, %v1509
    %v1511 = vrot.slane %v179, 4
    %v1512 = vrot.slane %v175, 5
    %v1513 = vor.u32 %v1511, %v1512
    %v1514 = vsel %vm860, %v1510, %v1513
    %v1515 = vrot.slane %v187, 4
    %v1516 = vrot.slane %v183, 5
    %v1517 = vor.u32 %v1515, %v1516
    %v1518 = vsel %vm860, %v1513, %v1517
    %v1519 = vrot.slane %v195, 4
    %v1520 = vrot.slane %v191, 5
    %v1521 = vor.u32 %v1519, %v1520
    %v1522 = vsel %vm860, %v1517, %v1521
    %v1523 = vrot.slane %v199, 5
    %v1524 = vor.u32 %v448, %v1523
    %v1525 = vsel %vm860, %v1521, %v1524
    %v1530 = vsel %vm1037, %v1476, %v1514
    %v1531 = vsel %vm1038, %v1500, %v1518
    %v1532 = vsel %vm1039, %v1502, %v1522
    %v1533 = vsel %vm1040, %v1503, %v1525
    %v1534 = vsel %vm1041, %v526, %v492
    %v1535 = vsel %vm1042, %v499, %v455
    %v1536 = vsel %vm1043, %v501, %v458
    %v1537 = vsel %vm1044, %v503, %v461
    %v1538 = vsel %vm1045, %v505, %v464
    %v1539 = vsel %vm1046, %v504, %v467
    %v1540 = vrot.slane %v102, 6
    %v1541 = vrot.slane %v103, 6
    %v1542 = vsel %vm118, %v1540, %v1541
    %v1543 = vrot.slane %v104, 6
    %v1544 = vsel %vm118, %v1541, %v1543
    %v1545 = vrot.slane %v105, 6
    %v1546 = vsel %vm118, %v1543, %v1545
    %v1547 = vsel %vm118, %v1545, %v119
    %v1553 = vsel %vm1037, %v1202, %v1542
    %v1554 = vsel %vm1038, %v1205, %v1544
    %v1555 = vsel %vm1039, %v1208, %v1546
    %v1556 = vsel %vm1040, %v1210, %v1547
    %v1557 = vsel %vm1041, %v170, %v121
    %v1558 = vsel %vm1042, %v178, %v123
    %v1559 = vsel %vm1043, %v186, %v125
    %v1560 = vsel %vm1044, %v194, %v127
    %v1561 = vsel %vm1045, %v202, %v156
    %v1562 = vsel %vm1046, %v1216, %v139
    %v1563 = vsel %vm1453, %v1530, %v1553
    %v1564 = vsel %vm1454, %v1531, %v1554
    %v1565 = vsel %vm1455, %v1532, %v1555
    %v1566 = vsel %vm1456, %v1533, %v1556
    %v1567 = vsel %vm1457, %v1534, %v1557
    %v1568 = vsel %vm1458, %v1535, %v1558
    %v1569 = vsel %vm1459, %v1536, %v1559
    %v1570 = vsel %vm1460, %v1537, %v1560
    %v1571 = vsel %vm1461, %v1538, %v1561
    %v1572 = vsel %vm1462, %v1539, %v1562
    %1583 = vrot.lane.b32.xlu0 %v790, 30
    %v1584 = vpop.permute.xlu0 %1583
    %1585 = vrot.lane.b32.xlu0 %v791, 30
    %v1586 = vpop.permute.xlu0 %1585
    %1587 = vrot.lane.b32.xlu0 %v792, 30
    %v1588 = vpop.permute.xlu0 %1587
    %1589 = vrot.lane.b32.xlu0 %v793, 30
    %v1590 = vpop.permute.xlu0 %1589
    %1591 = vrot.lane.b32.xlu0 %v794, 30
    %v1592 = vpop.permute.xlu0 %1591
    %1593 = vrot.lane.b32.xlu0 %v795, 30
    %v1594 = vpop.permute.xlu0 %1593
    %1595 = vrot.lane.b32.xlu0 %v796, 30
    %v1596 = vpop.permute.xlu0 %1595
    %1597 = vrot.lane.b32.xlu0 %v797, 30
    %v1598 = vpop.permute.xlu0 %1597
    %1599 = vrot.lane.b32.xlu0 %v798, 30
    %v1600 = vpop.permute.xlu0 %1599
    %1601 = vrot.lane.b32.xlu0 %v799, 30
    %v1602 = vpop.permute.xlu0 %1601
    %1613 = vrot.lane.b32.xlu0 %v1151, 60
    %v1614 = vpop.permute.xlu0 %1613
    %1615 = vrot.lane.b32.xlu0 %v1152, 60
    %v1616 = vpop.permute.xlu0 %1615
    %1617 = vrot.lane.b32.xlu0 %v1153, 60
    %v1618 = vpop.permute.xlu0 %1617
    %1619 = vrot.lane.b32.xlu0 %v1154, 60
    %v1620 = vpop.permute.xlu0 %1619
    %1621 = vrot.lane.b32.xlu0 %v1155, 60
    %v1622 = vpop.permute.xlu0 %1621
    %1623 = vrot.lane.b32.xlu0 %v1156, 60
    %v1624 = vpop.permute.xlu0 %1623
    %1625 = vrot.lane.b32.xlu0 %v1157, 60
    %v1626 = vpop.permute.xlu0 %1625
    %1627 = vrot.lane.b32.xlu0 %v1158, 60
    %v1628 = vpop.permute.xlu0 %1627
    %1629 = vrot.lane.b32.xlu0 %v1159, 60
    %v1630 = vpop.permute.xlu0 %1629
    %1631 = vrot.lane.b32.xlu0 %v1160, 60
    %v1632 = vpop.permute.xlu0 %1631
    %1643 = vrot.lane.b32.xlu0 %v1189, 90
    %v1644 = vpop.permute.xlu0 %1643
    %1645 = vrot.lane.b32.xlu0 %v1190, 90
    %v1646 = vpop.permute.xlu0 %1645
    %1647 = vrot.lane.b32.xlu0 %v1191, 90
    %v1648 = vpop.permute.xlu0 %1647
    %1649 = vrot.lane.b32.xlu0 %v1192, 90
    %v1650 = vpop.permute.xlu0 %1649
    %1651 = vrot.lane.b32.xlu0 %v1193, 90
    %v1652 = vpop.permute.xlu0 %1651
    %1653 = vrot.lane.b32.xlu0 %v1194, 90
    %v1654 = vpop.permute.xlu0 %1653
    %1655 = vrot.lane.b32.xlu0 %v1195, 90
    %v1656 = vpop.permute.xlu0 %1655
    %1657 = vrot.lane.b32.xlu0 %v1196, 90
    %v1658 = vpop.permute.xlu0 %1657
    %1659 = vrot.lane.b32.xlu0 %v1197, 90
    %v1660 = vpop.permute.xlu0 %1659
    %1661 = vrot.lane.b32.xlu0 %v1198, 90
    %v1662 = vpop.permute.xlu0 %1661
    %1663 = vrot.lane.b32.xlu0 %v102, 120
    %v1664 = vpop.permute.xlu0 %1663
    %1665 = vrot.lane.b32.xlu0 %v103, 120
    %v1666 = vpop.permute.xlu0 %1665
    %1667 = vrot.lane.b32.xlu0 %v104, 120
    %v1668 = vpop.permute.xlu0 %1667
    %1669 = vrot.lane.b32.xlu0 %v105, 120
    %v1670 = vpop.permute.xlu0 %1669
    %1671 = vrot.lane.b32.xlu0 %v106, 120
    %v1672 = vpop.permute.xlu0 %1671
    %1673 = vrot.lane.b32.xlu0 %v107, 120
    %v1674 = vpop.permute.xlu0 %1673
    %1675 = vrot.lane.b32.xlu0 %v108, 120
    %v1676 = vpop.permute.xlu0 %1675
    %1677 = vrot.lane.b32.xlu0 %v109, 120
    %v1678 = vpop.permute.xlu0 %1677
    %1679 = vrot.lane.b32.xlu0 %v110, 120
    %v1680 = vpop.permute.xlu0 %1679
    %1681 = vrot.lane.b32.xlu0 %v111, 120
    %v1682 = vpop.permute.xlu0 %1681
    %1693 = vrot.lane.b32.xlu0 %v1217, 22
    %v1694 = vpop.permute.xlu0 %1693
    %1695 = vrot.lane.b32.xlu0 %v1218, 22
    %v1696 = vpop.permute.xlu0 %1695
    %1697 = vrot.lane.b32.xlu0 %v1219, 22
    %v1698 = vpop.permute.xlu0 %1697
    %1699 = vrot.lane.b32.xlu0 %v1220, 22
    %v1700 = vpop.permute.xlu0 %1699
    %1701 = vrot.lane.b32.xlu0 %v1221, 22
    %v1702 = vpop.permute.xlu0 %1701
    %1703 = vrot.lane.b32.xlu0 %v1222, 22
    %v1704 = vpop.permute.xlu0 %1703
    %1705 = vrot.lane.b32.xlu0 %v1223, 22
    %v1706 = vpop.permute.xlu0 %1705
    %1707 = vrot.lane.b32.xlu0 %v1224, 22
    %v1708 = vpop.permute.xlu0 %1707
    %1709 = vrot.lane.b32.xlu0 %v1225, 22
    %v1710 = vpop.permute.xlu0 %1709
    %1711 = vrot.lane.b32.xlu0 %v1226, 22
    %v1712 = vpop.permute.xlu0 %1711
    %1723 = vrot.lane.b32.xlu0 %v1463, 52
    %v1724 = vpop.permute.xlu0 %1723
    %1725 = vrot.lane.b32.xlu0 %v1464, 52
    %v1726 = vpop.permute.xlu0 %1725
    %1727 = vrot.lane.b32.xlu0 %v1465, 52
    %v1728 = vpop.permute.xlu0 %1727
    %1729 = vrot.lane.b32.xlu0 %v1466, 52
    %v1730 = vpop.permute.xlu0 %1729
    %1731 = vrot.lane.b32.xlu0 %v1467, 52
    %v1732 = vpop.permute.xlu0 %1731
    %1733 = vrot.lane.b32.xlu0 %v1468, 52
    %v1734 = vpop.permute.xlu0 %1733
    %1735 = vrot.lane.b32.xlu0 %v1469, 52
    %v1736 = vpop.permute.xlu0 %1735
    %1737 = vrot.lane.b32.xlu0 %v1470, 52
    %v1738 = vpop.permute.xlu0 %1737
    %1739 = vrot.lane.b32.xlu0 %v1471, 52
    %v1740 = vpop.permute.xlu0 %1739
    %1741 = vrot.lane.b32.xlu0 %v1472, 52
    %v1742 = vpop.permute.xlu0 %1741
    %1753 = vrot.lane.b32.xlu0 %v1489, 82
    %v1754 = vpop.permute.xlu0 %1753
    %1755 = vrot.lane.b32.xlu0 %v1490, 82
    %v1756 = vpop.permute.xlu0 %1755
    %1757 = vrot.lane.b32.xlu0 %v1491, 82
    %v1758 = vpop.permute.xlu0 %1757
    %1759 = vrot.lane.b32.xlu0 %v1492, 82
    %v1760 = vpop.permute.xlu0 %1759
    %1761 = vrot.lane.b32.xlu0 %v1493, 82
    %v1762 = vpop.permute.xlu0 %1761
    %1763 = vrot.lane.b32.xlu0 %v1494, 82
    %v1764 = vpop.permute.xlu0 %1763
    %1765 = vrot.lane.b32.xlu0 %v1495, 82
    %v1766 = vpop.permute.xlu0 %1765
    %1767 = vrot.lane.b32.xlu0 %v1496, 82
    %v1768 = vpop.permute.xlu0 %1767
    %1769 = vrot.lane.b32.xlu0 %v1497, 82
    %v1770 = vpop.permute.xlu0 %1769
    %1771 = vrot.lane.b32.xlu0 %v1498, 82
    %v1772 = vpop.permute.xlu0 %1771
    %1783 = vrot.lane.b32.xlu0 %v1563, 112
    %v1784 = vpop.permute.xlu0 %1783
    %1785 = vrot.lane.b32.xlu0 %v1564, 112
    %v1786 = vpop.permute.xlu0 %1785
    %1787 = vrot.lane.b32.xlu0 %v1565, 112
    %v1788 = vpop.permute.xlu0 %1787
    %1789 = vrot.lane.b32.xlu0 %v1566, 112
    %v1790 = vpop.permute.xlu0 %1789
    %1791 = vrot.lane.b32.xlu0 %v1567, 112
    %v1792 = vpop.permute.xlu0 %1791
    %1793 = vrot.lane.b32.xlu0 %v1568, 112
    %v1794 = vpop.permute.xlu0 %1793
    %1795 = vrot.lane.b32.xlu0 %v1569, 112
    %v1796 = vpop.permute.xlu0 %1795
    %1797 = vrot.lane.b32.xlu0 %v1570, 112
    %v1798 = vpop.permute.xlu0 %1797
    %1799 = vrot.lane.b32.xlu0 %v1571, 112
    %v1800 = vpop.permute.xlu0 %1799
    %1801 = vrot.lane.b32.xlu0 %v1572, 112
    %v1802 = vpop.permute.xlu0 %1801
    %vm1803 = vcmask 244736
    %v1806 = vsel %vm1803, %v698, %v1584
    %v1809 = vsel %vm1803, %v699, %v1586
    %v1812 = vsel %vm1803, %v700, %v1588
    %v1815 = vsel %vm1803, %v701, %v1590
    %v1818 = vsel %vm1803, %v702, %v1592
    %v1821 = vsel %vm1803, %v703, %v1594
    %v1824 = vsel %vm1803, %v704, %v1596
    %v1827 = vsel %vm1803, %v705, %v1598
    %v1830 = vsel %vm1803, %v706, %v1600
    %v1833 = vsel %vm1803, %v707, %v1602
    %vm1834 = vcmask 490496
    %v1836 = vsel %vm1834, %v1806, %v1614
    %v1838 = vsel %vm1834, %v1809, %v1616
    %v1840 = vsel %vm1834, %v1812, %v1618
    %v1842 = vsel %vm1834, %v1815, %v1620
    %v1844 = vsel %vm1834, %v1818, %v1622
    %v1846 = vsel %vm1834, %v1821, %v1624
    %v1848 = vsel %vm1834, %v1824, %v1626
    %v1850 = vsel %vm1834, %v1827, %v1628
    %v1852 = vsel %vm1834, %v1830, %v1630
    %v1854 = vsel %vm1834, %v1833, %v1632
    %vm1855 = vcmask 736256
    %v1857 = vsel %vm1855, %v1836, %v1644
    %v1859 = vsel %vm1855, %v1838, %v1646
    %v1861 = vsel %vm1855, %v1840, %v1648
    %v1863 = vsel %vm1855, %v1842, %v1650
    %v1865 = vsel %vm1855, %v1844, %v1652
    %v1867 = vsel %vm1855, %v1846, %v1654
    %v1869 = vsel %vm1855, %v1848, %v1656
    %v1871 = vsel %vm1855, %v1850, %v1658
    %v1873 = vsel %vm1855, %v1852, %v1660
    %v1875 = vsel %vm1855, %v1854, %v1662
    %vm1876 = vcmask 982016
    %v1878 = vsel %vm1876, %v1857, %v1664
    %v1881 = vsel %vm1876, %v1859, %v1666
    %v1884 = vsel %vm1876, %v1861, %v1668
    %v1887 = vsel %vm1876, %v1863, %v1670
    %v1890 = vsel %vm1876, %v1865, %v1672
    %v1893 = vsel %vm1876, %v1867, %v1674
    %v1896 = vsel %vm1876, %v1869, %v1676
    %v1899 = vsel %vm1876, %v1871, %v1678
    %v1902 = vsel %vm1876, %v1873, %v1680
    %v1905 = vsel %vm1876, %v1875, %v1682
    %vm1907 = vcmask 179200
    %v1909 = vsel %vm1907, %v1664, %v1694
    %v1911 = vsel %vm1907, %v1666, %v1696
    %v1913 = vsel %vm1907, %v1668, %v1698
    %v1915 = vsel %vm1907, %v1670, %v1700
    %v1917 = vsel %vm1907, %v1672, %v1702
    %v1919 = vsel %vm1907, %v1674, %v1704
    %v1921 = vsel %vm1907, %v1676, %v1706
    %v1923 = vsel %vm1907, %v1678, %v1708
    %v1925 = vsel %vm1907, %v1680, %v1710
    %v1927 = vsel %vm1907, %v1682, %v1712
    %vm1928 = vcmask 424960
    %v1930 = vsel %vm1928, %v1909, %v1724
    %v1932 = vsel %vm1928, %v1911, %v1726
    %v1934 = vsel %vm1928, %v1913, %v1728
    %v1936 = vsel %vm1928, %v1915, %v1730
    %v1938 = vsel %vm1928, %v1917, %v1732
    %v1940 = vsel %vm1928, %v1919, %v1734
    %v1942 = vsel %vm1928, %v1921, %v1736
    %v1944 = vsel %vm1928, %v1923, %v1738
    %v1946 = vsel %vm1928, %v1925, %v1740
    %v1948 = vsel %vm1928, %v1927, %v1742
    %vm1949 = vcmask 670720
    %v1951 = vsel %vm1949, %v1930, %v1754
    %v1953 = vsel %vm1949, %v1932, %v1756
    %v1955 = vsel %vm1949, %v1934, %v1758
    %v1957 = vsel %vm1949, %v1936, %v1760
    %v1959 = vsel %vm1949, %v1938, %v1762
    %v1961 = vsel %vm1949, %v1940, %v1764
    %v1963 = vsel %vm1949, %v1942, %v1766
    %v1965 = vsel %vm1949, %v1944, %v1768
    %v1967 = vsel %vm1949, %v1946, %v1770
    %v1969 = vsel %vm1949, %v1948, %v1772
    %vm1970 = vcmask 916480
    %v1972 = vsel %vm1970, %v1951, %v1784
    %v1975 = vsel %vm1970, %v1953, %v1786
    %v1978 = vsel %vm1970, %v1955, %v1788
    %v1981 = vsel %vm1970, %v1957, %v1790
    %v1984 = vsel %vm1970, %v1959, %v1792
    %v1987 = vsel %vm1970, %v1961, %v1794
    %v1990 = vsel %vm1970, %v1963, %v1796
    %v1993 = vsel %vm1970, %v1965, %v1798
    %v1996 = vsel %vm1970, %v1967, %v1800
    %v1999 = vsel %vm1970, %v1969, %v1802
    %v2001 = vld [vmem:[%s3] sm:$0xf]
    %v2002 = vld [vmem:[%s3 + $0x4] sm:$0xf]
    %v2003 = vld [vmem:[%s3 + $0x8] sm:$0xf]
    %v2004 = vld [vmem:[%s3 + $0xc] sm:$0xf]
    %v2005 = vld [vmem:[%s3 + $0x10] sm:$0xf]
    %v2006 = vld [vmem:[%s3 + $0x14] sm:$0xf]
    %v2007 = vld [vmem:[%s3 + $0x18] sm:$0xf]
    %v2008 = vld [vmem:[%s3 + $0x1c] sm:$0xf]
    %v2009 = vld [vmem:[%s3 + $0x20] sm:$0xf]
    %v2010 = vld [vmem:[%s3 + $0x24] sm:$0xf]
    %v2011 = vld [vmem:[%s3 + $0x28] sm:$0xf]
    %v2012 = vld [vmem:[%s3 + $0x2c] sm:$0xf]
    %v2013 = vld [vmem:[%s3 + $0x30] sm:$0xf]
    %v2014 = vld [vmem:[%s3 + $0x34] sm:$0xf]
    %v2015 = vld [vmem:[%s3 + $0x38] sm:$0xf]
    %v2016 = vld [vmem:[%s3 + $0x3c] sm:$0xf]
    %v2017 = vld [vmem:[%s3 + $0x40] sm:$0xf]
    %v2018 = vld [vmem:[%s3 + $0x44] sm:$0xf]
    %v2019 = vld [vmem:[%s3 + $0x48] sm:$0xf]
    %v2020 = vld [vmem:[%s3 + $0x4c] sm:$0xf]
    %v2021 = vld [vmem:[%s3 + $0x50] sm:$0xf]
    %v2022 = vld [vmem:[%s3 + $0x54] sm:$0xf]
    %v2023 = vld [vmem:[%s3 + $0x58] sm:$0xf]
    %v2024 = vld [vmem:[%s3 + $0x5c] sm:$0xf]
    %v2025 = vld [vmem:[%s3 + $0x60] sm:$0xf]
    %v2026 = vld [vmem:[%s3 + $0x64] sm:$0xf]
    %v2027 = vld [vmem:[%s3 + $0x68] sm:$0xf]
    %v2028 = vld [vmem:[%s3 + $0x6c] sm:$0xf]
    %v2029 = vld [vmem:[%s3 + $0x70] sm:$0xf]
    %v2030 = vld [vmem:[%s3 + $0x74] sm:$0xf]
    %v2031 = vld [vmem:[%s3 + $0x78] sm:$0xf]
    %v2032 = vld [vmem:[%s3 + $0x7c] sm:$0xf]
    %v2033 = vld [vmem:[%s3 + $0x80] sm:$0xf]
    %v2034 = vld [vmem:[%s3 + $0x84] sm:$0x7]
    %v2069 = vunpack.c.l.b16 %v2001
    %v2070 = vunpack.c.l.b16 %v2002
    %v2071 = vunpack.c.l.b16 %v2003
    %v2072 = vunpack.c.l.b16 %v2004
    %v2073 = vunpack.c.l.b16 %v2005
    %v2074 = vunpack.c.l.b16 %v2006
    %v2075 = vunpack.c.l.b16 %v2007
    %v2076 = vunpack.c.l.b16 %v2008
    %v2077 = vunpack.c.l.b16 %v2009
    %v2078 = vunpack.c.l.b16 %v2010
    %v2079 = vunpack.c.l.b16 %v2011
    %v2080 = vunpack.c.l.b16 %v2012
    %v2081 = vunpack.c.l.b16 %v2013
    %v2082 = vunpack.c.l.b16 %v2014
    %v2083 = vunpack.c.l.b16 %v2015
    %v2084 = vunpack.c.l.b16 %v2016
    %v2085 = vunpack.c.l.b16 %v2017
    %v2086 = vunpack.c.l.b16 %v2018
    %v2087 = vunpack.c.l.b16 %v2019
    %v2088 = vunpack.c.l.b16 %v2020
    %v2089 = vunpack.c.l.b16 %v2021
    %v2090 = vunpack.c.l.b16 %v2022
    %v2091 = vunpack.c.l.b16 %v2023
    %v2092 = vunpack.c.l.b16 %v2024
    %v2093 = vunpack.c.l.b16 %v2025
    %v2094 = vunpack.c.l.b16 %v2026
    %v2095 = vunpack.c.l.b16 %v2027
    %v2096 = vunpack.c.l.b16 %v2028
    %v2097 = vunpack.c.l.b16 %v2029
    %v2098 = vunpack.c.l.b16 %v2030
    %v2099 = vunpack.c.l.b16 %v2031
    %v2100 = vunpack.c.l.b16 %v2032
    %v2101 = vunpack.c.l.b16 %v2033
    %v2102 = vunpack.c.l.b16 %v2034
    %v2103 = vpack.c.b16 %v2070, %v2069
    %v2104 = vpack.c.b16 %v2072, %v2071
    %v2105 = vpack.c.b16 %v2074, %v2073
    %v2106 = vpack.c.b16 %v2076, %v2075
    %v2107 = vpack.c.b16 %v2078, %v2077
    %v2108 = vpack.c.b16 %v2080, %v2079
    %v2109 = vpack.c.b16 %v2082, %v2081
    %v2110 = vpack.c.b16 %v2084, %v2083
    %v2111 = vpack.c.b16 %v2086, %v2085
    %v2112 = vpack.c.b16 %v2088, %v2087
    %v2113 = vpack.c.b16 %v2090, %v2089
    %v2114 = vpack.c.b16 %v2092, %v2091
    %v2115 = vpack.c.b16 %v2094, %v2093
    %v2116 = vpack.c.b16 %v2096, %v2095
    %v2117 = vpack.c.b16 %v2098, %v2097
    %v2118 = vpack.c.b16 %v2100, %v2099
    %v2119 = vpack.c.b16 %v2102, %v2101
    %vm2136 = vcmask 113664
    %v2137 = vsel %vm2136, %v1784, 0
    %v2139 = vsel %vm2136, %v1786, 0
    %v2141 = vsel %vm2136, %v1788, 0
    %v2143 = vsel %vm2136, %v1790, 0
    %v2145 = vsel %vm2136, %v1792, 0
    %v2147 = vsel %vm2136, %v1794, 0
    %v2149 = vsel %vm2136, %v1796, 0
    %v2151 = vsel %vm2136, %v1798, 0
    %v2153 = vsel %vm2136, %v1800, 0
    %v2155 = vsel %vm2136, %v1802, 0
    %v2158 = vsel %vm153, %v2119, 0
    %2160 = vmatprep.subr.bf16.mxu0 0
    %2161 = vmatpush1.bf16.msra.mxu0 %v2103
    %2162 = vmatprep.subr.bf16.mxu0 0
    %2163 = vmatpush1.bf16.msra.mxu0 %v2104
    %2164 = vmatprep.subr.bf16.mxu0 0
    %2165 = vmatpush1.bf16.msra.mxu0 %v2105
    %2166 = vmatprep.subr.bf16.mxu0 0
    %2167 = vmatpush1.bf16.msra.mxu0 %v2106
    %2168 = vmatprep.subr.bf16.mxu0 0
    %2169 = vmatpush1.bf16.msra.mxu0 %v2107
    %2170 = vmatprep.subr.bf16.mxu0 0
    %2171 = vmatpush1.bf16.msra.mxu0 %v2108
    %2172 = vmatprep.subr.bf16.mxu0 0
    %2173 = vmatpush1.bf16.msra.mxu0 %v2109
    %2174 = vmatprep.subr.bf16.mxu0 0
    %2175 = vmatpush1.bf16.msra.mxu0 %v2110
    %2176 = vmatprep.subr.bf16.mxu0 0
    %2177 = vmatpush1.bf16.msra.mxu0 %v2111
    %2178 = vmatprep.subr.bf16.mxu0 0
    %2179 = vmatpush1.bf16.msra.mxu0 %v2112
    %2180 = vmatprep.subr.bf16.mxu0 0
    %2181 = vmatpush1.bf16.msra.mxu0 %v2113
    %2182 = vmatprep.subr.bf16.mxu0 0
    %2183 = vmatpush1.bf16.msra.mxu0 %v2114
    %2184 = vmatprep.subr.bf16.mxu0 0
    %2185 = vmatpush1.bf16.msra.mxu0 %v2115
    %2186 = vmatprep.subr.bf16.mxu0 0
    %2187 = vmatpush1.bf16.msra.mxu0 %v2116
    %2188 = vmatprep.subr.bf16.mxu0 0
    %2189 = vmatpush1.bf16.msra.mxu0 %v2117
    %2190 = vmatprep.subr.bf16.mxu0 0
    %2191 = vmatpush1.bf16.msra.mxu0 %v2118
    %2192 = vmatprep.mubr.bf16.mxu0 %v1972
    %2193 = vmatmul.mubr.bf16.gmra.mrb[0].mxu0 %v1878
    %v2194 = vpop.f32.mrb[0].mxu0
    %v2195 = vadd.f32 0.0, %v2194
    %v2196 = vpop.f32.mrb[0].mxu0
    %v2197 = vpop.f32.mrb[0].mxu0
    %v2198 = vadd.f32 0.0, %v2197
    %v2199 = vpop.f32.mrb[0].mxu0
    %2200 = vmatprep.mubr.bf16.mxu0 %v1975
    %2201 = vmatmul.mubr.bf16.gmra.mrb[0].mxu0 %v1881
    %v2202 = vpop.f32.mrb[0].mxu0
    %v2203 = vadd.f32 0.0, %v2202
    %v2204 = vpop.f32.mrb[0].mxu0
    %v2205 = vpop.f32.mrb[0].mxu0
    %v2206 = vadd.f32 0.0, %v2205
    %v2207 = vpop.f32.mrb[0].mxu0
    %2208 = vmatprep.mubr.bf16.mxu0 %v1978
    %2209 = vmatmul.mubr.bf16.gmra.mrb[0].mxu0 %v1884
    %v2210 = vpop.f32.mrb[0].mxu0
    %v2211 = vadd.f32 0.0, %v2210
    %v2212 = vpop.f32.mrb[0].mxu0
    %v2213 = vpop.f32.mrb[0].mxu0
    %v2214 = vadd.f32 0.0, %v2213
    %v2215 = vpop.f32.mrb[0].mxu0
    %2216 = vmatprep.mubr.bf16.mxu0 %v1981
    %2217 = vmatmul.mubr.bf16.gmra.mrb[0].mxu0 %v1887
    %v2218 = vpop.f32.mrb[0].mxu0
    %v2219 = vadd.f32 0.0, %v2218
    %v2220 = vpop.f32.mrb[0].mxu0
    %v2221 = vpop.f32.mrb[0].mxu0
    %v2222 = vadd.f32 0.0, %v2221
    %v2223 = vpop.f32.mrb[0].mxu0
    %2224 = vmatprep.mubr.bf16.mxu0 %v1984
    %2225 = vmatmul.mubr.bf16.gmra.mrb[0].mxu0 %v1890
    %v2226 = vpop.f32.mrb[0].mxu0
    %v2227 = vadd.f32 0.0, %v2226
    %v2228 = vpop.f32.mrb[0].mxu0
    %v2229 = vpop.f32.mrb[0].mxu0
    %v2230 = vadd.f32 0.0, %v2229
    %v2231 = vpop.f32.mrb[0].mxu0
    %2232 = vmatprep.mubr.bf16.mxu0 %v1987
    %2233 = vmatmul.mubr.bf16.gmra.mrb[0].mxu0 %v1893
    %v2234 = vpop.f32.mrb[0].mxu0
    %v2235 = vadd.f32 0.0, %v2234
    %v2236 = vpop.f32.mrb[0].mxu0
    %v2237 = vpop.f32.mrb[0].mxu0
    %v2238 = vadd.f32 0.0, %v2237
    %v2239 = vpop.f32.mrb[0].mxu0
    %2240 = vmatprep.mubr.bf16.mxu0 %v1990
    %2241 = vmatmul.mubr.bf16.gmra.mrb[0].mxu0 %v1896
    %v2242 = vpop.f32.mrb[0].mxu0
    %v2243 = vadd.f32 0.0, %v2242
    %v2244 = vpop.f32.mrb[0].mxu0
    %v2245 = vpop.f32.mrb[0].mxu0
    %v2246 = vadd.f32 0.0, %v2245
    %v2247 = vpop.f32.mrb[0].mxu0
    %2248 = vmatprep.mubr.bf16.mxu0 %v1993
    %2249 = vmatmul.mubr.bf16.gmra.mrb[0].mxu0 %v1899
    %v2250 = vpop.f32.mrb[0].mxu0
    %v2251 = vadd.f32 0.0, %v2250
    %v2252 = vpop.f32.mrb[0].mxu0
    %v2253 = vpop.f32.mrb[0].mxu0
    %v2254 = vadd.f32 0.0, %v2253
    %v2255 = vpop.f32.mrb[0].mxu0
    %2256 = vmatprep.mubr.bf16.mxu0 %v1996
    %2257 = vmatmul.mubr.bf16.gmra.mrb[0].mxu0 %v1902
    %v2258 = vpop.f32.mrb[0].mxu0
    %v2259 = vadd.f32 0.0, %v2258
    %v2260 = vpop.f32.mrb[0].mxu0
    %v2261 = vpop.f32.mrb[0].mxu0
    %v2262 = vadd.f32 0.0, %v2261
    %v2263 = vpop.f32.mrb[0].mxu0
    %2264 = vmatprep.mubr.bf16.mxu0 %v1999
    %2265 = vmatmul.mubr.bf16.gmra.mrb[0].mxu0 %v1905
    %v2266 = vpop.f32.mrb[0].mxu0
    %v2267 = vadd.f32 0.0, %v2266
    %v2268 = vpop.f32.mrb[0].mxu0
    %v2269 = vpop.f32.mrb[0].mxu0
    %v2270 = vadd.f32 0.0, %v2269
    %v2271 = vpop.f32.mrb[0].mxu0
    %2272 = vdwg.mxu0
    %2273 = vmatprep.subr.bf16.mxu0 0
    %2274 = vmatpush1.bf16.msra.mxu0 %v2158
    %2275 = vmatprep.subr.bf16.mxu0 0
    %2276 = vmatpush1.bf16.msra.mxu0 0
    %2277 = vmatprep.subr.bf16.mxu0 0
    %2278 = vmatpush1.bf16.msra.mxu0 0
    %2279 = vmatprep.subr.bf16.mxu0 0
    %2280 = vmatpush1.bf16.msra.mxu0 0
    %2281 = vmatprep.subr.bf16.mxu0 0
    %2282 = vmatpush1.bf16.msra.mxu0 0
    %2283 = vmatprep.subr.bf16.mxu0 0
    %2284 = vmatpush1.bf16.msra.mxu0 0
    %2285 = vmatprep.subr.bf16.mxu0 0
    %2286 = vmatpush1.bf16.msra.mxu0 0
    %2287 = vmatprep.subr.bf16.mxu0 0
    %2288 = vmatpush1.bf16.msra.mxu0 0
    %2289 = vmatprep.subr.bf16.mxu0 0
    %2290 = vmatpush1.bf16.msra.mxu0 0
    %2291 = vmatprep.subr.bf16.mxu0 0
    %2292 = vmatpush1.bf16.msra.mxu0 0
    %2293 = vmatprep.subr.bf16.mxu0 0
    %2294 = vmatpush1.bf16.msra.mxu0 0
    %2295 = vmatprep.subr.bf16.mxu0 0
    %2296 = vmatpush1.bf16.msra.mxu0 0
    %2297 = vmatprep.subr.bf16.mxu0 0
    %2298 = vmatpush1.bf16.msra.mxu0 0
    %2299 = vmatprep.subr.bf16.mxu0 0
    %2300 = vmatpush1.bf16.msra.mxu0 0
    %2301 = vmatprep.subr.bf16.mxu0 0
    %2302 = vmatpush1.bf16.msra.mxu0 0
    %2303 = vmatprep.subr.bf16.mxu0 0
    %2304 = vmatpush1.bf16.msra.mxu0 0
    %2305 = vmatprep.mubr.bf16.mxu0 0
    %2306 = vmatmul.mubr.bf16.gmra.mrb[0].mxu0 %v2137
    %v2307 = vpop.f32.mrb[0].mxu0
    %v2308 = vadd.f32 %v2195, %v2307
    %v2309 = vpop.f32.mrb[0].mxu0
    %v2310 = vpop.f32.mrb[0].mxu0
    %v2311 = vadd.f32 %v2198, %v2310
    %v2312 = vpop.f32.mrb[0].mxu0
    %2313 = vmatprep.mubr.bf16.mxu0 0
    %2314 = vmatmul.mubr.bf16.gmra.mrb[0].mxu0 %v2139
    %v2315 = vpop.f32.mrb[0].mxu0
    %v2316 = vadd.f32 %v2203, %v2315
    %v2317 = vpop.f32.mrb[0].mxu0
    %v2318 = vpop.f32.mrb[0].mxu0
    %v2319 = vadd.f32 %v2206, %v2318
    %v2320 = vpop.f32.mrb[0].mxu0
    %2321 = vmatprep.mubr.bf16.mxu0 0
    %2322 = vmatmul.mubr.bf16.gmra.mrb[0].mxu0 %v2141
    %v2323 = vpop.f32.mrb[0].mxu0
    %v2324 = vadd.f32 %v2211, %v2323
    %v2325 = vpop.f32.mrb[0].mxu0
    %v2326 = vpop.f32.mrb[0].mxu0
    %v2327 = vadd.f32 %v2214, %v2326
    %v2328 = vpop.f32.mrb[0].mxu0
    %2329 = vmatprep.mubr.bf16.mxu0 0
    %2330 = vmatmul.mubr.bf16.gmra.mrb[0].mxu0 %v2143
    %v2331 = vpop.f32.mrb[0].mxu0
    %v2332 = vadd.f32 %v2219, %v2331
    %v2333 = vpop.f32.mrb[0].mxu0
    %v2334 = vpop.f32.mrb[0].mxu0
    %v2335 = vadd.f32 %v2222, %v2334
    %v2336 = vpop.f32.mrb[0].mxu0
    %2337 = vmatprep.mubr.bf16.mxu0 0
    %2338 = vmatmul.mubr.bf16.gmra.mrb[0].mxu0 %v2145
    %v2339 = vpop.f32.mrb[0].mxu0
    %v2340 = vadd.f32 %v2227, %v2339
    %v2341 = vpop.f32.mrb[0].mxu0
    %v2342 = vpop.f32.mrb[0].mxu0
    %v2343 = vadd.f32 %v2230, %v2342
    %v2344 = vpop.f32.mrb[0].mxu0
    %2345 = vmatprep.mubr.bf16.mxu0 0
    %2346 = vmatmul.mubr.bf16.gmra.mrb[0].mxu0 %v2147
    %v2347 = vpop.f32.mrb[0].mxu0
    %v2348 = vadd.f32 %v2235, %v2347
    %v2349 = vpop.f32.mrb[0].mxu0
    %v2350 = vpop.f32.mrb[0].mxu0
    %v2351 = vadd.f32 %v2238, %v2350
    %v2352 = vpop.f32.mrb[0].mxu0
    %2353 = vmatprep.mubr.bf16.mxu0 0
    %2354 = vmatmul.mubr.bf16.gmra.mrb[0].mxu0 %v2149
    %v2355 = vpop.f32.mrb[0].mxu0
    %v2356 = vadd.f32 %v2243, %v2355
    %v2357 = vpop.f32.mrb[0].mxu0
    %v2358 = vpop.f32.mrb[0].mxu0
    %v2359 = vadd.f32 %v2246, %v2358
    %v2360 = vpop.f32.mrb[0].mxu0
    %2361 = vmatprep.mubr.bf16.mxu0 0
    %2362 = vmatmul.mubr.bf16.gmra.mrb[0].mxu0 %v2151
    %v2363 = vpop.f32.mrb[0].mxu0
    %v2364 = vadd.f32 %v2251, %v2363
    %v2365 = vpop.f32.mrb[0].mxu0
    %v2366 = vpop.f32.mrb[0].mxu0
    %v2367 = vadd.f32 %v2254, %v2366
    %v2368 = vpop.f32.mrb[0].mxu0
    %2369 = vmatprep.mubr.bf16.mxu0 0
    %2370 = vmatmul.mubr.bf16.gmra.mrb[0].mxu0 %v2153
    %v2371 = vpop.f32.mrb[0].mxu0
    %v2372 = vadd.f32 %v2259, %v2371
    %v2373 = vpop.f32.mrb[0].mxu0
    %v2374 = vpop.f32.mrb[0].mxu0
    %v2375 = vadd.f32 %v2262, %v2374
    %v2376 = vpop.f32.mrb[0].mxu0
    %2377 = vmatprep.mubr.bf16.mxu0 0
    %2378 = vmatmul.mubr.bf16.gmra.mrb[0].mxu0 %v2155
    %v2379 = vpop.f32.mrb[0].mxu0
    %v2380 = vadd.f32 %v2267, %v2379
    %v2381 = vpop.f32.mrb[0].mxu0
    %v2382 = vpop.f32.mrb[0].mxu0
    %v2383 = vadd.f32 %v2270, %v2382
    %v2384 = vpop.f32.mrb[0].mxu0
    %2385 = vdwg.mxu0
    %v2386 = vld [vmem:[%s4] sm:$0x1]
    %v2388 = vlaneseq
    %v2389 = vshrl.u32 %v2388, 7
    %v2390 = vsub.s32 0, %v2389
    %v2391 = vrot.slane %v2386, %v2390
    %v2393 = vmul.f32 %v2308, %v2391
    %v2394 = vmul.f32 %v2311, %v2391
    %v2395 = vmul.f32 %v2316, %v2391
    %v2396 = vmul.f32 %v2319, %v2391
    %v2397 = vmul.f32 %v2324, %v2391
    %v2398 = vmul.f32 %v2327, %v2391
    %v2399 = vmul.f32 %v2332, %v2391
    %v2400 = vmul.f32 %v2335, %v2391
    %v2401 = vmul.f32 %v2340, %v2391
    %v2402 = vmul.f32 %v2343, %v2391
    %v2403 = vmul.f32 %v2348, %v2391
    %v2404 = vmul.f32 %v2351, %v2391
    %v2405 = vmul.f32 %v2356, %v2391
    %v2406 = vmul.f32 %v2359, %v2391
    %v2407 = vmul.f32 %v2364, %v2391
    %v2408 = vmul.f32 %v2367, %v2391
    %v2409 = vmul.f32 %v2372, %v2391
    %v2410 = vmul.f32 %v2375, %v2391
    %v2411 = vmul.f32 %v2380, %v2391
    %v2412 = vmul.f32 %v2383, %v2391
    %v2413 = vld [vmem:[%s5] sm:$0x1]
    %v2415 = vlaneseq
    %v2416 = vshrl.u32 %v2415, 7
    %v2417 = vsub.s32 0, %v2416
    %v2418 = vrot.slane %v2413, %v2417
    %v2420 = vadd.f32 %v2393, %v2418
    %v2421 = vadd.f32 %v2394, %v2418
    %v2422 = vadd.f32 %v2395, %v2418
    %v2423 = vadd.f32 %v2396, %v2418
    %v2424 = vadd.f32 %v2397, %v2418
    %v2425 = vadd.f32 %v2398, %v2418
    %v2426 = vadd.f32 %v2399, %v2418
    %v2427 = vadd.f32 %v2400, %v2418
    %v2428 = vadd.f32 %v2401, %v2418
    %v2429 = vadd.f32 %v2402, %v2418
    %v2430 = vadd.f32 %v2403, %v2418
    %v2431 = vadd.f32 %v2404, %v2418
    %v2432 = vadd.f32 %v2405, %v2418
    %v2433 = vadd.f32 %v2406, %v2418
    %v2434 = vadd.f32 %v2407, %v2418
    %v2435 = vadd.f32 %v2408, %v2418
    %v2436 = vadd.f32 %v2409, %v2418
    %v2437 = vadd.f32 %v2410, %v2418
    %v2438 = vadd.f32 %v2411, %v2418
    %v2439 = vadd.f32 %v2412, %v2418
    %v2440 = vmax.f32 %v2420, 0.0
    %v2441 = vmax.f32 %v2421, 0.0
    %v2442 = vmax.f32 %v2422, 0.0
    %v2443 = vmax.f32 %v2423, 0.0
    %v2444 = vmax.f32 %v2424, 0.0
    %v2445 = vmax.f32 %v2425, 0.0
    %v2446 = vmax.f32 %v2426, 0.0
    %v2447 = vmax.f32 %v2427, 0.0
    %v2448 = vmax.f32 %v2428, 0.0
    %v2449 = vmax.f32 %v2429, 0.0
    %v2450 = vmax.f32 %v2430, 0.0
    %v2451 = vmax.f32 %v2431, 0.0
    %v2452 = vmax.f32 %v2432, 0.0
    %v2453 = vmax.f32 %v2433, 0.0
    %v2454 = vmax.f32 %v2434, 0.0
    %v2455 = vmax.f32 %v2435, 0.0
    %v2456 = vmax.f32 %v2436, 0.0
    %v2457 = vmax.f32 %v2437, 0.0
    %v2458 = vmax.f32 %v2438, 0.0
    %v2459 = vmax.f32 %v2439, 0.0
    %vm2460 = vcmask 261120
    %2461 = vst.msk [vmem:[#allocation2] sm:$0xff] %vm2460, %v2440
    %2462 = vst.msk [vmem:[#allocation2 + $0x8] sm:$0xff] %vm2460, %v2441
    %2463 = vst.msk [vmem:[#allocation2 + $0x10] sm:$0xff] %vm2460, %v2442
    %2464 = vst.msk [vmem:[#allocation2 + $0x18] sm:$0xff] %vm2460, %v2443
    %2465 = vst.msk [vmem:[#allocation2 + $0x20] sm:$0xff] %vm2460, %v2444
    %2466 = vst.msk [vmem:[#allocation2 + $0x28] sm:$0xff] %vm2460, %v2445
    %2467 = vst.msk [vmem:[#allocation2 + $0x30] sm:$0xff] %vm2460, %v2446
    %2468 = vst.msk [vmem:[#allocation2 + $0x38] sm:$0xff] %vm2460, %v2447
    %2469 = vst.msk [vmem:[#allocation2 + $0x40] sm:$0xff] %vm2460, %v2448
    %2470 = vst.msk [vmem:[#allocation2 + $0x48] sm:$0xff] %vm2460, %v2449
    %2471 = vst.msk [vmem:[#allocation2 + $0x50] sm:$0xff] %vm2460, %v2450
    %2472 = vst.msk [vmem:[#allocation2 + $0x58] sm:$0xff] %vm2460, %v2451
    %2473 = vst.msk [vmem:[#allocation2 + $0x60] sm:$0xff] %vm2460, %v2452
    %2474 = vst.msk [vmem:[#allocation2 + $0x68] sm:$0xff] %vm2460, %v2453
    %2475 = vst.msk [vmem:[#allocation2 + $0x70] sm:$0xff] %vm2460, %v2454
    %2476 = vst.msk [vmem:[#allocation2 + $0x78] sm:$0xff] %vm2460, %v2455
    %2477 = vst.msk [vmem:[#allocation2 + $0x80] sm:$0xff] %vm2460, %v2456
    %2478 = vst.msk [vmem:[#allocation2 + $0x88] sm:$0xff] %vm2460, %v2457
    %2479 = vst.msk [vmem:[#allocation2 + $0x90] sm:$0xff] %vm2460, %v2458
    %vm2480 = vcmask 254976
    %2481 = vst.msk [vmem:[#allocation2 + $0x98] sm:$0x3] %vm2480, %v2459
    loop: start=0, step=1, limit=12
    $region46: #{tpu_custom_call.1} parent=1 // loop_pre_header
      _
    $region47: #{tpu_custom_call.1} parent=1 // loop_header
      %s2483 = sphi 0, %s2487
      %p2484 = scmp.ge.s32.totalorder %s2483, 12
    $region48: #{tpu_custom_call.1} parent=1 // loop_header_branch
      %2486 = sbr.rel (%p2484) target = $region52
    $region49: #{tpu_custom_call.1} parent=1 // loop_body
      %v2488 = vld [vmem:[#allocation2] sm:$0xff]
      %v2489 = vld [vmem:[#allocation2 + $0x8] sm:$0xff]
      %v2490 = vld [vmem:[#allocation2 + $0x10] sm:$0xff]
      %v2491 = vld [vmem:[#allocation2 + $0x18] sm:$0xff]
      %v2492 = vld [vmem:[#allocation2 + $0x20] sm:$0xff]
      %v2493 = vld [vmem:[#allocation2 + $0x28] sm:$0xff]
      %v2494 = vld [vmem:[#allocation2 + $0x30] sm:$0xff]
      %v2495 = vld [vmem:[#allocation2 + $0x38] sm:$0xff]
      %v2496 = vld [vmem:[#allocation2 + $0x40] sm:$0xff]
      %v2497 = vld [vmem:[#allocation2 + $0x48] sm:$0xff]
      %v2498 = vld [vmem:[#allocation2 + $0x50] sm:$0xff]
      %v2499 = vld [vmem:[#allocation2 + $0x58] sm:$0xff]
      %v2500 = vld [vmem:[#allocation2 + $0x60] sm:$0xff]
      %v2501 = vld [vmem:[#allocation2 + $0x68] sm:$0xff]
      %v2502 = vld [vmem:[#allocation2 + $0x70] sm:$0xff]
      %v2503 = vld [vmem:[#allocation2 + $0x78] sm:$0xff]
      %v2504 = vld [vmem:[#allocation2 + $0x80] sm:$0xff]
      %v2505 = vld [vmem:[#allocation2 + $0x88] sm:$0xff]
      %v2506 = vld [vmem:[#allocation2 + $0x90] sm:$0xff]
      %v2507 = vld [vmem:[#allocation2 + $0x98] sm:$0x3]
      %v2508 = vpack.c.bf16 %v2489, %v2488
      %v2509 = vpack.c.bf16 %v2491, %v2490
      %v2510 = vpack.c.bf16 %v2493, %v2492
      %v2511 = vpack.c.bf16 %v2495, %v2494
      %v2512 = vpack.c.bf16 %v2497, %v2496
      %v2513 = vpack.c.bf16 %v2499, %v2498
      %v2514 = vpack.c.bf16 %v2501, %v2500
      %v2515 = vpack.c.bf16 %v2503, %v2502
      %v2516 = vpack.c.bf16 %v2505, %v2504
      %v2517 = vpack.c.bf16 %v2507, %v2506
      %v2524 = vrot.slane %v2512, 6
      %v2525 = vrot.slane %v2513, 6
      %v2526 = vsel %vm118, %v2524, %v2525
      %v2527 = vrot.slane %v2514, 6
      %v2528 = vsel %vm118, %v2525, %v2527
      %v2529 = vrot.slane %v2515, 6
      %v2530 = vsel %vm118, %v2527, %v2529
      %v2531 = vrot.slane %v2516, 6
      %v2532 = vsel %vm118, %v2529, %v2531
      %v2533 = vrot.slane %v2517, 6
      %v2534 = vsel %vm118, %v2531, %v2533
      %v2543 = vrot.slane %v2508, 1
      %v2544 = vrot.slane %v2509, 1
      %v2545 = vsel %vm138, %v2543, %v2544
      %v2546 = vrot.slane %v2510, 1
      %v2547 = vsel %vm138, %v2544, %v2546
      %v2548 = vrot.slane %v2511, 1
      %v2549 = vsel %vm138, %v2546, %v2548
      %v2550 = vrot.slane %v2512, 1
      %v2551 = vsel %vm138, %v2548, %v2550
      %v2559 = vsel %vm153, %v2534, %v2543
      %v2562 = vshrl.u32 %v2512, 16
      %v2564 = vshll.u32 %v2512, 16
      %v2566 = vrot.slane %v2564, 1
      %v2567 = vor.u32 %v2562, %v2566
      %v2569 = vshll.u32 %v2513, 16
      %v2571 = vrot.slane %v2569, 1
      %v2572 = vsel %vm158, %v2567, %v2571
      %v2573 = vshrl.u32 %v2513, 16
      %v2575 = vor.u32 %v2573, %v2571
      %v2577 = vshll.u32 %v2514, 16
      %v2579 = vrot.slane %v2577, 1
      %v2580 = vsel %vm158, %v2575, %v2579
      %v2581 = vshrl.u32 %v2514, 16
      %v2583 = vor.u32 %v2581, %v2579
      %v2585 = vshll.u32 %v2515, 16
      %v2587 = vrot.slane %v2585, 1
      %v2588 = vsel %vm158, %v2583, %v2587
      %v2589 = vshrl.u32 %v2515, 16
      %v2591 = vor.u32 %v2589, %v2587
      %v2593 = vshll.u32 %v2516, 16
      %v2595 = vrot.slane %v2593, 1
      %v2596 = vsel %vm158, %v2591, %v2595
      %v2597 = vshrl.u32 %v2516, 16
      %v2599 = vor.u32 %v2597, %v2595
      %v2601 = vshll.u32 %v2517, 16
      %v2603 = vrot.slane %v2601, 1
      %v2604 = vsel %vm158, %v2599, %v2603
      %v2605 = vshrl.u32 %v2517, 16
      %v2607 = vor.u32 %v2605, %v2603
      %v2615 = vshrl.u32 %v2508, 16
      %v2617 = vrot.slane %v2615, 3
      %v2618 = vshll.u32 %v2508, 16
      %v2620 = vrot.slane %v2618, 4
      %v2621 = vor.u32 %v2617, %v2620
      %v2623 = vshrl.u32 %v2509, 16
      %v2625 = vrot.slane %v2623, 3
      %v2626 = vshll.u32 %v2509, 16
      %v2628 = vrot.slane %v2626, 4
      %v2629 = vor.u32 %v2625, %v2628
      %v2630 = vsel %vm212, %v2621, %v2629
      %v2632 = vshrl.u32 %v2510, 16
      %v2634 = vrot.slane %v2632, 3
      %v2635 = vshll.u32 %v2510, 16
      %v2637 = vrot.slane %v2635, 4
      %v2638 = vor.u32 %v2634, %v2637
      %v2639 = vsel %vm212, %v2629, %v2638
      %v2641 = vshrl.u32 %v2511, 16
      %v2643 = vrot.slane %v2641, 3
      %v2644 = vshll.u32 %v2511, 16
      %v2646 = vrot.slane %v2644, 4
      %v2647 = vor.u32 %v2643, %v2646
      %v2648 = vsel %vm212, %v2638, %v2647
      %v2649 = vrot.slane %v2564, 4
      %v2650 = vsel %vm212, %v2647, %v2649
      %v2656 = vsel %vm256, %v2607, %v2621
      %v2657 = vsel %vm428, %v2526, %v2572
      %v2658 = vsel %vm429, %v2528, %v2580
      %v2659 = vsel %vm430, %v2530, %v2588
      %v2660 = vsel %vm431, %v2532, %v2596
      %v2661 = vsel %vm432, %v2559, %v2604
      %v2662 = vsel %vm433, %v2545, %v2656
      %v2663 = vsel %vm434, %v2547, %v2630
      %v2664 = vsel %vm435, %v2549, %v2639
      %v2665 = vsel %vm436, %v2551, %v2648
      %v2666 = vsel %vm437, %v2550, %v2650
      %v2667 = vrot.slane %v2605, 4
      %v2669 = vrot.slane %v2615, 7
      %v2670 = vor.u32 %v2669, %v2618
      %v2671 = vrot.slane %v2623, 7
      %v2672 = vor.u32 %v2671, %v2626
      %v2673 = vsel %vm450, %v2669, %v2672
      %v2674 = vrot.slane %v2632, 7
      %v2675 = vor.u32 %v2674, %v2635
      %v2676 = vsel %vm450, %v2671, %v2675
      %v2677 = vrot.slane %v2641, 7
      %v2678 = vor.u32 %v2677, %v2644
      %v2679 = vsel %vm450, %v2674, %v2678
      %v2680 = vrot.slane %v2562, 7
      %v2681 = vor.u32 %v2680, %v2564
      %v2682 = vsel %vm450, %v2677, %v2681
      %v2683 = vrot.slane %v2573, 7
      %v2684 = vor.u32 %v2683, %v2569
      %v2685 = vsel %vm450, %v2680, %v2684
      %v2686 = vrot.slane %v2581, 7
      %v2687 = vor.u32 %v2686, %v2577
      %v2688 = vsel %vm450, %v2683, %v2687
      %v2689 = vrot.slane %v2589, 7
      %v2690 = vor.u32 %v2689, %v2585
      %v2691 = vsel %vm450, %v2686, %v2690
      %v2692 = vrot.slane %v2597, 7
      %v2693 = vor.u32 %v2692, %v2593
      %v2694 = vsel %vm450, %v2689, %v2693
      %v2695 = vrot.slane %v2605, 7
      %v2696 = vor.u32 %v2695, %v2601
      %v2697 = vsel %vm450, %v2692, %v2696
      %v2708 = vsel %vm491, %v2667, %v2670
      %v2709 = vrot.slane %v2516, 7
      %v2710 = vrot.slane %v2517, 7
      %v2711 = vsel %vm490, %v2709, %v2710
      %v2712 = vrot.slane %v2508, 2
      %v2713 = vrot.slane %v2509, 2
      %v2714 = vsel %vm496, %v2712, %v2713
      %v2715 = vrot.slane %v2510, 2
      %v2716 = vsel %vm496, %v2713, %v2715
      %v2717 = vrot.slane %v2511, 2
      %v2718 = vsel %vm496, %v2715, %v2717
      %v2719 = vrot.slane %v2512, 2
      %v2720 = vsel %vm496, %v2717, %v2719
      %v2721 = vrot.slane %v2513, 2
      %v2722 = vsel %vm496, %v2719, %v2721
      %v2723 = vrot.slane %v2514, 2
      %v2724 = vsel %vm496, %v2721, %v2723
      %v2725 = vrot.slane %v2515, 2
      %v2726 = vsel %vm496, %v2723, %v2725
      %v2727 = vrot.slane %v2516, 2
      %v2728 = vsel %vm496, %v2725, %v2727
      %v2740 = vsel %vm523, %v2711, %v2712
      %v2742 = vsel %vm428, %v2708, %v2740
      %v2743 = vsel %vm429, %v2673, %v2714
      %v2744 = vsel %vm430, %v2676, %v2716
      %v2745 = vsel %vm431, %v2679, %v2718
      %v2746 = vsel %vm432, %v2682, %v2720
      %v2747 = vsel %vm433, %v2685, %v2722
      %v2748 = vsel %vm434, %v2688, %v2724
      %v2749 = vsel %vm435, %v2691, %v2726
      %v2750 = vsel %vm436, %v2694, %v2728
      %v2751 = vsel %vm437, %v2697, %v2727
      %v2752 = vsel %vm688, %v2657, %v2742
      %v2753 = vsel %vm689, %v2658, %v2743
      %v2754 = vsel %vm690, %v2659, %v2744
      %v2755 = vsel %vm691, %v2660, %v2745
      %v2756 = vsel %vm692, %v2661, %v2746
      %v2757 = vsel %vm693, %v2662, %v2747
      %v2758 = vsel %vm694, %v2663, %v2748
      %v2759 = vsel %vm695, %v2664, %v2749
      %v2760 = vsel %vm696, %v2665, %v2750
      %v2761 = vsel %vm697, %v2666, %v2751
      %v2762 = vrot.slane %v2513, 1
      %v2763 = vsel %vm138, %v2550, %v2762
      %v2764 = vrot.slane %v2514, 1
      %v2765 = vsel %vm138, %v2762, %v2764
      %v2766 = vrot.slane %v2515, 1
      %v2767 = vsel %vm138, %v2764, %v2766
      %v2768 = vrot.slane %v2516, 1
      %v2769 = vsel %vm138, %v2766, %v2768
      %v2770 = vrot.slane %v2517, 1
      %v2771 = vsel %vm138, %v2768, %v2770
      %v2777 = vrot.slane %v2508, 4
      %v2778 = vrot.slane %v2509, 4
      %v2779 = vsel %vm723, %v2777, %v2778
      %v2780 = vrot.slane %v2510, 4
      %v2781 = vsel %vm723, %v2778, %v2780
      %v2782 = vrot.slane %v2511, 4
      %v2783 = vsel %vm723, %v2780, %v2782
      %v2784 = vrot.slane %v2512, 4
      %v2785 = vsel %vm723, %v2782, %v2784
      %v2792 = vsel %vm737, %v2770, %v2777
      %v2794 = vrot.slane %v2615, 2
      %v2795 = vrot.slane %v2618, 3
      %v2796 = vor.u32 %v2794, %v2795
      %v2797 = vrot.slane %v2623, 2
      %v2798 = vrot.slane %v2626, 3
      %v2799 = vor.u32 %v2797, %v2798
      %v2800 = vsel %vm742, %v2796, %v2799
      %v2801 = vrot.slane %v2632, 2
      %v2802 = vrot.slane %v2635, 3
      %v2803 = vor.u32 %v2801, %v2802
      %v2804 = vsel %vm742, %v2799, %v2803
      %v2805 = vrot.slane %v2641, 2
      %v2806 = vrot.slane %v2644, 3
      %v2807 = vor.u32 %v2805, %v2806
      %v2808 = vsel %vm742, %v2803, %v2807
      %v2809 = vrot.slane %v2562, 2
      %v2810 = vrot.slane %v2564, 3
      %v2811 = vor.u32 %v2809, %v2810
      %v2812 = vsel %vm742, %v2807, %v2811
      %v2813 = vrot.slane %v2573, 2
      %v2814 = vrot.slane %v2569, 3
      %v2815 = vor.u32 %v2813, %v2814
      %v2816 = vsel %vm742, %v2811, %v2815
      %v2817 = vrot.slane %v2581, 2
      %v2818 = vrot.slane %v2577, 3
      %v2819 = vor.u32 %v2817, %v2818
      %v2820 = vsel %vm742, %v2815, %v2819
      %v2821 = vrot.slane %v2589, 2
      %v2822 = vrot.slane %v2585, 3
      %v2823 = vor.u32 %v2821, %v2822
      %v2824 = vsel %vm742, %v2819, %v2823
      %v2825 = vrot.slane %v2597, 2
      %v2826 = vrot.slane %v2593, 3
      %v2827 = vor.u32 %v2825, %v2826
      %v2828 = vsel %vm742, %v2823, %v2827
      %v2839 = vsel %vm788, %v2697, %v2796
      %v2840 = vsel %vm688, %v2763, %v2839
      %v2841 = vsel %vm689, %v2765, %v2800
      %v2842 = vsel %vm690, %v2767, %v2804
      %v2843 = vsel %vm691, %v2769, %v2808
      %v2844 = vsel %vm692, %v2771, %v2812
      %v2845 = vsel %vm693, %v2792, %v2816
      %v2846 = vsel %vm694, %v2779, %v2820
      %v2847 = vsel %vm695, %v2781, %v2824
      %v2848 = vsel %vm696, %v2783, %v2828
      %v2849 = vsel %vm697, %v2785, %v2827
      %v2850 = vrot.slane %v2513, 4
      %v2851 = vsel %vm723, %v2784, %v2850
      %v2852 = vrot.slane %v2514, 4
      %v2853 = vsel %vm723, %v2850, %v2852
      %v2854 = vrot.slane %v2515, 4
      %v2855 = vsel %vm723, %v2852, %v2854
      %v2856 = vrot.slane %v2516, 4
      %v2857 = vsel %vm723, %v2854, %v2856
      %v2858 = vrot.slane %v2517, 4
      %v2859 = vsel %vm723, %v2856, %v2858
      %v2865 = vrot.slane %v2508, 7
      %v2866 = vrot.slane %v2509, 7
      %v2867 = vsel %vm490, %v2865, %v2866
      %v2868 = vrot.slane %v2510, 7
      %v2869 = vsel %vm490, %v2866, %v2868
      %v2870 = vrot.slane %v2511, 7
      %v2871 = vsel %vm490, %v2868, %v2870
      %v2877 = vsel %vm825, %v2858, %v2865
      %v2879 = vrot.slane %v2562, 1
      %v2880 = vrot.slane %v2564, 2
      %v2881 = vor.u32 %v2879, %v2880
      %v2882 = vrot.slane %v2573, 1
      %v2883 = vrot.slane %v2569, 2
      %v2884 = vor.u32 %v2882, %v2883
      %v2885 = vsel %vm830, %v2881, %v2884
      %v2886 = vrot.slane %v2581, 1
      %v2887 = vrot.slane %v2577, 2
      %v2888 = vor.u32 %v2886, %v2887
      %v2889 = vsel %vm830, %v2884, %v2888
      %v2890 = vrot.slane %v2589, 1
      %v2891 = vrot.slane %v2585, 2
      %v2892 = vor.u32 %v2890, %v2891
      %v2893 = vsel %vm830, %v2888, %v2892
      %v2894 = vrot.slane %v2597, 1
      %v2895 = vrot.slane %v2593, 2
      %v2896 = vor.u32 %v2894, %v2895
      %v2897 = vsel %vm830, %v2892, %v2896
      %v2898 = vrot.slane %v2605, 1
      %v2899 = vrot.slane %v2601, 2
      %v2900 = vor.u32 %v2898, %v2899
      %v2901 = vsel %vm830, %v2896, %v2900
      %v2908 = vrot.slane %v2615, 4
      %v2909 = vrot.slane %v2618, 5
      %v2910 = vor.u32 %v2908, %v2909
      %v2911 = vrot.slane %v2623, 4
      %v2912 = vrot.slane %v2626, 5
      %v2913 = vor.u32 %v2911, %v2912
      %v2914 = vsel %vm860, %v2910, %v2913
      %v2915 = vrot.slane %v2632, 4
      %v2916 = vrot.slane %v2635, 5
      %v2917 = vor.u32 %v2915, %v2916
      %v2918 = vsel %vm860, %v2913, %v2917
      %v2919 = vrot.slane %v2641, 4
      %v2920 = vrot.slane %v2644, 5
      %v2921 = vor.u32 %v2919, %v2920
      %v2922 = vsel %vm860, %v2917, %v2921
      %v2923 = vrot.slane %v2562, 4
      %v2924 = vrot.slane %v2564, 5
      %v2925 = vor.u32 %v2923, %v2924
      %v2926 = vsel %vm860, %v2921, %v2925
      %v2932 = vsel %vm885, %v2900, %v2910
      %v2933 = vsel %vm1037, %v2785, %v2885
      %v2934 = vsel %vm1038, %v2851, %v2889
      %v2935 = vsel %vm1039, %v2853, %v2893
      %v2936 = vsel %vm1040, %v2855, %v2897
      %v2937 = vsel %vm1041, %v2857, %v2901
      %v2938 = vsel %vm1042, %v2859, %v2932
      %v2939 = vsel %vm1043, %v2877, %v2914
      %v2940 = vsel %vm1044, %v2867, %v2918
      %v2941 = vsel %vm1045, %v2869, %v2922
      %v2942 = vsel %vm1046, %v2871, %v2926
      %v2943 = vrot.slane %v2605, 2
      %v2944 = vrot.slane %v2601, 3
      %v2945 = vor.u32 %v2943, %v2944
      %v2946 = vsel %vm742, %v2827, %v2945
      %v2949 = vrot.slane %v2615, 5
      %v2950 = vrot.slane %v2618, 6
      %v2951 = vor.u32 %v2949, %v2950
      %v2952 = vrot.slane %v2623, 5
      %v2953 = vrot.slane %v2626, 6
      %v2954 = vor.u32 %v2952, %v2953
      %v2955 = vsel %vm1063, %v2951, %v2954
      %v2956 = vrot.slane %v2632, 5
      %v2957 = vrot.slane %v2635, 6
      %v2958 = vor.u32 %v2956, %v2957
      %v2959 = vsel %vm1063, %v2954, %v2958
      %v2960 = vrot.slane %v2641, 5
      %v2961 = vrot.slane %v2644, 6
      %v2962 = vor.u32 %v2960, %v2961
      %v2963 = vsel %vm1063, %v2958, %v2962
      %v2964 = vrot.slane %v2562, 5
      %v2965 = vrot.slane %v2564, 6
      %v2966 = vor.u32 %v2964, %v2965
      %v2967 = vsel %vm1063, %v2962, %v2966
      %v2968 = vrot.slane %v2573, 5
      %v2969 = vrot.slane %v2569, 6
      %v2970 = vor.u32 %v2968, %v2969
      %v2971 = vsel %vm1063, %v2966, %v2970
      %v2972 = vrot.slane %v2581, 5
      %v2973 = vrot.slane %v2577, 6
      %v2974 = vor.u32 %v2972, %v2973
      %v2975 = vsel %vm1063, %v2970, %v2974
      %v2976 = vrot.slane %v2589, 5
      %v2977 = vrot.slane %v2585, 6
      %v2978 = vor.u32 %v2976, %v2977
      %v2979 = vsel %vm1063, %v2974, %v2978
      %v2980 = vrot.slane %v2597, 5
      %v2981 = vrot.slane %v2593, 6
      %v2982 = vor.u32 %v2980, %v2981
      %v2983 = vsel %vm1063, %v2978, %v2982
      %v2993 = vsel %vm1109, %v2945, %v2951
      %v2994 = vrot.slane %v2508, 3
      %v2995 = vrot.slane %v2509, 3
      %v2996 = vsel %vm255, %v2994, %v2995
      %v2997 = vrot.slane %v2510, 3
      %v2998 = vsel %vm255, %v2995, %v2997
      %v2999 = vrot.slane %v2511, 3
      %v3000 = vsel %vm255, %v2997, %v2999
      %v3001 = vrot.slane %v2512, 3
      %v3002 = vsel %vm255, %v2999, %v3001
      %v3003 = vrot.slane %v2513, 3
      %v3004 = vsel %vm255, %v3001, %v3003
      %v3005 = vrot.slane %v2514, 3
      %v3006 = vsel %vm255, %v3003, %v3005
      %v3007 = vrot.slane %v2515, 3
      %v3008 = vsel %vm255, %v3005, %v3007
      %v3009 = vrot.slane %v2516, 3
      %v3010 = vsel %vm255, %v3007, %v3009
      %v3021 = vsel %vm1137, %v2517, %v2994
      %v3023 = vsel %vm1037, %v2946, %v3021
      %v3024 = vsel %vm1038, %v2993, %v2996
      %v3025 = vsel %vm1039, %v2955, %v2998
      %v3026 = vsel %vm1040, %v2959, %v3000
      %v3027 = vsel %vm1041, %v2963, %v3002
      %v3028 = vsel %vm1042, %v2967, %v3004
      %v3029 = vsel %vm1043, %v2971, %v3006
      %v3030 = vsel %vm1044, %v2975, %v3008
      %v3031 = vsel %vm1045, %v2979, %v3010
      %v3032 = vsel %vm1046, %v2983, %v3009
      %v3033 = vsel %vm688, %v2933, %v3023
      %v3034 = vsel %vm689, %v2934, %v3024
      %v3035 = vsel %vm690, %v2935, %v3025
      %v3036 = vsel %vm691, %v2936, %v3026
      %v3037 = vsel %vm692, %v2937, %v3027
      %v3038 = vsel %vm693, %v2938, %v3028
      %v3039 = vsel %vm694, %v2939, %v3029
      %v3040 = vsel %vm695, %v2940, %v3030
      %v3041 = vsel %vm696, %v2941, %v3031
      %v3042 = vsel %vm697, %v2942, %v3032
      %v3043 = vrot.slane %v2508, 5
      %v3044 = vrot.slane %v2509, 5
      %v3045 = vsel %vm1108, %v3043, %v3044
      %v3046 = vrot.slane %v2510, 5
      %v3047 = vsel %vm1108, %v3044, %v3046
      %v3048 = vrot.slane %v2511, 5
      %v3049 = vsel %vm1108, %v3046, %v3048
      %v3050 = vrot.slane %v2512, 5
      %v3051 = vsel %vm1108, %v3048, %v3050
      %v3052 = vrot.slane %v2513, 5
      %v3053 = vsel %vm1108, %v3050, %v3052
      %v3054 = vrot.slane %v2514, 5
      %v3055 = vsel %vm1108, %v3052, %v3054
      %v3056 = vrot.slane %v2515, 5
      %v3057 = vsel %vm1108, %v3054, %v3056
      %v3058 = vrot.slane %v2516, 5
      %v3059 = vsel %vm1108, %v3056, %v3058
      %v3060 = vrot.slane %v2517, 5
      %v3061 = vsel %vm1108, %v3058, %v3060
      %v3071 = vsel %vm428, %v3045, %v2708
      %v3072 = vsel %vm429, %v3047, %v2673
      %v3073 = vsel %vm430, %v3049, %v2676
      %v3074 = vsel %vm431, %v3051, %v2679
      %v3075 = vsel %vm432, %v3053, %v2682
      %v3076 = vsel %vm433, %v3055, %v2685
      %v3077 = vsel %vm434, %v3057, %v2688
      %v3078 = vsel %vm435, %v3059, %v2691
      %v3079 = vsel %vm436, %v3061, %v2694
      %v3080 = vsel %vm437, %v2508, %v2697
      %v3081 = vrot.slane %v2618, 1
      %v3082 = vor.u32 %v2615, %v3081
      %v3083 = vrot.slane %v2626, 1
      %v3084 = vsel %vm158, %v3082, %v3083
      %v3085 = vor.u32 %v2623, %v3083
      %v3086 = vrot.slane %v2635, 1
      %v3087 = vsel %vm158, %v3085, %v3086
      %v3088 = vor.u32 %v2632, %v3086
      %v3089 = vrot.slane %v2644, 1
      %v3090 = vsel %vm158, %v3088, %v3089
      %v3091 = vor.u32 %v2641, %v3089
      %v3092 = vsel %vm158, %v3091, %v2566
      %v3098 = vsel %vm256, %v2607, %v2620
      %v3099 = vsel %vm1037, %v3021, %v3084
      %v3100 = vsel %vm1038, %v2996, %v3087
      %v3101 = vsel %vm1039, %v2998, %v3090
      %v3102 = vsel %vm1040, %v3000, %v3092
      %v3103 = vsel %vm1041, %v3002, %v2572
      %v3104 = vsel %vm1042, %v3004, %v2580
      %v3105 = vsel %vm1043, %v3006, %v2588
      %v3106 = vsel %vm1044, %v3008, %v2596
      %v3107 = vsel %vm1045, %v3010, %v2604
      %v3108 = vsel %vm1046, %v3009, %v3098
      %v3109 = vrot.slane %v2573, 3
      %v3110 = vrot.slane %v2569, 4
      %v3111 = vor.u32 %v3109, %v3110
      %v3112 = vrot.slane %v2581, 3
      %v3113 = vrot.slane %v2577, 4
      %v3114 = vor.u32 %v3112, %v3113
      %v3115 = vsel %vm212, %v3111, %v3114
      %v3116 = vrot.slane %v2589, 3
      %v3117 = vrot.slane %v2585, 4
      %v3118 = vor.u32 %v3116, %v3117
      %v3119 = vsel %vm212, %v3114, %v3118
      %v3120 = vrot.slane %v2597, 3
      %v3121 = vrot.slane %v2593, 4
      %v3122 = vor.u32 %v3120, %v3121
      %v3123 = vsel %vm212, %v3118, %v3122
      %v3124 = vrot.slane %v2605, 3
      %v3125 = vrot.slane %v2601, 4
      %v3126 = vor.u32 %v3124, %v3125
      %v3127 = vsel %vm212, %v3122, %v3126
      %v3133 = vrot.slane %v2615, 6
      %v3134 = vrot.slane %v2618, 7
      %v3135 = vor.u32 %v3133, %v3134
      %v3136 = vrot.slane %v2623, 6
      %v3137 = vrot.slane %v2626, 7
      %v3138 = vor.u32 %v3136, %v3137
      %v3139 = vsel %vm1251, %v3135, %v3138
      %v3140 = vrot.slane %v2632, 6
      %v3141 = vrot.slane %v2635, 7
      %v3142 = vor.u32 %v3140, %v3141
      %v3143 = vsel %vm1251, %v3138, %v3142
      %v3144 = vrot.slane %v2641, 6
      %v3145 = vrot.slane %v2644, 7
      %v3146 = vor.u32 %v3144, %v3145
      %v3147 = vsel %vm1251, %v3142, %v3146
      %v3148 = vrot.slane %v2562, 6
      %v3149 = vrot.slane %v2564, 7
      %v3150 = vor.u32 %v3148, %v3149
      %v3151 = vsel %vm1251, %v3146, %v3150
      %v3152 = vrot.slane %v2573, 6
      %v3153 = vrot.slane %v2569, 7
      %v3154 = vor.u32 %v3152, %v3153
      %v3155 = vsel %vm1251, %v3150, %v3154
      %v3162 = vsel %vm1281, %v3126, %v3135
      %v3163 = vsel %vm428, %v2767, %v3115
      %v3164 = vsel %vm429, %v2769, %v3119
      %v3165 = vsel %vm430, %v2771, %v3123
      %v3166 = vsel %vm431, %v2792, %v3127
      %v3167 = vsel %vm432, %v2779, %v3162
      %v3168 = vsel %vm433, %v2781, %v3139
      %v3169 = vsel %vm434, %v2783, %v3143
      %v3170 = vsel %vm435, %v2785, %v3147
      %v3171 = vsel %vm436, %v2851, %v3151
      %v3172 = vsel %vm437, %v2853, %v3155
      %v3173 = vsel %vm428, %v2804, %v3045
      %v3174 = vsel %vm429, %v2808, %v3047
      %v3175 = vsel %vm430, %v2812, %v3049
      %v3176 = vsel %vm431, %v2816, %v3051
      %v3177 = vsel %vm432, %v2820, %v3053
      %v3178 = vsel %vm433, %v2824, %v3055
      %v3179 = vsel %vm434, %v2828, %v3057
      %v3180 = vsel %vm435, %v2946, %v3059
      %v3181 = vsel %vm436, %v2993, %v3061
      %v3182 = vsel %vm437, %v2955, %v2508
      %v3183 = vsel %vm1453, %v3163, %v3173
      %v3184 = vsel %vm1454, %v3164, %v3174
      %v3185 = vsel %vm1455, %v3165, %v3175
      %v3186 = vsel %vm1456, %v3166, %v3176
      %v3187 = vsel %vm1457, %v3167, %v3177
      %v3188 = vsel %vm1458, %v3168, %v3178
      %v3189 = vsel %vm1459, %v3169, %v3179
      %v3190 = vsel %vm1460, %v3170, %v3180
      %v3191 = vsel %vm1461, %v3171, %v3181
      %v3192 = vsel %vm1462, %v3172, %v3182
      %v3193 = vrot.slane %v2512, 7
      %v3194 = vsel %vm490, %v2870, %v3193
      %v3195 = vrot.slane %v2513, 7
      %v3196 = vsel %vm490, %v3193, %v3195
      %v3199 = vrot.slane %v2605, 5
      %v3200 = vrot.slane %v2601, 6
      %v3201 = vor.u32 %v3199, %v3200
      %v3202 = vsel %vm1063, %v2982, %v3201
      %v3206 = vsel %vm1487, %v3202, %v3081
      %v3207 = vsel %vm1453, %v2853, %v2955
      %v3208 = vsel %vm1454, %v2855, %v2959
      %v3209 = vsel %vm1455, %v2857, %v2963
      %v3210 = vsel %vm1456, %v2859, %v2967
      %v3211 = vsel %vm1457, %v2877, %v2971
      %v3212 = vsel %vm1458, %v2867, %v2975
      %v3213 = vsel %vm1459, %v2869, %v2979
      %v3214 = vsel %vm1460, %v2871, %v2983
      %v3215 = vsel %vm1461, %v3194, %v3206
      %v3216 = vsel %vm1462, %v3196, %v3082
      %v3217 = vrot.slane %v2514, 7
      %v3218 = vsel %vm490, %v3195, %v3217
      %v3219 = vrot.slane %v2515, 7
      %v3220 = vsel %vm490, %v3217, %v3219
      %v3221 = vsel %vm490, %v3219, %v2709
      %v3226 = vrot.slane %v2573, 4
      %v3227 = vrot.slane %v2569, 5
      %v3228 = vor.u32 %v3226, %v3227
      %v3229 = vrot.slane %v2581, 4
      %v3230 = vrot.slane %v2577, 5
      %v3231 = vor.u32 %v3229, %v3230
      %v3232 = vsel %vm860, %v3228, %v3231
      %v3233 = vrot.slane %v2589, 4
      %v3234 = vrot.slane %v2585, 5
      %v3235 = vor.u32 %v3233, %v3234
      %v3236 = vsel %vm860, %v3231, %v3235
      %v3237 = vrot.slane %v2597, 4
      %v3238 = vrot.slane %v2593, 5
      %v3239 = vor.u32 %v3237, %v3238
      %v3240 = vsel %vm860, %v3235, %v3239
      %v3241 = vrot.slane %v2601, 5
      %v3242 = vor.u32 %v2667, %v3241
      %v3243 = vsel %vm860, %v3239, %v3242
      %v3248 = vsel %vm1037, %v3196, %v3232
      %v3249 = vsel %vm1038, %v3218, %v3236
      %v3250 = vsel %vm1039, %v3220, %v3240
      %v3251 = vsel %vm1040, %v3221, %v3243
      %v3252 = vsel %vm1041, %v2740, %v2708
      %v3253 = vsel %vm1042, %v2714, %v2673
      %v3254 = vsel %vm1043, %v2716, %v2676
      %v3255 = vsel %vm1044, %v2718, %v2679
      %v3256 = vsel %vm1045, %v2720, %v2682
      %v3257 = vsel %vm1046, %v2719, %v2685
      %v3258 = vrot.slane %v2508, 6
      %v3259 = vrot.slane %v2509, 6
      %v3260 = vsel %vm118, %v3258, %v3259
      %v3261 = vrot.slane %v2510, 6
      %v3262 = vsel %vm118, %v3259, %v3261
      %v3263 = vrot.slane %v2511, 6
      %v3264 = vsel %vm118, %v3261, %v3263
      %v3265 = vsel %vm118, %v3263, %v2524
      %v3271 = vsel %vm1037, %v3084, %v3260
      %v3272 = vsel %vm1038, %v3087, %v3262
      %v3273 = vsel %vm1039, %v3090, %v3264
      %v3274 = vsel %vm1040, %v3092, %v3265
      %v3275 = vsel %vm1041, %v2572, %v2526
      %v3276 = vsel %vm1042, %v2580, %v2528
      %v3277 = vsel %vm1043, %v2588, %v2530
      %v3278 = vsel %vm1044, %v2596, %v2532
      %v3279 = vsel %vm1045, %v2604, %v2559
      %v3280 = vsel %vm1046, %v3098, %v2543
      %v3281 = vsel %vm1453, %v3248, %v3271
      %v3282 = vsel %vm1454, %v3249, %v3272
      %v3283 = vsel %vm1455, %v3250, %v3273
      %v3284 = vsel %vm1456, %v3251, %v3274
      %v3285 = vsel %vm1457, %v3252, %v3275
      %v3286 = vsel %vm1458, %v3253, %v3276
      %v3287 = vsel %vm1459, %v3254, %v3277
      %v3288 = vsel %vm1460, %v3255, %v3278
      %v3289 = vsel %vm1461, %v3256, %v3279
      %v3290 = vsel %vm1462, %v3257, %v3280
      %3301 = vrot.lane.b32.xlu0 %v2840, 32
      %v3302 = vpop.permute.xlu0 %3301
      %3303 = vrot.lane.b32.xlu0 %v2841, 32
      %v3304 = vpop.permute.xlu0 %3303
      %3305 = vrot.lane.b32.xlu0 %v2842, 32
      %v3306 = vpop.permute.xlu0 %3305
      %3307 = vrot.lane.b32.xlu0 %v2843, 32
      %v3308 = vpop.permute.xlu0 %3307
      %3309 = vrot.lane.b32.xlu0 %v2844, 32
      %v3310 = vpop.permute.xlu0 %3309
      %3311 = vrot.lane.b32.xlu0 %v2845, 32
      %v3312 = vpop.permute.xlu0 %3311
      %3313 = vrot.lane.b32.xlu0 %v2846, 32
      %v3314 = vpop.permute.xlu0 %3313
      %3315 = vrot.lane.b32.xlu0 %v2847, 32
      %v3316 = vpop.permute.xlu0 %3315
      %3317 = vrot.lane.b32.xlu0 %v2848, 32
      %v3318 = vpop.permute.xlu0 %3317
      %3319 = vrot.lane.b32.xlu0 %v2849, 32
      %v3320 = vpop.permute.xlu0 %3319
      %3331 = vrot.lane.b32.xlu0 %v3033, 64
      %v3332 = vpop.permute.xlu0 %3331
      %3333 = vrot.lane.b32.xlu0 %v3034, 64
      %v3334 = vpop.permute.xlu0 %3333
      %3335 = vrot.lane.b32.xlu0 %v3035, 64
      %v3336 = vpop.permute.xlu0 %3335
      %3337 = vrot.lane.b32.xlu0 %v3036, 64
      %v3338 = vpop.permute.xlu0 %3337
      %3339 = vrot.lane.b32.xlu0 %v3037, 64
      %v3340 = vpop.permute.xlu0 %3339
      %3341 = vrot.lane.b32.xlu0 %v3038, 64
      %v3342 = vpop.permute.xlu0 %3341
      %3343 = vrot.lane.b32.xlu0 %v3039, 64
      %v3344 = vpop.permute.xlu0 %3343
      %3345 = vrot.lane.b32.xlu0 %v3040, 64
      %v3346 = vpop.permute.xlu0 %3345
      %3347 = vrot.lane.b32.xlu0 %v3041, 64
      %v3348 = vpop.permute.xlu0 %3347
      %3349 = vrot.lane.b32.xlu0 %v3042, 64
      %v3350 = vpop.permute.xlu0 %3349
      %3361 = vrot.lane.b32.xlu0 %v3071, 96
      %v3362 = vpop.permute.xlu0 %3361
      %3363 = vrot.lane.b32.xlu0 %v3072, 96
      %v3364 = vpop.permute.xlu0 %3363
      %3365 = vrot.lane.b32.xlu0 %v3073, 96
      %v3366 = vpop.permute.xlu0 %3365
      %3367 = vrot.lane.b32.xlu0 %v3074, 96
      %v3368 = vpop.permute.xlu0 %3367
      %3369 = vrot.lane.b32.xlu0 %v3075, 96
      %v3370 = vpop.permute.xlu0 %3369
      %3371 = vrot.lane.b32.xlu0 %v3076, 96
      %v3372 = vpop.permute.xlu0 %3371
      %3373 = vrot.lane.b32.xlu0 %v3077, 96
      %v3374 = vpop.permute.xlu0 %3373
      %3375 = vrot.lane.b32.xlu0 %v3078, 96
      %v3376 = vpop.permute.xlu0 %3375
      %3377 = vrot.lane.b32.xlu0 %v3079, 96
      %v3378 = vpop.permute.xlu0 %3377
      %3379 = vrot.lane.b32.xlu0 %v3080, 96
      %v3380 = vpop.permute.xlu0 %3379
      %3391 = vrot.lane.b32.xlu0 %v3099, 32
      %v3392 = vpop.permute.xlu0 %3391
      %3393 = vrot.lane.b32.xlu0 %v3100, 32
      %v3394 = vpop.permute.xlu0 %3393
      %3395 = vrot.lane.b32.xlu0 %v3101, 32
      %v3396 = vpop.permute.xlu0 %3395
      %3397 = vrot.lane.b32.xlu0 %v3102, 32
      %v3398 = vpop.permute.xlu0 %3397
      %3399 = vrot.lane.b32.xlu0 %v3103, 32
      %v3400 = vpop.permute.xlu0 %3399
      %3401 = vrot.lane.b32.xlu0 %v3104, 32
      %v3402 = vpop.permute.xlu0 %3401
      %3403 = vrot.lane.b32.xlu0 %v3105, 32
      %v3404 = vpop.permute.xlu0 %3403
      %3405 = vrot.lane.b32.xlu0 %v3106, 32
      %v3406 = vpop.permute.xlu0 %3405
      %3407 = vrot.lane.b32.xlu0 %v3107, 32
      %v3408 = vpop.permute.xlu0 %3407
      %3409 = vrot.lane.b32.xlu0 %v3108, 32
      %v3410 = vpop.permute.xlu0 %3409
      %3421 = vrot.lane.b32.xlu0 %v3183, 64
      %v3422 = vpop.permute.xlu0 %3421
      %3423 = vrot.lane.b32.xlu0 %v3184, 64
      %v3424 = vpop.permute.xlu0 %3423
      %3425 = vrot.lane.b32.xlu0 %v3185, 64
      %v3426 = vpop.permute.xlu0 %3425
      %3427 = vrot.lane.b32.xlu0 %v3186, 64
      %v3428 = vpop.permute.xlu0 %3427
      %3429 = vrot.lane.b32.xlu0 %v3187, 64
      %v3430 = vpop.permute.xlu0 %3429
      %3431 = vrot.lane.b32.xlu0 %v3188, 64
      %v3432 = vpop.permute.xlu0 %3431
      %3433 = vrot.lane.b32.xlu0 %v3189, 64
      %v3434 = vpop.permute.xlu0 %3433
      %3435 = vrot.lane.b32.xlu0 %v3190, 64
      %v3436 = vpop.permute.xlu0 %3435
      %3437 = vrot.lane.b32.xlu0 %v3191, 64
      %v3438 = vpop.permute.xlu0 %3437
      %3439 = vrot.lane.b32.xlu0 %v3192, 64
      %v3440 = vpop.permute.xlu0 %3439
      %3451 = vrot.lane.b32.xlu0 %v3207, 96
      %v3452 = vpop.permute.xlu0 %3451
      %3453 = vrot.lane.b32.xlu0 %v3208, 96
      %v3454 = vpop.permute.xlu0 %3453
      %3455 = vrot.lane.b32.xlu0 %v3209, 96
      %v3456 = vpop.permute.xlu0 %3455
      %3457 = vrot.lane.b32.xlu0 %v3210, 96
      %v3458 = vpop.permute.xlu0 %3457
      %3459 = vrot.lane.b32.xlu0 %v3211, 96
      %v3460 = vpop.permute.xlu0 %3459
      %3461 = vrot.lane.b32.xlu0 %v3212, 96
      %v3462 = vpop.permute.xlu0 %3461
      %3463 = vrot.lane.b32.xlu0 %v3213, 96
      %v3464 = vpop.permute.xlu0 %3463
      %3465 = vrot.lane.b32.xlu0 %v3214, 96
      %v3466 = vpop.permute.xlu0 %3465
      %3467 = vrot.lane.b32.xlu0 %v3215, 96
      %v3468 = vpop.permute.xlu0 %3467
      %3469 = vrot.lane.b32.xlu0 %v3216, 96
      %v3470 = vpop.permute.xlu0 %3469
      %v3473 = vsel %vm2460, %v2752, %v3302
      %v3476 = vsel %vm2460, %v2753, %v3304
      %v3479 = vsel %vm2460, %v2754, %v3306
      %v3482 = vsel %vm2460, %v2755, %v3308
      %v3485 = vsel %vm2460, %v2756, %v3310
      %v3488 = vsel %vm2460, %v2757, %v3312
      %v3491 = vsel %vm2460, %v2758, %v3314
      %v3494 = vsel %vm2460, %v2759, %v3316
      %v3497 = vsel %vm2460, %v2760, %v3318
      %v3500 = vsel %vm2460, %v2761, %v3320
      %vm3501 = vcmask 523264
      %v3503 = vsel %vm3501, %v3473, %v3332
      %v3505 = vsel %vm3501, %v3476, %v3334
      %v3507 = vsel %vm3501, %v3479, %v3336
      %v3509 = vsel %vm3501, %v3482, %v3338
      %v3511 = vsel %vm3501, %v3485, %v3340
      %v3513 = vsel %vm3501, %v3488, %v3342
      %v3515 = vsel %vm3501, %v3491, %v3344
      %v3517 = vsel %vm3501, %v3494, %v3346
      %v3519 = vsel %vm3501, %v3497, %v3348
      %v3521 = vsel %vm3501, %v3500, %v3350
      %vm3522 = vcmask 785408
      %v3524 = vsel %vm3522, %v3503, %v3362
      %v3527 = vsel %vm3522, %v3505, %v3364
      %v3530 = vsel %vm3522, %v3507, %v3366
      %v3533 = vsel %vm3522, %v3509, %v3368
      %v3536 = vsel %vm3522, %v3511, %v3370
      %v3539 = vsel %vm3522, %v3513, %v3372
      %v3542 = vsel %vm3522, %v3515, %v3374
      %v3545 = vsel %vm3522, %v3517, %v3376
      %v3548 = vsel %vm3522, %v3519, %v3378
      %v3551 = vsel %vm3522, %v3521, %v3380
      %v3554 = vsel %vm2460, %v2508, %v3392
      %v3556 = vsel %vm2460, %v2509, %v3394
      %v3558 = vsel %vm2460, %v2510, %v3396
      %v3560 = vsel %vm2460, %v2511, %v3398
      %v3562 = vsel %vm2460, %v2512, %v3400
      %v3564 = vsel %vm2460, %v2513, %v3402
      %v3566 = vsel %vm2460, %v2514, %v3404
      %v3568 = vsel %vm2460, %v2515, %v3406
      %v3570 = vsel %vm2460, %v2516, %v3408
      %v3572 = vsel %vm2460, %v2517, %v3410
      %v3574 = vsel %vm3501, %v3554, %v3422
      %v3576 = vsel %vm3501, %v3556, %v3424
      %v3578 = vsel %vm3501, %v3558, %v3426
      %v3580 = vsel %vm3501, %v3560, %v3428
      %v3582 = vsel %vm3501, %v3562, %v3430
      %v3584 = vsel %vm3501, %v3564, %v3432
      %v3586 = vsel %vm3501, %v3566, %v3434
      %v3588 = vsel %vm3501, %v3568, %v3436
      %v3590 = vsel %vm3501, %v3570, %v3438
      %v3592 = vsel %vm3501, %v3572, %v3440
      %v3594 = vsel %vm3522, %v3574, %v3452
      %v3597 = vsel %vm3522, %v3576, %v3454
      %v3600 = vsel %vm3522, %v3578, %v3456
      %v3603 = vsel %vm3522, %v3580, %v3458
      %v3606 = vsel %vm3522, %v3582, %v3460
      %v3609 = vsel %vm3522, %v3584, %v3462
      %v3612 = vsel %vm3522, %v3586, %v3464
      %v3615 = vsel %vm3522, %v3588, %v3466
      %v3618 = vsel %vm3522, %v3590, %v3468
      %v3621 = vsel %vm3522, %v3592, %v3470
      %s3623 = smul.u32 %s2483, 36
      %s3624 = smul.addr %s3623, 4
      %s3625 = scalar_lea.vmem %s6, %s3624
      %v3626 = vld [vmem:[%s3625] sm:$0xf]
      %v3627 = vld [vmem:[%s3625 + $0x4] sm:$0xf]
      %v3628 = vld [vmem:[%s3625 + $0x8] sm:$0xf]
      %v3629 = vld [vmem:[%s3625 + $0xc] sm:$0xf]
      %v3630 = vld [vmem:[%s3625 + $0x10] sm:$0xf]
      %v3631 = vld [vmem:[%s3625 + $0x14] sm:$0xf]
      %v3632 = vld [vmem:[%s3625 + $0x18] sm:$0xf]
      %v3633 = vld [vmem:[%s3625 + $0x1c] sm:$0xf]
      %v3634 = vld [vmem:[%s3625 + $0x20] sm:$0xf]
      %v3635 = vld [vmem:[%s3625 + $0x24] sm:$0xf]
      %v3636 = vld [vmem:[%s3625 + $0x28] sm:$0xf]
      %v3637 = vld [vmem:[%s3625 + $0x2c] sm:$0xf]
      %v3638 = vld [vmem:[%s3625 + $0x30] sm:$0xf]
      %v3639 = vld [vmem:[%s3625 + $0x34] sm:$0xf]
      %v3640 = vld [vmem:[%s3625 + $0x38] sm:$0xf]
      %v3641 = vld [vmem:[%s3625 + $0x3c] sm:$0xf]
      %v3642 = vld [vmem:[%s3625 + $0x40] sm:$0xf]
      %v3643 = vld [vmem:[%s3625 + $0x44] sm:$0xf]
      %v3644 = vld [vmem:[%s3625 + $0x48] sm:$0xf]
      %v3645 = vld [vmem:[%s3625 + $0x4c] sm:$0xf]
      %v3646 = vld [vmem:[%s3625 + $0x50] sm:$0xf]
      %v3647 = vld [vmem:[%s3625 + $0x54] sm:$0xf]
      %v3648 = vld [vmem:[%s3625 + $0x58] sm:$0xf]
      %v3649 = vld [vmem:[%s3625 + $0x5c] sm:$0xf]
      %v3650 = vld [vmem:[%s3625 + $0x60] sm:$0xf]
      %v3651 = vld [vmem:[%s3625 + $0x64] sm:$0xf]
      %v3652 = vld [vmem:[%s3625 + $0x68] sm:$0xf]
      %v3653 = vld [vmem:[%s3625 + $0x6c] sm:$0xf]
      %v3654 = vld [vmem:[%s3625 + $0x70] sm:$0xf]
      %v3655 = vld [vmem:[%s3625 + $0x74] sm:$0xf]
      %v3656 = vld [vmem:[%s3625 + $0x78] sm:$0xf]
      %v3657 = vld [vmem:[%s3625 + $0x7c] sm:$0xf]
      %v3658 = vld [vmem:[%s3625 + $0x80] sm:$0xf]
      %v3659 = vld [vmem:[%s3625 + $0x84] sm:$0xf]
      %v3660 = vld [vmem:[%s3625 + $0x88] sm:$0xf]
      %v3661 = vld [vmem:[%s3625 + $0x8c] sm:$0xf]
      %v3698 = vunpack.c.l.b16 %v3626
      %v3699 = vunpack.c.l.b16 %v3627
      %v3700 = vunpack.c.l.b16 %v3628
      %v3701 = vunpack.c.l.b16 %v3629
      %v3702 = vunpack.c.l.b16 %v3630
      %v3703 = vunpack.c.l.b16 %v3631
      %v3704 = vunpack.c.l.b16 %v3632
      %v3705 = vunpack.c.l.b16 %v3633
      %v3706 = vunpack.c.l.b16 %v3634
      %v3707 = vunpack.c.l.b16 %v3635
      %v3708 = vunpack.c.l.b16 %v3636
      %v3709 = vunpack.c.l.b16 %v3637
      %v3710 = vunpack.c.l.b16 %v3638
      %v3711 = vunpack.c.l.b16 %v3639
      %v3712 = vunpack.c.l.b16 %v3640
      %v3713 = vunpack.c.l.b16 %v3641
      %v3714 = vunpack.c.l.b16 %v3642
      %v3715 = vunpack.c.l.b16 %v3643
      %v3716 = vunpack.c.l.b16 %v3644
      %v3717 = vunpack.c.l.b16 %v3645
      %v3718 = vunpack.c.l.b16 %v3646
      %v3719 = vunpack.c.l.b16 %v3647
      %v3720 = vunpack.c.l.b16 %v3648
      %v3721 = vunpack.c.l.b16 %v3649
      %v3722 = vunpack.c.l.b16 %v3650
      %v3723 = vunpack.c.l.b16 %v3651
      %v3724 = vunpack.c.l.b16 %v3652
      %v3725 = vunpack.c.l.b16 %v3653
      %v3726 = vunpack.c.l.b16 %v3654
      %v3727 = vunpack.c.l.b16 %v3655
      %v3728 = vunpack.c.l.b16 %v3656
      %v3729 = vunpack.c.l.b16 %v3657
      %v3730 = vunpack.c.l.b16 %v3658
      %v3731 = vunpack.c.l.b16 %v3659
      %v3732 = vunpack.c.l.b16 %v3660
      %v3733 = vunpack.c.l.b16 %v3661
      %v3734 = vpack.c.b16 %v3699, %v3698
      %v3735 = vpack.c.b16 %v3701, %v3700
      %v3736 = vpack.c.b16 %v3703, %v3702
      %v3737 = vpack.c.b16 %v3705, %v3704
      %v3738 = vpack.c.b16 %v3707, %v3706
      %v3739 = vpack.c.b16 %v3709, %v3708
      %v3740 = vpack.c.b16 %v3711, %v3710
      %v3741 = vpack.c.b16 %v3713, %v3712
      %v3742 = vpack.c.b16 %v3715, %v3714
      %v3743 = vpack.c.b16 %v3717, %v3716
      %v3744 = vpack.c.b16 %v3719, %v3718
      %v3745 = vpack.c.b16 %v3721, %v3720
      %v3746 = vpack.c.b16 %v3723, %v3722
      %v3747 = vpack.c.b16 %v3725, %v3724
      %v3748 = vpack.c.b16 %v3727, %v3726
      %v3749 = vpack.c.b16 %v3729, %v3728
      %v3750 = vpack.c.b16 %v3731, %v3730
      %v3751 = vpack.c.b16 %v3733, %v3732
      %v3771 = vsel %vm2460, %v3281, 0
      %v3774 = vsel %vm2460, %v3282, 0
      %v3777 = vsel %vm2460, %v3283, 0
      %v3780 = vsel %vm2460, %v3284, 0
      %v3783 = vsel %vm2460, %v3285, 0
      %v3786 = vsel %vm2460, %v3286, 0
      %v3789 = vsel %vm2460, %v3287, 0
      %v3792 = vsel %vm2460, %v3288, 0
      %v3795 = vsel %vm2460, %v3289, 0
      %v3798 = vsel %vm2460, %v3290, 0
      %3800 = vmatprep.subr.bf16.mxu0 0
      %3801 = vmatpush1.bf16.msra.mxu0 %v3734
      %3802 = vmatprep.subr.bf16.mxu0 0
      %3803 = vmatpush1.bf16.msra.mxu0 %v3735
      %3804 = vmatprep.subr.bf16.mxu0 0
      %3805 = vmatpush1.bf16.msra.mxu0 %v3736
      %3806 = vmatprep.subr.bf16.mxu0 0
      %3807 = vmatpush1.bf16.msra.mxu0 %v3737
      %3808 = vmatprep.subr.bf16.mxu0 0
      %3809 = vmatpush1.bf16.msra.mxu0 %v3738
      %3810 = vmatprep.subr.bf16.mxu0 0
      %3811 = vmatpush1.bf16.msra.mxu0 %v3739
      %3812 = vmatprep.subr.bf16.mxu0 0
      %3813 = vmatpush1.bf16.msra.mxu0 %v3740
      %3814 = vmatprep.subr.bf16.mxu0 0
      %3815 = vmatpush1.bf16.msra.mxu0 %v3741
      %3816 = vmatprep.subr.bf16.mxu0 0
      %3817 = vmatpush1.bf16.msra.mxu0 %v3742
      %3818 = vmatprep.subr.bf16.mxu0 0
      %3819 = vmatpush1.bf16.msra.mxu0 %v3743
      %3820 = vmatprep.subr.bf16.mxu0 0
      %3821 = vmatpush1.bf16.msra.mxu0 %v3744
      %3822 = vmatprep.subr.bf16.mxu0 0
      %3823 = vmatpush1.bf16.msra.mxu0 %v3745
      %3824 = vmatprep.subr.bf16.mxu0 0
      %3825 = vmatpush1.bf16.msra.mxu0 %v3746
      %3826 = vmatprep.subr.bf16.mxu0 0
      %3827 = vmatpush1.bf16.msra.mxu0 %v3747
      %3828 = vmatprep.subr.bf16.mxu0 0
      %3829 = vmatpush1.bf16.msra.mxu0 %v3748
      %3830 = vmatprep.subr.bf16.mxu0 0
      %3831 = vmatpush1.bf16.msra.mxu0 %v3749
      %3832 = vmatprep.mubr.bf16.mxu0 %v3594
      %3833 = vmatmul.mubr.bf16.gmra.mrb[0].mxu0 %v3524
      %v3834 = vpop.f32.mrb[0].mxu0
      %v3835 = vadd.f32 0.0, %v3834
      %v3836 = vpop.f32.mrb[0].mxu0
      %v3837 = vpop.f32.mrb[0].mxu0
      %v3838 = vadd.f32 0.0, %v3837
      %v3839 = vpop.f32.mrb[0].mxu0
      %3840 = vmatprep.mubr.bf16.mxu0 %v3597
      %3841 = vmatmul.mubr.bf16.gmra.mrb[0].mxu0 %v3527
      %v3842 = vpop.f32.mrb[0].mxu0
      %v3843 = vadd.f32 0.0, %v3842
      %v3844 = vpop.f32.mrb[0].mxu0
      %v3845 = vpop.f32.mrb[0].mxu0
      %v3846 = vadd.f32 0.0, %v3845
      %v3847 = vpop.f32.mrb[0].mxu0
      %3848 = vmatprep.mubr.bf16.mxu0 %v3600
      %3849 = vmatmul.mubr.bf16.gmra.mrb[0].mxu0 %v3530
      %v3850 = vpop.f32.mrb[0].mxu0
      %v3851 = vadd.f32 0.0, %v3850
      %v3852 = vpop.f32.mrb[0].mxu0
      %v3853 = vpop.f32.mrb[0].mxu0
      %v3854 = vadd.f32 0.0, %v3853
      %v3855 = vpop.f32.mrb[0].mxu0
      %3856 = vmatprep.mubr.bf16.mxu0 %v3603
      %3857 = vmatmul.mubr.bf16.gmra.mrb[0].mxu0 %v3533
      %v3858 = vpop.f32.mrb[0].mxu0
      %v3859 = vadd.f32 0.0, %v3858
      %v3860 = vpop.f32.mrb[0].mxu0
      %v3861 = vpop.f32.mrb[0].mxu0
      %v3862 = vadd.f32 0.0, %v3861
      %v3863 = vpop.f32.mrb[0].mxu0
      %3864 = vmatprep.mubr.bf16.mxu0 %v3606
      %3865 = vmatmul.mubr.bf16.gmra.mrb[0].mxu0 %v3536
      %v3866 = vpop.f32.mrb[0].mxu0
      %v3867 = vadd.f32 0.0, %v3866
      %v3868 = vpop.f32.mrb[0].mxu0
      %v3869 = vpop.f32.mrb[0].mxu0
      %v3870 = vadd.f32 0.0, %v3869
      %v3871 = vpop.f32.mrb[0].mxu0
      %3872 = vmatprep.mubr.bf16.mxu0 %v3609
      %3873 = vmatmul.mubr.bf16.gmra.mrb[0].mxu0 %v3539
      %v3874 = vpop.f32.mrb[0].mxu0
      %v3875 = vadd.f32 0.0, %v3874
      %v3876 = vpop.f32.mrb[0].mxu0
      %v3877 = vpop.f32.mrb[0].mxu0
      %v3878 = vadd.f32 0.0, %v3877
      %v3879 = vpop.f32.mrb[0].mxu0
      %3880 = vmatprep.mubr.bf16.mxu0 %v3612
      %3881 = vmatmul.mubr.bf16.gmra.mrb[0].mxu0 %v3542
      %v3882 = vpop.f32.mrb[0].mxu0
      %v3883 = vadd.f32 0.0, %v3882
      %v3884 = vpop.f32.mrb[0].mxu0
      %v3885 = vpop.f32.mrb[0].mxu0
      %v3886 = vadd.f32 0.0, %v3885
      %v3887 = vpop.f32.mrb[0].mxu0
      %3888 = vmatprep.mubr.bf16.mxu0 %v3615
      %3889 = vmatmul.mubr.bf16.gmra.mrb[0].mxu0 %v3545
      %v3890 = vpop.f32.mrb[0].mxu0
      %v3891 = vadd.f32 0.0, %v3890
      %v3892 = vpop.f32.mrb[0].mxu0
      %v3893 = vpop.f32.mrb[0].mxu0
      %v3894 = vadd.f32 0.0, %v3893
      %v3895 = vpop.f32.mrb[0].mxu0
      %3896 = vmatprep.mubr.bf16.mxu0 %v3618
      %3897 = vmatmul.mubr.bf16.gmra.mrb[0].mxu0 %v3548
      %v3898 = vpop.f32.mrb[0].mxu0
      %v3899 = vadd.f32 0.0, %v3898
      %v3900 = vpop.f32.mrb[0].mxu0
      %v3901 = vpop.f32.mrb[0].mxu0
      %v3902 = vadd.f32 0.0, %v3901
      %v3903 = vpop.f32.mrb[0].mxu0
      %3904 = vmatprep.mubr.bf16.mxu0 %v3621
      %3905 = vmatmul.mubr.bf16.gmra.mrb[0].mxu0 %v3551
      %v3906 = vpop.f32.mrb[0].mxu0
      %v3907 = vadd.f32 0.0, %v3906
      %v3908 = vpop.f32.mrb[0].mxu0
      %v3909 = vpop.f32.mrb[0].mxu0
      %v3910 = vadd.f32 0.0, %v3909
      %v3911 = vpop.f32.mrb[0].mxu0
      %3912 = vdwg.mxu0
      %3913 = vmatprep.subr.bf16.mxu0 0
      %3914 = vmatpush1.bf16.msra.mxu0 %v3750
      %3915 = vmatprep.subr.bf16.mxu0 0
      %3916 = vmatpush1.bf16.msra.mxu0 %v3751
      %3917 = vmatprep.subr.bf16.mxu0 0
      %3918 = vmatpush1.bf16.msra.mxu0 0
      %3919 = vmatprep.subr.bf16.mxu0 0
      %3920 = vmatpush1.bf16.msra.mxu0 0
      %3921 = vmatprep.subr.bf16.mxu0 0
      %3922 = vmatpush1.bf16.msra.mxu0 0
      %3923 = vmatprep.subr.bf16.mxu0 0
      %3924 = vmatpush1.bf16.msra.mxu0 0
      %3925 = vmatprep.subr.bf16.mxu0 0
      %3926 = vmatpush1.bf16.msra.mxu0 0
      %3927 = vmatprep.subr.bf16.mxu0 0
      %3928 = vmatpush1.bf16.msra.mxu0 0
      %3929 = vmatprep.subr.bf16.mxu0 0
      %3930 = vmatpush1.bf16.msra.mxu0 0
      %3931 = vmatprep.subr.bf16.mxu0 0
      %3932 = vmatpush1.bf16.msra.mxu0 0
      %3933 = vmatprep.subr.bf16.mxu0 0
      %3934 = vmatpush1.bf16.msra.mxu0 0
      %3935 = vmatprep.subr.bf16.mxu0 0
      %3936 = vmatpush1.bf16.msra.mxu0 0
      %3937 = vmatprep.subr.bf16.mxu0 0
      %3938 = vmatpush1.bf16.msra.mxu0 0
      %3939 = vmatprep.subr.bf16.mxu0 0
      %3940 = vmatpush1.bf16.msra.mxu0 0
      %3941 = vmatprep.subr.bf16.mxu0 0
      %3942 = vmatpush1.bf16.msra.mxu0 0
      %3943 = vmatprep.subr.bf16.mxu0 0
      %3944 = vmatpush1.bf16.msra.mxu0 0
      %3945 = vmatprep.mubr.bf16.mxu0 0
      %3946 = vmatmul.mubr.bf16.gmra.mrb[0].mxu0 %v3771
      %v3947 = vpop.f32.mrb[0].mxu0
      %v3948 = vadd.f32 %v3835, %v3947
      %v3949 = vpop.f32.mrb[0].mxu0
      %v3950 = vpop.f32.mrb[0].mxu0
      %v3951 = vadd.f32 %v3838, %v3950
      %v3952 = vpop.f32.mrb[0].mxu0
      %3953 = vmatprep.mubr.bf16.mxu0 0
      %3954 = vmatmul.mubr.bf16.gmra.mrb[0].mxu0 %v3774
      %v3955 = vpop.f32.mrb[0].mxu0
      %v3956 = vadd.f32 %v3843, %v3955
      %v3957 = vpop.f32.mrb[0].mxu0
      %v3958 = vpop.f32.mrb[0].mxu0
      %v3959 = vadd.f32 %v3846, %v3958
      %v3960 = vpop.f32.mrb[0].mxu0
      %3961 = vmatprep.mubr.bf16.mxu0 0
      %3962 = vmatmul.mubr.bf16.gmra.mrb[0].mxu0 %v3777
      %v3963 = vpop.f32.mrb[0].mxu0
      %v3964 = vadd.f32 %v3851, %v3963
      %v3965 = vpop.f32.mrb[0].mxu0
      %v3966 = vpop.f32.mrb[0].mxu0
      %v3967 = vadd.f32 %v3854, %v3966
      %v3968 = vpop.f32.mrb[0].mxu0
      %3969 = vmatprep.mubr.bf16.mxu0 0
      %3970 = vmatmul.mubr.bf16.gmra.mrb[0].mxu0 %v3780
      %v3971 = vpop.f32.mrb[0].mxu0
      %v3972 = vadd.f32 %v3859, %v3971
      %v3973 = vpop.f32.mrb[0].mxu0
      %v3974 = vpop.f32.mrb[0].mxu0
      %v3975 = vadd.f32 %v3862, %v3974
      %v3976 = vpop.f32.mrb[0].mxu0
      %3977 = vmatprep.mubr.bf16.mxu0 0
      %3978 = vmatmul.mubr.bf16.gmra.mrb[0].mxu0 %v3783
      %v3979 = vpop.f32.mrb[0].mxu0
      %v3980 = vadd.f32 %v3867, %v3979
      %v3981 = vpop.f32.mrb[0].mxu0
      %v3982 = vpop.f32.mrb[0].mxu0
      %v3983 = vadd.f32 %v3870, %v3982
      %v3984 = vpop.f32.mrb[0].mxu0
      %3985 = vmatprep.mubr.bf16.mxu0 0
      %3986 = vmatmul.mubr.bf16.gmra.mrb[0].mxu0 %v3786
      %v3987 = vpop.f32.mrb[0].mxu0
      %v3988 = vadd.f32 %v3875, %v3987
      %v3989 = vpop.f32.mrb[0].mxu0
      %v3990 = vpop.f32.mrb[0].mxu0
      %v3991 = vadd.f32 %v3878, %v3990
      %v3992 = vpop.f32.mrb[0].mxu0
      %3993 = vmatprep.mubr.bf16.mxu0 0
      %3994 = vmatmul.mubr.bf16.gmra.mrb[0].mxu0 %v3789
      %v3995 = vpop.f32.mrb[0].mxu0
      %v3996 = vadd.f32 %v3883, %v3995
      %v3997 = vpop.f32.mrb[0].mxu0
      %v3998 = vpop.f32.mrb[0].mxu0
      %v3999 = vadd.f32 %v3886, %v3998
      %v4000 = vpop.f32.mrb[0].mxu0
      %4001 = vmatprep.mubr.bf16.mxu0 0
      %4002 = vmatmul.mubr.bf16.gmra.mrb[0].mxu0 %v3792
      %v4003 = vpop.f32.mrb[0].mxu0
      %v4004 = vadd.f32 %v3891, %v4003
      %v4005 = vpop.f32.mrb[0].mxu0
      %v4006 = vpop.f32.mrb[0].mxu0
      %v4007 = vadd.f32 %v3894, %v4006
      %v4008 = vpop.f32.mrb[0].mxu0
      %4009 = vmatprep.mubr.bf16.mxu0 0
      %4010 = vmatmul.mubr.bf16.gmra.mrb[0].mxu0 %v3795
      %v4011 = vpop.f32.mrb[0].mxu0
      %v4012 = vadd.f32 %v3899, %v4011
      %v4013 = vpop.f32.mrb[0].mxu0
      %v4014 = vpop.f32.mrb[0].mxu0
      %v4015 = vadd.f32 %v3902, %v4014
      %v4016 = vpop.f32.mrb[0].mxu0
      %4017 = vmatprep.mubr.bf16.mxu0 0
      %4018 = vmatmul.mubr.bf16.gmra.mrb[0].mxu0 %v3798
      %v4019 = vpop.f32.mrb[0].mxu0
      %v4020 = vadd.f32 %v3907, %v4019
      %v4021 = vpop.f32.mrb[0].mxu0
      %v4022 = vpop.f32.mrb[0].mxu0
      %v4023 = vadd.f32 %v3910, %v4022
      %v4024 = vpop.f32.mrb[0].mxu0
      %4025 = vdwg.mxu0
      %s4026 = scalar_lea.vmem %s7, %s2483
      %v4027 = vld [vmem:[%s4026] sm:$0x1]
      %v4029 = vlaneseq
      %v4030 = vshrl.u32 %v4029, 7
      %v4031 = vsub.s32 0, %v4030
      %v4032 = vrot.slane %v4027, %v4031
      %v4034 = vmul.f32 %v3948, %v4032
      %v4035 = vmul.f32 %v3951, %v4032
      %v4036 = vmul.f32 %v3956, %v4032
      %v4037 = vmul.f32 %v3959, %v4032
      %v4038 = vmul.f32 %v3964, %v4032
      %v4039 = vmul.f32 %v3967, %v4032
      %v4040 = vmul.f32 %v3972, %v4032
      %v4041 = vmul.f32 %v3975, %v4032
      %v4042 = vmul.f32 %v3980, %v4032
      %v4043 = vmul.f32 %v3983, %v4032
      %v4044 = vmul.f32 %v3988, %v4032
      %v4045 = vmul.f32 %v3991, %v4032
      %v4046 = vmul.f32 %v3996, %v4032
      %v4047 = vmul.f32 %v3999, %v4032
      %v4048 = vmul.f32 %v4004, %v4032
      %v4049 = vmul.f32 %v4007, %v4032
      %v4050 = vmul.f32 %v4012, %v4032
      %v4051 = vmul.f32 %v4015, %v4032
      %v4052 = vmul.f32 %v4020, %v4032
      %v4053 = vmul.f32 %v4023, %v4032
      %s4054 = scalar_lea.vmem %s8, %s2483
      %v4055 = vld [vmem:[%s4054] sm:$0x1]
      %v4057 = vlaneseq
      %v4058 = vshrl.u32 %v4057, 7
      %v4059 = vsub.s32 0, %v4058
      %v4060 = vrot.slane %v4055, %v4059
      %v4062 = vadd.f32 %v4034, %v4060
      %v4063 = vadd.f32 %v4035, %v4060
      %v4064 = vadd.f32 %v4036, %v4060
      %v4065 = vadd.f32 %v4037, %v4060
      %v4066 = vadd.f32 %v4038, %v4060
      %v4067 = vadd.f32 %v4039, %v4060
      %v4068 = vadd.f32 %v4040, %v4060
      %v4069 = vadd.f32 %v4041, %v4060
      %v4070 = vadd.f32 %v4042, %v4060
      %v4071 = vadd.f32 %v4043, %v4060
      %v4072 = vadd.f32 %v4044, %v4060
      %v4073 = vadd.f32 %v4045, %v4060
      %v4074 = vadd.f32 %v4046, %v4060
      %v4075 = vadd.f32 %v4047, %v4060
      %v4076 = vadd.f32 %v4048, %v4060
      %v4077 = vadd.f32 %v4049, %v4060
      %v4078 = vadd.f32 %v4050, %v4060
      %v4079 = vadd.f32 %v4051, %v4060
      %v4080 = vadd.f32 %v4052, %v4060
      %v4081 = vadd.f32 %v4053, %v4060
      %v4082 = vadd.f32 %v2488, %v4062
      %v4083 = vadd.f32 %v2489, %v4063
      %v4084 = vadd.f32 %v2490, %v4064
      %v4085 = vadd.f32 %v2491, %v4065
      %v4086 = vadd.f32 %v2492, %v4066
      %v4087 = vadd.f32 %v2493, %v4067
      %v4088 = vadd.f32 %v2494, %v4068
      %v4089 = vadd.f32 %v2495, %v4069
      %v4090 = vadd.f32 %v2496, %v4070
      %v4091 = vadd.f32 %v2497, %v4071
      %v4092 = vadd.f32 %v2498, %v4072
      %v4093 = vadd.f32 %v2499, %v4073
      %v4094 = vadd.f32 %v2500, %v4074
      %v4095 = vadd.f32 %v2501, %v4075
      %v4096 = vadd.f32 %v2502, %v4076
      %v4097 = vadd.f32 %v2503, %v4077
      %v4098 = vadd.f32 %v2504, %v4078
      %v4099 = vadd.f32 %v2505, %v4079
      %v4100 = vadd.f32 %v2506, %v4080
      %v4101 = vadd.f32 %v2507, %v4081
      %v4102 = vmax.f32 %v4082, 0.0
      %v4103 = vmax.f32 %v4083, 0.0
      %v4104 = vmax.f32 %v4084, 0.0
      %v4105 = vmax.f32 %v4085, 0.0
      %v4106 = vmax.f32 %v4086, 0.0
      %v4107 = vmax.f32 %v4087, 0.0
      %v4108 = vmax.f32 %v4088, 0.0
      %v4109 = vmax.f32 %v4089, 0.0
      %v4110 = vmax.f32 %v4090, 0.0
      %v4111 = vmax.f32 %v4091, 0.0
      %v4112 = vmax.f32 %v4092, 0.0
      %v4113 = vmax.f32 %v4093, 0.0
      %v4114 = vmax.f32 %v4094, 0.0
      %v4115 = vmax.f32 %v4095, 0.0
      %v4116 = vmax.f32 %v4096, 0.0
      %v4117 = vmax.f32 %v4097, 0.0
      %v4118 = vmax.f32 %v4098, 0.0
      %v4119 = vmax.f32 %v4099, 0.0
      %v4120 = vmax.f32 %v4100, 0.0
      %v4121 = vmax.f32 %v4101, 0.0
      %4122 = vst.msk [vmem:[#allocation2] sm:$0xff] %vm2460, %v4102
      %4123 = vst.msk [vmem:[#allocation2 + $0x8] sm:$0xff] %vm2460, %v4103
      %4124 = vst.msk [vmem:[#allocation2 + $0x10] sm:$0xff] %vm2460, %v4104
      %4125 = vst.msk [vmem:[#allocation2 + $0x18] sm:$0xff] %vm2460, %v4105
      %4126 = vst.msk [vmem:[#allocation2 + $0x20] sm:$0xff] %vm2460, %v4106
      %4127 = vst.msk [vmem:[#allocation2 + $0x28] sm:$0xff] %vm2460, %v4107
      %4128 = vst.msk [vmem:[#allocation2 + $0x30] sm:$0xff] %vm2460, %v4108
      %4129 = vst.msk [vmem:[#allocation2 + $0x38] sm:$0xff] %vm2460, %v4109
      %4130 = vst.msk [vmem:[#allocation2 + $0x40] sm:$0xff] %vm2460, %v4110
      %4131 = vst.msk [vmem:[#allocation2 + $0x48] sm:$0xff] %vm2460, %v4111
      %4132 = vst.msk [vmem:[#allocation2 + $0x50] sm:$0xff] %vm2460, %v4112
      %4133 = vst.msk [vmem:[#allocation2 + $0x58] sm:$0xff] %vm2460, %v4113
      %4134 = vst.msk [vmem:[#allocation2 + $0x60] sm:$0xff] %vm2460, %v4114
      %4135 = vst.msk [vmem:[#allocation2 + $0x68] sm:$0xff] %vm2460, %v4115
      %4136 = vst.msk [vmem:[#allocation2 + $0x70] sm:$0xff] %vm2460, %v4116
      %4137 = vst.msk [vmem:[#allocation2 + $0x78] sm:$0xff] %vm2460, %v4117
      %4138 = vst.msk [vmem:[#allocation2 + $0x80] sm:$0xff] %vm2460, %v4118
      %4139 = vst.msk [vmem:[#allocation2 + $0x88] sm:$0xff] %vm2460, %v4119
      %4140 = vst.msk [vmem:[#allocation2 + $0x90] sm:$0xff] %vm2460, %v4120
      %4141 = vst.msk [vmem:[#allocation2 + $0x98] sm:$0x3] %vm2480, %v4121
    $region50: #{tpu_custom_call.1} parent=1 // loop_footer
      %s2487 = sadd.s32 1, %s2483
    $region51: #{tpu_custom_call.1} parent=1 // loop_footer_branch
      %2482 = sbr.rel target = $region47
    $region52: #{tpu_custom_call.1} parent=1 // loop_exit
      _
    %v4142 = vld [vmem:[#allocation2] sm:$0xff]
    %v4143 = vld [vmem:[#allocation2 + $0x8] sm:$0xff]
    %v4144 = vld [vmem:[#allocation2 + $0x10] sm:$0xff]
    %v4145 = vld [vmem:[#allocation2 + $0x18] sm:$0xff]
    %v4146 = vld [vmem:[#allocation2 + $0x20] sm:$0xff]
    %v4147 = vld [vmem:[#allocation2 + $0x28] sm:$0xff]
    %v4148 = vld [vmem:[#allocation2 + $0x30] sm:$0xff]
    %v4149 = vld [vmem:[#allocation2 + $0x38] sm:$0xff]
    %v4150 = vld [vmem:[#allocation2 + $0x40] sm:$0xff]
    %v4151 = vld [vmem:[#allocation2 + $0x48] sm:$0xff]
    %v4152 = vld [vmem:[#allocation2 + $0x50] sm:$0xff]
    %v4153 = vld [vmem:[#allocation2 + $0x58] sm:$0xff]
    %v4154 = vld [vmem:[#allocation2 + $0x60] sm:$0xff]
    %v4155 = vld [vmem:[#allocation2 + $0x68] sm:$0xff]
    %v4156 = vld [vmem:[#allocation2 + $0x70] sm:$0xff]
    %v4157 = vld [vmem:[#allocation2 + $0x78] sm:$0xff]
    %v4158 = vld [vmem:[#allocation2 + $0x80] sm:$0xff]
    %v4159 = vld [vmem:[#allocation2 + $0x88] sm:$0xff]
    %v4160 = vld [vmem:[#allocation2 + $0x90] sm:$0xff]
    %v4161 = vld [vmem:[#allocation2 + $0x98] sm:$0x3]
    %v4162 = vld [vmem:[%s0] sm:$0xff]
    %v4163 = vld [vmem:[%s0 + $0x8] sm:$0xff]
    %v4164 = vld [vmem:[%s0 + $0x10] sm:$0xff]
    %v4165 = vld [vmem:[%s0 + $0x18] sm:$0xff]
    %v4166 = vld [vmem:[%s0 + $0x20] sm:$0xff]
    %v4167 = vld [vmem:[%s0 + $0x28] sm:$0xff]
    %v4168 = vld [vmem:[%s0 + $0x30] sm:$0xff]
    %v4169 = vld [vmem:[%s0 + $0x38] sm:$0xff]
    %v4170 = vld [vmem:[%s0 + $0x40] sm:$0xff]
    %v4171 = vld [vmem:[%s0 + $0x48] sm:$0xff]
    %v4172 = vld [vmem:[%s0 + $0x50] sm:$0xff]
    %v4173 = vld [vmem:[%s0 + $0x58] sm:$0xff]
    %v4174 = vld [vmem:[%s0 + $0x60] sm:$0xff]
    %v4175 = vld [vmem:[%s0 + $0x68] sm:$0xff]
    %v4176 = vld [vmem:[%s0 + $0x70] sm:$0xff]
    %v4177 = vld [vmem:[%s0 + $0x78] sm:$0xff]
    %v4178 = vld [vmem:[%s0 + $0x80] sm:$0xff]
    %v4179 = vld [vmem:[%s0 + $0x88] sm:$0xff]
    %v4180 = vld [vmem:[%s0 + $0x90] sm:$0xff]
    %v4181 = vld [vmem:[%s0 + $0x98] sm:$0x3]
    %4183 = vset.pattern.permute.xlu0 0
    %4184 = vperm.xlu0 %4183, %v4162
    %v4185 = vpop.permute.xlu0 %4184
    %4188 = vset.pattern.permute.xlu0 0
    %4189 = vperm.xlu0 %4188, %v4163
    %v4190 = vpop.permute.xlu0 %4189
    %4193 = vset.pattern.permute.xlu0 0
    %4194 = vperm.xlu0 %4193, %v4164
    %v4195 = vpop.permute.xlu0 %4194
    %4198 = vset.pattern.permute.xlu0 0
    %4199 = vperm.xlu0 %4198, %v4165
    %v4200 = vpop.permute.xlu0 %4199
    %4203 = vset.pattern.permute.xlu0 0
    %4204 = vperm.xlu0 %4203, %v4166
    %v4205 = vpop.permute.xlu0 %4204
    %4208 = vset.pattern.permute.xlu0 0
    %4209 = vperm.xlu0 %4208, %v4167
    %v4210 = vpop.permute.xlu0 %4209
    %4213 = vset.pattern.permute.xlu0 0
    %4214 = vperm.xlu0 %4213, %v4168
    %v4215 = vpop.permute.xlu0 %4214
    %4218 = vset.pattern.permute.xlu0 0
    %4219 = vperm.xlu0 %4218, %v4169
    %v4220 = vpop.permute.xlu0 %4219
    %4223 = vset.pattern.permute.xlu0 0
    %4224 = vperm.xlu0 %4223, %v4170
    %v4225 = vpop.permute.xlu0 %4224
    %4228 = vset.pattern.permute.xlu0 0
    %4229 = vperm.xlu0 %4228, %v4171
    %v4230 = vpop.permute.xlu0 %4229
    %4233 = vset.pattern.permute.xlu0 0
    %4234 = vperm.xlu0 %4233, %v4172
    %v4235 = vpop.permute.xlu0 %4234
    %4238 = vset.pattern.permute.xlu0 0
    %4239 = vperm.xlu0 %4238, %v4173
    %v4240 = vpop.permute.xlu0 %4239
    %4243 = vset.pattern.permute.xlu0 0
    %4244 = vperm.xlu0 %4243, %v4174
    %v4245 = vpop.permute.xlu0 %4244
    %4248 = vset.pattern.permute.xlu0 0
    %4249 = vperm.xlu0 %4248, %v4175
    %v4250 = vpop.permute.xlu0 %4249
    %4253 = vset.pattern.permute.xlu0 0
    %4254 = vperm.xlu0 %4253, %v4176
    %v4255 = vpop.permute.xlu0 %4254
    %4258 = vset.pattern.permute.xlu0 0
    %4259 = vperm.xlu0 %4258, %v4177
    %v4260 = vpop.permute.xlu0 %4259
    %4263 = vset.pattern.permute.xlu0 0
    %4264 = vperm.xlu0 %4263, %v4178
    %v4265 = vpop.permute.xlu0 %4264
    %4268 = vset.pattern.permute.xlu0 0
    %4269 = vperm.xlu0 %4268, %v4179
    %v4270 = vpop.permute.xlu0 %4269
    %4273 = vset.pattern.permute.xlu0 0
    %4274 = vperm.xlu0 %4273, %v4180
    %v4275 = vpop.permute.xlu0 %4274
    %4278 = vset.pattern.permute.xlu0 0
    %4279 = vperm.xlu0 %4278, %v4181
    %v4280 = vpop.permute.xlu0 %4279
    %v4282 = vmul.f32 %v4142, %v4185
    %v4283 = vmul.f32 %v4143, %v4190
    %v4284 = vmul.f32 %v4144, %v4195
    %v4285 = vmul.f32 %v4145, %v4200
    %v4286 = vmul.f32 %v4146, %v4205
    %v4287 = vmul.f32 %v4147, %v4210
    %v4288 = vmul.f32 %v4148, %v4215
    %v4289 = vmul.f32 %v4149, %v4220
    %v4290 = vmul.f32 %v4150, %v4225
    %v4291 = vmul.f32 %v4151, %v4230
    %v4292 = vmul.f32 %v4152, %v4235
    %v4293 = vmul.f32 %v4153, %v4240
    %v4294 = vmul.f32 %v4154, %v4245
    %v4295 = vmul.f32 %v4155, %v4250
    %v4296 = vmul.f32 %v4156, %v4255
    %v4297 = vmul.f32 %v4157, %v4260
    %v4298 = vmul.f32 %v4158, %v4265
    %v4299 = vmul.f32 %v4159, %v4270
    %v4300 = vmul.f32 %v4160, %v4275
    %v4301 = vmul.f32 %v4161, %v4280
    %4322 = vrot.lane.b32.xlu0 %v4142, 32
    %v4323 = vpop.permute.xlu0 %4322
    %4324 = vrot.lane.b32.xlu0 %v4143, 32
    %v4325 = vpop.permute.xlu0 %4324
    %4326 = vrot.lane.b32.xlu0 %v4144, 32
    %v4327 = vpop.permute.xlu0 %4326
    %4328 = vrot.lane.b32.xlu0 %v4145, 32
    %v4329 = vpop.permute.xlu0 %4328
    %4330 = vrot.lane.b32.xlu0 %v4146, 32
    %v4331 = vpop.permute.xlu0 %4330
    %4332 = vrot.lane.b32.xlu0 %v4147, 32
    %v4333 = vpop.permute.xlu0 %4332
    %4334 = vrot.lane.b32.xlu0 %v4148, 32
    %v4335 = vpop.permute.xlu0 %4334
    %4336 = vrot.lane.b32.xlu0 %v4149, 32
    %v4337 = vpop.permute.xlu0 %4336
    %4338 = vrot.lane.b32.xlu0 %v4150, 32
    %v4339 = vpop.permute.xlu0 %4338
    %4340 = vrot.lane.b32.xlu0 %v4151, 32
    %v4341 = vpop.permute.xlu0 %4340
    %4342 = vrot.lane.b32.xlu0 %v4152, 32
    %v4343 = vpop.permute.xlu0 %4342
    %4344 = vrot.lane.b32.xlu0 %v4153, 32
    %v4345 = vpop.permute.xlu0 %4344
    %4346 = vrot.lane.b32.xlu0 %v4154, 32
    %v4347 = vpop.permute.xlu0 %4346
    %4348 = vrot.lane.b32.xlu0 %v4155, 32
    %v4349 = vpop.permute.xlu0 %4348
    %4350 = vrot.lane.b32.xlu0 %v4156, 32
    %v4351 = vpop.permute.xlu0 %4350
    %4352 = vrot.lane.b32.xlu0 %v4157, 32
    %v4353 = vpop.permute.xlu0 %4352
    %4354 = vrot.lane.b32.xlu0 %v4158, 32
    %v4355 = vpop.permute.xlu0 %4354
    %4356 = vrot.lane.b32.xlu0 %v4159, 32
    %v4357 = vpop.permute.xlu0 %4356
    %4358 = vrot.lane.b32.xlu0 %v4160, 32
    %v4359 = vpop.permute.xlu0 %4358
    %4360 = vrot.lane.b32.xlu0 %v4161, 32
    %v4361 = vpop.permute.xlu0 %4360
    %v4382 = vsel %vm2460, %v4282, %v4323
    %v4383 = vsel %vm2460, %v4283, %v4325
    %v4384 = vsel %vm2460, %v4284, %v4327
    %v4385 = vsel %vm2460, %v4285, %v4329
    %v4386 = vsel %vm2460, %v4286, %v4331
    %v4387 = vsel %vm2460, %v4287, %v4333
    %v4388 = vsel %vm2460, %v4288, %v4335
    %v4389 = vsel %vm2460, %v4289, %v4337
    %v4390 = vsel %vm2460, %v4290, %v4339
    %v4391 = vsel %vm2460, %v4291, %v4341
    %v4392 = vsel %vm2460, %v4292, %v4343
    %v4393 = vsel %vm2460, %v4293, %v4345
    %v4394 = vsel %vm2460, %v4294, %v4347
    %v4395 = vsel %vm2460, %v4295, %v4349
    %v4396 = vsel %vm2460, %v4296, %v4351
    %v4397 = vsel %vm2460, %v4297, %v4353
    %v4398 = vsel %vm2460, %v4298, %v4355
    %v4399 = vsel %vm2460, %v4299, %v4357
    %v4400 = vsel %vm2460, %v4300, %v4359
    %v4401 = vsel %vm2460, %v4301, %v4361
    %v4402 = vpack.c.bf16 %v4383, %v4382
    %v4403 = vpack.c.bf16 %v4385, %v4384
    %v4404 = vpack.c.bf16 %v4387, %v4386
    %v4405 = vpack.c.bf16 %v4389, %v4388
    %v4406 = vpack.c.bf16 %v4391, %v4390
    %v4407 = vpack.c.bf16 %v4393, %v4392
    %v4408 = vpack.c.bf16 %v4395, %v4394
    %v4409 = vpack.c.bf16 %v4397, %v4396
    %v4410 = vpack.c.bf16 %v4399, %v4398
    %v4411 = vpack.c.bf16 %v4401, %v4400
    %v4412 = vld [vmem:[%s2] sm:$0x3]
    %v4415 = vunpack.c.l.s4 1966171168
    %v4416 = vunpack.c.0.s8 %v4415
    %v4417 = vlaneseq
    %v4418 = vshrl.u32 %v4417, 7
    %v4419 = vsub.s32 %v4416, %v4418
    %v4420 = vrot.slane %v4412, %v4419
    %v4421 = vcombine.high %v4420, %v4420
    %v4423 = vunpack.c.l.s4 1966171168
    %v4424 = vunpack.c.0.s8 %v4423
    %v4425 = vlaneseq
    %v4426 = vshrl.u32 %v4425, 7
    %v4427 = vsub.s32 %v4424, %v4426
    %v4428 = vrot.slane %v4420, %v4427
    %v4430 = vunpack.c.l.s4 1966171168
    %v4431 = vunpack.c.0.s8 %v4430
    %v4432 = vlaneseq
    %v4433 = vshrl.u32 %v4432, 7
    %v4434 = vsub.s32 %v4431, %v4433
    %v4435 = vrot.slane %v4421, %v4434
    %vm4437 = vcmask 211968
    %v4439 = vsel %vm4437, %v4435, 0
    %v4442 = vsel %vm1137, %v4411, 0
    %4444 = vmatprep.subr.bf16.mxu0 0
    %4445 = vmatpush1.bf16.msra.mxu0 %v4402
    %4446 = vmatprep.subr.bf16.mxu0 0
    %4447 = vmatpush1.bf16.msra.mxu0 %v4403
    %4448 = vmatprep.subr.bf16.mxu0 0
    %4449 = vmatpush1.bf16.msra.mxu0 %v4404
    %4450 = vmatprep.subr.bf16.mxu0 0
    %4451 = vmatpush1.bf16.msra.mxu0 %v4405
    %4452 = vmatprep.subr.bf16.mxu0 0
    %4453 = vmatpush1.bf16.msra.mxu0 %v4406
    %4454 = vmatprep.subr.bf16.mxu0 0
    %4455 = vmatpush1.bf16.msra.mxu0 %v4407
    %4456 = vmatprep.subr.bf16.mxu0 0
    %4457 = vmatpush1.bf16.msra.mxu0 %v4408
    %4458 = vmatprep.subr.bf16.mxu0 0
    %4459 = vmatpush1.bf16.msra.mxu0 %v4409
    %4460 = vmatprep.subr.bf16.mxu0 0
    %4461 = vmatpush1.bf16.msra.mxu0 %v4410
    %4462 = vmatprep.subr.bf16.mxu0 0
    %4463 = vmatpush1.bf16.msra.mxu0 %v4442
    %4464 = vmatprep.subr.bf16.mxu0 0
    %4465 = vmatpush1.bf16.msra.mxu0 0
    %4466 = vmatprep.subr.bf16.mxu0 0
    %4467 = vmatpush1.bf16.msra.mxu0 0
    %4468 = vmatprep.subr.bf16.mxu0 0
    %4469 = vmatpush1.bf16.msra.mxu0 0
    %4470 = vmatprep.subr.bf16.mxu0 0
    %4471 = vmatpush1.bf16.msra.mxu0 0
    %4472 = vmatprep.subr.bf16.mxu0 0
    %4473 = vmatpush1.bf16.msra.mxu0 0
    %4474 = vmatprep.subr.bf16.mxu0 0
    %4475 = vmatpush1.bf16.msra.mxu0 0
    %4476 = vmatprep.mubr.bf16.mxu0 %v4439
    %4477 = vmatmul.mubr.bf16.gmra.mrb[0].mxu0 %v4428
    %v4478 = vpop.f32.mrb[0].mxu0
    %v4479 = vadd.f32 0.0, %v4478
    %v4480 = vpop.f32.mrb[0].mxu0
    %v4481 = vpop.f32.mrb[0].mxu0
    %v4482 = vpop.f32.mrb[0].mxu0
    %4483 = vdwg.mxu0
    %v4484 = vmul.f32 %v4479, 0.012987013
    %v4485 = vpack.c.bf16 %v4479, %v4479
    %v4486 = vld [vmem:[%s9] sm:$0xf]
    %v4487 = vld [vmem:[%s9 + $0x4] sm:$0xf]
    %v4488 = vld [vmem:[%s9 + $0x8] sm:$0xf]
    %v4489 = vld [vmem:[%s9 + $0xc] sm:$0xf]
    %v4494 = vunpack.c.l.b16 %v4486
    %v4495 = vunpack.c.l.b16 %v4487
    %v4496 = vunpack.c.l.b16 %v4488
    %v4497 = vunpack.c.l.b16 %v4489
    %v4498 = vpack.c.b16 %v4495, %v4494
    %v4499 = vpack.c.b16 %v4497, %v4496
    %v4503 = vsel %vm2460, %v4485, 0
    %4505 = vmatprep.subr.bf16.mxu0 0
    %4506 = vmatpush1.bf16.msra.mxu0 %v4498
    %4507 = vmatprep.subr.bf16.mxu0 0
    %4508 = vmatpush1.bf16.msra.mxu0 %v4499
    %4509 = vmatprep.subr.bf16.mxu0 0
    %4510 = vmatpush1.bf16.msra.mxu0 0
    %4511 = vmatprep.subr.bf16.mxu0 0
    %4512 = vmatpush1.bf16.msra.mxu0 0
    %4513 = vmatprep.subr.bf16.mxu0 0
    %4514 = vmatpush1.bf16.msra.mxu0 0
    %4515 = vmatprep.subr.bf16.mxu0 0
    %4516 = vmatpush1.bf16.msra.mxu0 0
    %4517 = vmatprep.subr.bf16.mxu0 0
    %4518 = vmatpush1.bf16.msra.mxu0 0
    %4519 = vmatprep.subr.bf16.mxu0 0
    %4520 = vmatpush1.bf16.msra.mxu0 0
    %4521 = vmatprep.subr.bf16.mxu0 0
    %4522 = vmatpush1.bf16.msra.mxu0 0
    %4523 = vmatprep.subr.bf16.mxu0 0
    %4524 = vmatpush1.bf16.msra.mxu0 0
    %4525 = vmatprep.subr.bf16.mxu0 0
    %4526 = vmatpush1.bf16.msra.mxu0 0
    %4527 = vmatprep.subr.bf16.mxu0 0
    %4528 = vmatpush1.bf16.msra.mxu0 0
    %4529 = vmatprep.subr.bf16.mxu0 0
    %4530 = vmatpush1.bf16.msra.mxu0 0
    %4531 = vmatprep.subr.bf16.mxu0 0
    %4532 = vmatpush1.bf16.msra.mxu0 0
    %4533 = vmatprep.subr.bf16.mxu0 0
    %4534 = vmatpush1.bf16.msra.mxu0 0
    %4535 = vmatprep.subr.bf16.mxu0 0
    %4536 = vmatpush1.bf16.msra.mxu0 0
    %4537 = vmatprep.mubr.bf16.mxu0 0
    %4538 = vmatmul.mubr.bf16.gmra.mrb[0].mxu0 %v4503
    %v4539 = vpop.f32.mrb[0].mxu0
    %v4540 = vadd.f32 0.0, %v4539
    %v4541 = vpop.f32.mrb[0].mxu0
    %v4542 = vpop.f32.mrb[0].mxu0
    %v4543 = vpop.f32.mrb[0].mxu0
    %4544 = vdwg.mxu0
    %v4545 = vsel %vm2460, %v4479, %v4484
    %v4546 = vpack.c.bf16 %v4545, %v4545
    %v4547 = vld [vmem:[%s10] sm:$0xf]
    %v4548 = vld [vmem:[%s10 + $0x4] sm:$0xf]
    %v4549 = vld [vmem:[%s10 + $0x8] sm:$0xf]
    %v4550 = vld [vmem:[%s10 + $0xc] sm:$0xf]
    %v4551 = vld [vmem:[%s10 + $0x10] sm:$0xf]
    %v4552 = vld [vmem:[%s10 + $0x14] sm:$0xf]
    %v4553 = vld [vmem:[%s10 + $0x18] sm:$0xf]
    %v4554 = vld [vmem:[%s10 + $0x1c] sm:$0xf]
    %v4563 = vunpack.c.l.b16 %v4547
    %v4564 = vunpack.c.l.b16 %v4548
    %v4565 = vunpack.c.l.b16 %v4549
    %v4566 = vunpack.c.l.b16 %v4550
    %v4567 = vunpack.c.l.b16 %v4551
    %v4568 = vunpack.c.l.b16 %v4552
    %v4569 = vunpack.c.l.b16 %v4553
    %v4570 = vunpack.c.l.b16 %v4554
    %v4571 = vpack.c.b16 %v4564, %v4563
    %v4572 = vpack.c.b16 %v4566, %v4565
    %v4573 = vpack.c.b16 %v4568, %v4567
    %v4574 = vpack.c.b16 %v4570, %v4569
    %vm4579 = vcmask 523264
    %v4581 = vsel %vm4579, %v4546, 0
    %4583 = vmatprep.subr.bf16.mxu0 0
    %4584 = vmatpush1.bf16.msra.mxu0 %v4571
    %4585 = vmatprep.subr.bf16.mxu0 0
    %4586 = vmatpush1.bf16.msra.mxu0 %v4572
    %4587 = vmatprep.subr.bf16.mxu0 0
    %4588 = vmatpush1.bf16.msra.mxu0 %v4573
    %4589 = vmatprep.subr.bf16.mxu0 0
    %4590 = vmatpush1.bf16.msra.mxu0 %v4574
    %4591 = vmatprep.subr.bf16.mxu0 0
    %4592 = vmatpush1.bf16.msra.mxu0 0
    %4593 = vmatprep.subr.bf16.mxu0 0
    %4594 = vmatpush1.bf16.msra.mxu0 0
    %4595 = vmatprep.subr.bf16.mxu0 0
    %4596 = vmatpush1.bf16.msra.mxu0 0
    %4597 = vmatprep.subr.bf16.mxu0 0
    %4598 = vmatpush1.bf16.msra.mxu0 0
    %4599 = vmatprep.subr.bf16.mxu0 0
    %4600 = vmatpush1.bf16.msra.mxu0 0
    %4601 = vmatprep.subr.bf16.mxu0 0
    %4602 = vmatpush1.bf16.msra.mxu0 0
    %4603 = vmatprep.subr.bf16.mxu0 0
    %4604 = vmatpush1.bf16.msra.mxu0 0
    %4605 = vmatprep.subr.bf16.mxu0 0
    %4606 = vmatpush1.bf16.msra.mxu0 0
    %4607 = vmatprep.subr.bf16.mxu0 0
    %4608 = vmatpush1.bf16.msra.mxu0 0
    %4609 = vmatprep.subr.bf16.mxu0 0
    %4610 = vmatpush1.bf16.msra.mxu0 0
    %4611 = vmatprep.subr.bf16.mxu0 0
    %4612 = vmatpush1.bf16.msra.mxu0 0
    %4613 = vmatprep.subr.bf16.mxu0 0
    %4614 = vmatpush1.bf16.msra.mxu0 0
    %4615 = vmatprep.mubr.bf16.mxu0 0
    %4616 = vmatmul.mubr.bf16.gmra.mrb[0].mxu0 %v4581
    %v4617 = vpop.f32.mrb[0].mxu0
    %v4618 = vadd.f32 0.0, %v4617
    %v4619 = vpop.f32.mrb[0].mxu0
    %v4620 = vpop.f32.mrb[0].mxu0
    %v4621 = vpop.f32.mrb[0].mxu0
    %4622 = vdwg.mxu0
    %v4623 = vtanh.pop %v4618
    %4625 = vrot.lane.b32.xlu0 %v4623, 4
    %v4626 = vpop.permute.xlu0 %4625
    %vm4628 = vcmask 31744
    %v4629 = vsel %vm4628, %v4540, %v4626
    %vm4630 = vcmask 39936
    %v4631 = vsel %vm4630, %v4629, 0.0
    %vm4632 = vcmask 58368
    %4633 = vst.msk [vmem:[#allocation3] sm:$0x3] %vm4632, %v4631
    // Predicated region
    $region53: #{tpu_custom_call.1} parent=1 // pred_check
      _
    $region54: #{tpu_custom_call.1} parent=1 // pred_check_branch
      %4635 = sbr.rel (0) target = $region56
    $region55: #{tpu_custom_call.1} parent=1 // pred_region
      %s4637 = ssub.s32 32, 32
      %4638 = vsyncadd [#allocation4], %s4637
      %s4640 = sshll.u32 [#allocation3], 4
      %s4641 = int_to_ptr.vmem [resolvable:$true] %s4640
      %4643 = dma.vmem_to_hbm [thread:$0]  %s4641, 32, %s11, [#allocation4]
    $region56: #{tpu_custom_call.1} parent=1 // pred_fallthru
      _
    // Predicated region
    $region57: #{tpu_custom_call.1} parent=1 // pred_check
      _
    $region58: #{tpu_custom_call.1} parent=1 // pred_check_branch
      %4645 = sbr.rel (0) target = $region60
    $region59: #{tpu_custom_call.1} parent=1 // pred_region
      %4646 = dma.done [#allocation4], 32
    $region60: #{tpu_custom_call.1} parent=1 // pred_fallthru
      _
    %4647 = vsyncpa [#allocation4], 1

</llo_original>
